<compile_context>
chip_gen: v6e
topology: v6e:2x2x1
jax: 0.10.0
libtpu: 0.0.40
codegen_flags: <defaults>
</compile_context>

<pallas_src>
import functools

import jax
import jax.numpy as jnp
from jax import lax
from jax.experimental import pallas as pl
from jax.experimental.pallas import tpu as pltpu

NEG_SLOPE = 0.01                                  # nn.LeakyReLU default
_DILATIONS = ((1, 1), (3, 1), (9, 1))             # (res_1, res_2, res_3) conv dilations
# Total receptive half-width of the stack: each kernel-3 conv with dilation d reaches +-d.
HALO = sum(d for pair in _DILATIONS for d in pair)
assert HALO == 16, "re-derive halo/tile margins if dilations or kernel width change"


def _round_up(v, m):
    return (v + m - 1) // m * m


def _vmem_budget_bytes(tile_t, c_pad, x_itemsize, out_itemsize, mm_itemsize):
    """Rough VMEM footprint used to pick tile_t and vmem_limit_bytes."""
    tile_h = tile_t + 2 * HALO
    weights = 6 * 3 * c_pad * c_pad * mm_itemsize       # resident weight slab (single copy)
    bias = 2 * 6 * c_pad * 4                            # double-buffered pipelined bias block
    act = 2 * tile_h * c_pad * x_itemsize               # manual halo double buffer
    out = 2 * tile_t * c_pad * out_itemsize             # double-buffered output block
    tmp = 8 * tile_h * c_pad * 4                        # f32 carry / acc / shifted-tap temps
    return weights + bias + act + out + tmp


def _residual_stack_kernel(x_hbm, w_hbm, b_ref, o_ref, w_vmem, buf, sem, *,
                           seq_len, tile_t, matmul_dtype):
    """Grid = (N, num_time_tiles); one halo'd (tile_t + 2*HALO, C) window per step."""
    n = pl.program_id(0)
    t = pl.program_id(1)
    n_t = pl.num_programs(1)
    tile_h = tile_t + 2 * HALO
    C = o_ref.shape[-1]

    def copy_x(tile_idx, slot):
        return pltpu.make_async_copy(
            x_hbm.at[n, pl.ds(tile_idx * tile_t, tile_h), :],
            buf.at[slot], sem.at[slot])

    slot = t % 2

    # Per-batch-row priming.  Keyed on t == 0 (not n == 0) so it stays correct when the
    # batch axis is split across TensorCores.  The resident weight slab is (re-)DMA'd here:
    # one small single-buffered copy per row instead of a double-buffered pipelined input.
    @pl.when(t == 0)
    def _():
        w_cp = pltpu.make_async_copy(w_hbm, w_vmem, sem.at[2])
        w_cp.start()
        copy_x(0, 0).start()
        w_cp.wait()

    copy_x(t, slot).wait()                 # current halo window

    @pl.when(t + 1 < n_t)                  # prefetch the next window of the same row
    def _():
        copy_x(t + 1, 1 - slot).start()
    # TODO(synk): cross-row / cross-core prefetch (and a 2-TC split of the time axis for N=1
    # on v7x) requires per-core priming state; kept single-row-sequential here for safety.

    # Validity mask in global time coordinates reproduces Conv1d "same" zero padding at the
    # true sequence boundaries; halo rows outside [0, T) are zeroed before every conv.
    g0 = t * tile_t - HALO
    row = lax.broadcasted_iota(jnp.int32, (tile_h, 1), 0) + g0
    valid = (row >= 0) & (row < seq_len)

    def lrelu_masked(v):                   # f32 elementwise on the VPU, mask folded in
        return jnp.where(valid, jnp.where(v > 0.0, v, NEG_SLOPE * v), 0.0)

    def conv3(y_f32, idx, dil):
        # 3 accumulating (tile_h, C) @ (C, C) MXU dots.  The operand is cast to matmul_dtype
        # once; shifted taps are built directly in matmul_dtype (no padded yp, no (·,3C) copy).
        y = y_f32.astype(matmul_dtype)
        zd = jnp.zeros((dil, C), matmul_dtype)
        y_m = jnp.concatenate([zd, y[:tile_h - dil, :]], axis=0)   # y[t - dil], zeros OOB
        y_p = jnp.concatenate([y[dil:, :], zd], axis=0)            # y[t + dil], zeros OOB
        acc = jnp.dot(y_m, w_vmem[idx, 0], preferred_element_type=jnp.float32)
        acc = acc + jnp.dot(y, w_vmem[idx, 1], preferred_element_type=jnp.float32)
        acc = acc + jnp.dot(y_p, w_vmem[idx, 2], preferred_element_type=jnp.float32)
        return acc + b_ref[idx:idx + 1, :]                         # (1, C) f32 broadcast

    x = buf[slot].astype(jnp.float32)                              # (tile_h, C) f32 carry
    for i, (d1, d2) in enumerate(_DILATIONS):
        h = conv3(lrelu_masked(x), 2 * i, d1)
        h = conv3(lrelu_masked(h), 2 * i + 1, d2)
        x = x + h

    o_ref[0] = x[HALO:HALO + tile_t, :].astype(o_ref.dtype)        # central rows only


def residual_stack_ntc(x_ntc, params, *, tile_t=512, matmul_dtype=jnp.bfloat16,
                       vmem_budget_bytes=48 * 1024 * 1024):
    """Native-layout entry point.  x_ntc: (N, T, C) -> (N, T, C) in x_ntc.dtype.

    params: 6 tuples (w, b) with w (Cout, Cin, 3), b (Cout,) — weight norm already folded.
    """
    N, T, C = x_ntc.shape
    out_dtype = x_ntc.dtype
    c_pad = _round_up(C, 128)                       # lane-dense channels
    x_isz = jnp.dtype(x_ntc.dtype).itemsize
    mm_isz = jnp.dtype(matmul_dtype).itemsize

    tile_t = max(8, min(_round_up(tile_t, 8), _round_up(T, 8)))
    while (tile_t > 8 and
           _vmem_budget_bytes(tile_t, c_pad, x_isz, x_isz, mm_isz) > vmem_budget_bytes):
        tile_t = max(8, _round_up(tile_t // 2, 8))
    tile_h = tile_t + 2 * HALO
    n_t = pl.cdiv(T, tile_t)
    t_pad = n_t * tile_t

    budget = _vmem_budget_bytes(tile_t, c_pad, x_isz, x_isz, mm_isz)
    vmem_limit = int(min(max(2 * budget, 32 * 1024 * 1024), 64 * 1024 * 1024))

    # Zero-pad time by HALO each side (+ tile remainder) and channels to c_pad; keep the
    # caller's dtype so halo DMAs / double buffers stay narrow for bf16 models.
    x_pad = jnp.pad(x_ntc, ((0, 0), (HALO, t_pad - T + HALO), (0, c_pad - C)))

    # Pack all 6 convs into one (6, 3, c_pad, c_pad) slab (tap k of conv i at [i, k]) and all
    # biases into one (6, c_pad) f32 slab.  Weights go straight to matmul_dtype.
    w_blocks, b_rows = [], []
    for (w, b) in params:
        wk = jnp.transpose(w.astype(jnp.float32), (2, 1, 0))            # (3, Cin, Cout)
        wk = jnp.pad(wk, ((0, 0), (0, c_pad - C), (0, c_pad - C)))
        w_blocks.append(wk)
        b_rows.append(jnp.pad(b.astype(jnp.float32), (0, c_pad - C)))
    w_slab = jnp.stack(w_blocks).astype(matmul_dtype)                   # (6, 3, c_pad, c_pad)
    b_slab = jnp.stack(b_rows)                                          # (6, c_pad) f32

    kernel = functools.partial(_residual_stack_kernel, seq_len=T, tile_t=tile_t,
                               matmul_dtype=matmul_dtype)

    out = pl.pallas_call(
        kernel,
        out_shape=jax.ShapeDtypeStruct((N, t_pad, c_pad), out_dtype),
        grid_spec=pltpu.PrefetchScalarGridSpec(
            num_scalar_prefetch=0,
            grid=(N, n_t),
            in_specs=[
                pl.BlockSpec(memory_space=pl.ANY),              # x: HBM, manual halo DMA
                pl.BlockSpec(memory_space=pl.ANY),              # weights: HBM, DMA'd once/row
                pl.BlockSpec((6, c_pad), lambda n, t: (0, 0)),  # bias: tiny resident block
            ],
            out_specs=pl.BlockSpec((1, tile_t, c_pad), lambda n, t: (n, t, 0)),
            scratch_shapes=[
                pltpu.VMEM((6, 3, c_pad, c_pad), matmul_dtype),   # resident weight slab
                pltpu.VMEM((2, tile_h, c_pad), x_pad.dtype),      # double-buffered halo window
                pltpu.SemaphoreType.DMA((3,)),                    # [0:2]=x slots, [2]=weights
            ],
        ),
        compiler_params=pltpu.CompilerParams(
            dimension_semantics=("parallel", "arbitrary"),
            vmem_limit_bytes=vmem_limit,
        ),
    )(x_pad, w_slab, b_slab)

    return out[:, :T, :C]


def residual_stack(x_nct, params, **kwargs):
    """(N, C, T) adapter matching the PyTorch module layout.

    Prefer residual_stack_ntc inside a channels-last model: the transposes here are extra HBM
    passes that exist only to match the PyTorch Conv1d layout at this boundary.
    """
    out = residual_stack_ntc(jnp.transpose(x_nct, (0, 2, 1)), params, **kwargs)
    return jnp.transpose(out, (0, 2, 1))


def make_weight_norm_conv_params(key, channels, kernel=3):
    """Deterministic weight-norm Conv1d params: w = g * v / ||v|| (norm over (Cin, K))."""
    kv, kg, kb = jax.random.split(key, 3)
    v = jax.random.normal(kv, (channels, channels, kernel), jnp.float32) * 0.3
    g = 0.5 + jax.random.uniform(kg, (channels,), jnp.float32)
    b = jax.random.normal(kb, (channels,), jnp.float32) * 0.1
    norm = jnp.sqrt(jnp.sum(v * v, axis=(1, 2), keepdims=True))
    w = g[:, None, None] * v / norm
    return w, b


def reference_residual_stack(x_nct, params):
    """Pure-JAX reference using lax.conv_general_dilated (matches PyTorch Conv1d)."""
    def conv(x, w, b, dilation):
        pad = dilation  # get_same_padding(3, d) = (3-1)*d // 2 = d
        y = lax.conv_general_dilated(
            x, w, window_strides=(1,), padding=[(pad, pad)],
            rhs_dilation=(dilation,), dimension_numbers=("NCH", "OIH", "NCH"))
        return y + b[None, :, None]

    x = x_nct
    for i, (d1, d2) in enumerate(_DILATIONS):
        (w1, b1), (w2, b2) = params[2 * i], params[2 * i + 1]
        h = conv(jnp.where(x > 0, x, NEG_SLOPE * x), w1, b1, d1)
        h = conv(jnp.where(h > 0, h, NEG_SLOPE * h), w2, b2, d2)
        x = x + h
    return x


if __name__ == "__main__":
    key = jax.random.PRNGKey(0)
    N, C, T = 2, 8, 40

    keys = jax.random.split(key, 7)
    x = jax.random.normal(keys[0], (N, C, T), jnp.float32)
    params = [make_weight_norm_conv_params(keys[1 + i], C) for i in range(6)]

    ref = reference_residual_stack(x, params)

    # Exact checks with f32 MXU operands: single-tile, then multi-tile (exercises the halo
    # windows, boundary masking and the double-buffered DMA).
    out_f32 = jax.block_until_ready(residual_stack(x, params, matmul_dtype=jnp.float32))
    assert out_f32.shape == (N, C, T)
    assert jnp.allclose(out_f32, ref, atol=1e-4, rtol=1e-4), "f32 single-tile mismatch"

    out_f32_mt = jax.block_until_ready(
        residual_stack(x, params, tile_t=16, matmul_dtype=jnp.float32))
    assert jnp.allclose(out_f32_mt, ref, atol=1e-4, rtol=1e-4), "f32 multi-tile mismatch"

    # Default path: bf16 MXU operands with f32 accumulation.
    out_bf16 = jax.block_until_ready(residual_stack(x, params, tile_t=16))
    assert jnp.allclose(out_bf16, ref, atol=1e-1, rtol=1e-1), "bf16 default diverged"

    print("KERNEL_OK")
</pallas_src>

<mosaic_0001>
module attributes {stable_mosaic.version = 11 : i64} {
  func.func @_residual_stack_kernel(%arg0: i32, %arg1: i32, %arg2: memref<2x72x128xf32, #tpu.memory_space<any>>, %arg3: memref<6x3x128x128xf32, #tpu.memory_space<any>>, %arg4: memref<6x128xf32, #tpu.memory_space<vmem>>, %arg5: memref<1x40x128xf32, #tpu.memory_space<vmem>>, %arg6: memref<6x3x128x128xf32, #tpu.memory_space<vmem>>, %arg7: memref<2x72x128xf32, #tpu.memory_space<vmem>>, %arg8: memref<3x!tpu.dma_semaphore, #tpu.memory_space<semaphore_mem>>) attributes {dimension_semantics = [#tpu.dimension_semantics<parallel>, #tpu.dimension_semantics<arbitrary>], iteration_bounds = array<i64: 2, 1>, scalar_prefetch = 0 : i64, scratch_operands = 3 : i64, tpu.core_type = #tpu.core_type<tc>, window_params = [{}, {}, {pipeline_mode = #tpu.pipeline_mode<synchronous>, transform_indices = @transform_2, window_bounds = array<i64: 6, 128>}, {transform_indices = @transform_3, window_bounds = array<i64: 1, 40, 128>}]} {
    %c2_i32 = arith.constant 2 : i32
    %c0_i32 = arith.constant 0 : i32
    %0 = arith.cmpi eq, %c2_i32, %c0_i32 : i32
    %c1_i32 = arith.constant 1 : i32
    %1 = arith.select %0, %c1_i32, %c2_i32 : i32
    %2 = arith.remsi %arg1, %1 : i32
    %c0_i32_0 = arith.constant 0 : i32
    %3 = arith.cmpi ne, %2, %c0_i32_0 : i32
    %c0_i32_1 = arith.constant 0 : i32
    %4 = arith.cmpi slt, %2, %c0_i32_1 : i32
    %c0_i32_2 = arith.constant 0 : i32
    %5 = arith.cmpi slt, %1, %c0_i32_2 : i32
    %6 = arith.xori %4, %5 : i1
    %7 = arith.andi %6, %3 : i1
    %8 = arith.addi %2, %1 : i32
    %9 = arith.select %7, %8, %2 : i32
    %c0_i32_3 = arith.constant 0 : i32
    %10 = arith.cmpi eq, %arg1, %c0_i32_3 : i32
    %11 = arith.extui %10 : i1 to i32
    %c0_i32_4 = arith.constant 0 : i32
    %12 = arith.cmpi ne, %11, %c0_i32_4 : i32
    scf.if %12 {
      %c2_i32_138 = arith.constant 2 : i32
      %212 = tpu.memref_slice %arg8[%c2_i32_138] : memref<3x!tpu.dma_semaphore, #tpu.memory_space<semaphore_mem>> -> memref<1x!tpu.dma_semaphore, #tpu.memory_space<semaphore_mem>>
      %213 = tpu.memref_squeeze %212 : memref<1x!tpu.dma_semaphore, #tpu.memory_space<semaphore_mem>> -> memref<!tpu.dma_semaphore, #tpu.memory_space<semaphore_mem>>
      tpu.enqueue_dma source(%arg3 : memref<6x3x128x128xf32, #tpu.memory_space<any>>) target(%arg6 : memref<6x3x128x128xf32, #tpu.memory_space<vmem>>) target_semaphore(%213 : memref<!tpu.dma_semaphore, #tpu.memory_space<semaphore_mem>>)
      %c0_i32_139 = arith.constant 0 : i32
      %c0_i32_140 = arith.constant 0 : i32
      %c0_i32_141 = arith.constant 0 : i32
      %c0_i32_142 = arith.constant 0 : i32
      %214 = tpu.memref_slice %arg2[%arg0, %c0_i32_141, %c0_i32_142] : memref<2x72x128xf32, #tpu.memory_space<any>> -> memref<1x72x128xf32, #tpu.memory_space<any>>
      %215 = tpu.memref_squeeze %214 : memref<1x72x128xf32, #tpu.memory_space<any>> -> memref<72x128xf32, #tpu.memory_space<any>>
      %c0_i32_143 = arith.constant 0 : i32
      %c0_i32_144 = arith.constant 0 : i32
      %216 = tpu.memref_slice %arg7[%c0_i32_139, %c0_i32_143, %c0_i32_144] : memref<2x72x128xf32, #tpu.memory_space<vmem>> -> memref<1x72x128xf32, #tpu.memory_space<vmem>>
      %217 = tpu.memref_squeeze %216 : memref<1x72x128xf32, #tpu.memory_space<vmem>> -> memref<72x128xf32, #tpu.memory_space<vmem>>
      %218 = tpu.memref_slice %arg8[%c0_i32_140] : memref<3x!tpu.dma_semaphore, #tpu.memory_space<semaphore_mem>> -> memref<1x!tpu.dma_semaphore, #tpu.memory_space<semaphore_mem>>
      %219 = tpu.memref_squeeze %218 : memref<1x!tpu.dma_semaphore, #tpu.memory_space<semaphore_mem>> -> memref<!tpu.dma_semaphore, #tpu.memory_space<semaphore_mem>>
      tpu.enqueue_dma source(%215 : memref<72x128xf32, #tpu.memory_space<any>>) target(%217 : memref<72x128xf32, #tpu.memory_space<vmem>>) target_semaphore(%219 : memref<!tpu.dma_semaphore, #tpu.memory_space<semaphore_mem>>)
      %c2_i32_145 = arith.constant 2 : i32
      %220 = tpu.memref_slice %arg8[%c2_i32_145] : memref<3x!tpu.dma_semaphore, #tpu.memory_space<semaphore_mem>> -> memref<1x!tpu.dma_semaphore, #tpu.memory_space<semaphore_mem>>
      %221 = tpu.memref_squeeze %220 : memref<1x!tpu.dma_semaphore, #tpu.memory_space<semaphore_mem>> -> memref<!tpu.dma_semaphore, #tpu.memory_space<semaphore_mem>>
      tpu.wait_dma2 semaphore(%221 : memref<!tpu.dma_semaphore, #tpu.memory_space<semaphore_mem>>) src(%arg3 : memref<6x3x128x128xf32, #tpu.memory_space<any>>) dst(%arg6 : memref<6x3x128x128xf32, #tpu.memory_space<vmem>>)
    } else {
    }
    %c40_i32 = arith.constant 40 : i32
    %13 = arith.muli %arg1, %c40_i32 : i32
    %c0_i32_5 = arith.constant 0 : i32
    %14 = tpu.memref_slice %arg2[%arg0, %13, %c0_i32_5] : memref<2x72x128xf32, #tpu.memory_space<any>> -> memref<1x72x128xf32, #tpu.memory_space<any>>
    %15 = tpu.memref_squeeze %14 : memref<1x72x128xf32, #tpu.memory_space<any>> -> memref<72x128xf32, #tpu.memory_space<any>>
    %c0_i32_6 = arith.constant 0 : i32
    %c0_i32_7 = arith.constant 0 : i32
    %16 = tpu.memref_slice %arg7[%9, %c0_i32_6, %c0_i32_7] : memref<2x72x128xf32, #tpu.memory_space<vmem>> -> memref<1x72x128xf32, #tpu.memory_space<vmem>>
    %17 = tpu.memref_squeeze %16 : memref<1x72x128xf32, #tpu.memory_space<vmem>> -> memref<72x128xf32, #tpu.memory_space<vmem>>
    %18 = tpu.memref_slice %arg8[%9] : memref<3x!tpu.dma_semaphore, #tpu.memory_space<semaphore_mem>> -> memref<1x!tpu.dma_semaphore, #tpu.memory_space<semaphore_mem>>
    %19 = tpu.memref_squeeze %18 : memref<1x!tpu.dma_semaphore, #tpu.memory_space<semaphore_mem>> -> memref<!tpu.dma_semaphore, #tpu.memory_space<semaphore_mem>>
    tpu.wait_dma2 semaphore(%19 : memref<!tpu.dma_semaphore, #tpu.memory_space<semaphore_mem>>) src(%15 : memref<72x128xf32, #tpu.memory_space<any>>) dst(%17 : memref<72x128xf32, #tpu.memory_space<vmem>>)
    %c1_i32_8 = arith.constant 1 : i32
    %20 = arith.addi %arg1, %c1_i32_8 : i32
    %c1_i32_9 = arith.constant 1 : i32
    %21 = arith.cmpi slt, %20, %c1_i32_9 : i32
    %22 = arith.extui %21 : i1 to i32
    %c0_i32_10 = arith.constant 0 : i32
    %23 = arith.cmpi ne, %22, %c0_i32_10 : i32
    scf.if %23 {
      %c1_i32_138 = arith.constant 1 : i32
      %212 = arith.addi %arg1, %c1_i32_138 : i32
      %c1_i32_139 = arith.constant 1 : i32
      %213 = arith.subi %c1_i32_139, %9 : i32
      %c40_i32_140 = arith.constant 40 : i32
      %214 = arith.muli %212, %c40_i32_140 : i32
      %c0_i32_141 = arith.constant 0 : i32
      %215 = tpu.memref_slice %arg2[%arg0, %214, %c0_i32_141] : memref<2x72x128xf32, #tpu.memory_space<any>> -> memref<1x72x128xf32, #tpu.memory_space<any>>
      %216 = tpu.memref_squeeze %215 : memref<1x72x128xf32, #tpu.memory_space<any>> -> memref<72x128xf32, #tpu.memory_space<any>>
      %c0_i32_142 = arith.constant 0 : i32
      %c0_i32_143 = arith.constant 0 : i32
      %217 = tpu.memref_slice %arg7[%213, %c0_i32_142, %c0_i32_143] : memref<2x72x128xf32, #tpu.memory_space<vmem>> -> memref<1x72x128xf32, #tpu.memory_space<vmem>>
      %218 = tpu.memref_squeeze %217 : memref<1x72x128xf32, #tpu.memory_space<vmem>> -> memref<72x128xf32, #tpu.memory_space<vmem>>
      %219 = tpu.memref_slice %arg8[%213] : memref<3x!tpu.dma_semaphore, #tpu.memory_space<semaphore_mem>> -> memref<1x!tpu.dma_semaphore, #tpu.memory_space<semaphore_mem>>
      %220 = tpu.memref_squeeze %219 : memref<1x!tpu.dma_semaphore, #tpu.memory_space<semaphore_mem>> -> memref<!tpu.dma_semaphore, #tpu.memory_space<semaphore_mem>>
      tpu.enqueue_dma source(%216 : memref<72x128xf32, #tpu.memory_space<any>>) target(%218 : memref<72x128xf32, #tpu.memory_space<vmem>>) target_semaphore(%220 : memref<!tpu.dma_semaphore, #tpu.memory_space<semaphore_mem>>)
    } else {
    }
    %c40_i32_11 = arith.constant 40 : i32
    %24 = arith.muli %arg1, %c40_i32_11 : i32
    %c16_i32 = arith.constant 16 : i32
    %25 = arith.subi %24, %c16_i32 : i32
    %26 = tpu.iota {dimensions = array<i32: 0>} : vector<72x1xi32>
    %27 = vector.broadcast %25 : i32 to vector<72x1xi32>
    %28 = arith.addi %26, %27 : vector<72x1xi32>
    %c0_i32_12 = arith.constant 0 : i32
    %29 = vector.broadcast %c0_i32_12 : i32 to vector<72x1xi32>
    %30 = arith.cmpi sge, %28, %29 : vector<72x1xi32>
    %c40_i32_13 = arith.constant 40 : i32
    %31 = vector.broadcast %c40_i32_13 : i32 to vector<72x1xi32>
    %32 = arith.cmpi slt, %28, %31 : vector<72x1xi32>
    %33 = arith.andi %30, %32 : vector<72x1xi1>
    %34 = arith.index_cast %9 : i32 to index
    %c0 = arith.constant 0 : index
    %c0_14 = arith.constant 0 : index
    %35 = vector.load %arg7[%34, %c0, %c0_14] : memref<2x72x128xf32, #tpu.memory_space<vmem>>, vector<1x72x128xf32>
    %36 = vector.shape_cast %35 : vector<1x72x128xf32> to vector<72x128xf32>
    %cst = arith.constant 0.000000e+00 : f32
    %37 = vector.broadcast %cst : f32 to vector<72x128xf32>
    %38 = arith.cmpf ogt, %36, %37 : vector<72x128xf32>
    %cst_15 = arith.constant 0.00999999977 : f32
    %39 = vector.broadcast %cst_15 : f32 to vector<72x128xf32>
    %40 = arith.mulf %39, %36 : vector<72x128xf32>
    %41 = arith.select %38, %36, %40 : vector<72x128xi1>, vector<72x128xf32>
    %cst_16 = arith.constant 0.000000e+00 : f32
    %42 = vector.shape_cast %33 : vector<72x1xi1> to vector<72x1xi1>
    %43 = vector.broadcast %42 : vector<72x1xi1> to vector<72x128xi1>
    %44 = vector.broadcast %cst_16 : f32 to vector<72x128xf32>
    %45 = arith.select %43, %41, %44 : vector<72x128xi1>, vector<72x128xf32>
    %cst_17 = arith.constant 0.000000e+00 : f32
    %46 = vector.broadcast %cst_17 : f32 to vector<1x128xf32>
    %47 = vector.extract_strided_slice %45 {offsets = [0, 0], sizes = [71, 128], strides = [1, 1]} : vector<72x128xf32> to vector<71x128xf32>
    %48 = tpu.concatenate %46, %47 in 0 : vector<1x128xf32>, vector<71x128xf32> -> vector<72x128xf32>
    %49 = vector.extract_strided_slice %45 {offsets = [1, 0], sizes = [71, 128], strides = [1, 1]} : vector<72x128xf32> to vector<71x128xf32>
    %50 = tpu.concatenate %49, %46 in 0 : vector<71x128xf32>, vector<1x128xf32> -> vector<72x128xf32>
    %c0_18 = arith.constant 0 : index
    %c0_19 = arith.constant 0 : index
    %c0_20 = arith.constant 0 : index
    %c0_21 = arith.constant 0 : index
    %51 = vector.load %arg6[%c0_18, %c0_19, %c0_20, %c0_21] : memref<6x3x128x128xf32, #tpu.memory_space<vmem>>, vector<1x1x128x128xf32>
    %52 = vector.shape_cast %51 : vector<1x1x128x128xf32> to vector<128x128xf32>
    %cst_22 = arith.constant dense<0.000000e+00> : vector<72x128xf32>
    %53 = tpu.matmul %48, %52, %cst_22 {dimension_numbers = #tpu.dot_dimension_numbers<[1], [0], [0], [1], [0, 0, 1, 1], [], []>} : vector<72x128xf32>, vector<128x128xf32>, vector<72x128xf32> -> vector<72x128xf32>
    %c0_23 = arith.constant 0 : index
    %c1 = arith.constant 1 : index
    %c0_24 = arith.constant 0 : index
    %c0_25 = arith.constant 0 : index
    %54 = vector.load %arg6[%c0_23, %c1, %c0_24, %c0_25] : memref<6x3x128x128xf32, #tpu.memory_space<vmem>>, vector<1x1x128x128xf32>
    %55 = vector.shape_cast %54 : vector<1x1x128x128xf32> to vector<128x128xf32>
    %cst_26 = arith.constant dense<0.000000e+00> : vector<72x128xf32>
    %56 = tpu.matmul %45, %55, %cst_26 {dimension_numbers = #tpu.dot_dimension_numbers<[1], [0], [0], [1], [0, 0, 1, 1], [], []>} : vector<72x128xf32>, vector<128x128xf32>, vector<72x128xf32> -> vector<72x128xf32>
    %57 = arith.addf %53, %56 : vector<72x128xf32>
    %c0_27 = arith.constant 0 : index
    %c2 = arith.constant 2 : index
    %c0_28 = arith.constant 0 : index
    %c0_29 = arith.constant 0 : index
    %58 = vector.load %arg6[%c0_27, %c2, %c0_28, %c0_29] : memref<6x3x128x128xf32, #tpu.memory_space<vmem>>, vector<1x1x128x128xf32>
    %59 = vector.shape_cast %58 : vector<1x1x128x128xf32> to vector<128x128xf32>
    %cst_30 = arith.constant dense<0.000000e+00> : vector<72x128xf32>
    %60 = tpu.matmul %50, %59, %cst_30 {dimension_numbers = #tpu.dot_dimension_numbers<[1], [0], [0], [1], [0, 0, 1, 1], [], []>} : vector<72x128xf32>, vector<128x128xf32>, vector<72x128xf32> -> vector<72x128xf32>
    %61 = arith.addf %57, %60 : vector<72x128xf32>
    %c0_31 = arith.constant 0 : index
    %c0_32 = arith.constant 0 : index
    %62 = vector.load %arg4[%c0_31, %c0_32] : memref<6x128xf32, #tpu.memory_space<vmem>>, vector<1x128xf32>
    %63 = vector.broadcast %62 : vector<1x128xf32> to vector<72x128xf32>
    %64 = arith.addf %61, %63 : vector<72x128xf32>
    %cst_33 = arith.constant 0.000000e+00 : f32
    %65 = vector.broadcast %cst_33 : f32 to vector<72x128xf32>
    %66 = arith.cmpf ogt, %64, %65 : vector<72x128xf32>
    %cst_34 = arith.constant 0.00999999977 : f32
    %67 = vector.broadcast %cst_34 : f32 to vector<72x128xf32>
    %68 = arith.mulf %67, %64 : vector<72x128xf32>
    %69 = arith.select %66, %64, %68 : vector<72x128xi1>, vector<72x128xf32>
    %cst_35 = arith.constant 0.000000e+00 : f32
    %70 = vector.shape_cast %33 : vector<72x1xi1> to vector<72x1xi1>
    %71 = vector.broadcast %70 : vector<72x1xi1> to vector<72x128xi1>
    %72 = vector.broadcast %cst_35 : f32 to vector<72x128xf32>
    %73 = arith.select %71, %69, %72 : vector<72x128xi1>, vector<72x128xf32>
    %cst_36 = arith.constant 0.000000e+00 : f32
    %74 = vector.broadcast %cst_36 : f32 to vector<1x128xf32>
    %75 = vector.extract_strided_slice %73 {offsets = [0, 0], sizes = [71, 128], strides = [1, 1]} : vector<72x128xf32> to vector<71x128xf32>
    %76 = tpu.concatenate %74, %75 in 0 : vector<1x128xf32>, vector<71x128xf32> -> vector<72x128xf32>
    %77 = vector.extract_strided_slice %73 {offsets = [1, 0], sizes = [71, 128], strides = [1, 1]} : vector<72x128xf32> to vector<71x128xf32>
    %78 = tpu.concatenate %77, %74 in 0 : vector<71x128xf32>, vector<1x128xf32> -> vector<72x128xf32>
    %c1_37 = arith.constant 1 : index
    %c0_38 = arith.constant 0 : index
    %c0_39 = arith.constant 0 : index
    %c0_40 = arith.constant 0 : index
    %79 = vector.load %arg6[%c1_37, %c0_38, %c0_39, %c0_40] : memref<6x3x128x128xf32, #tpu.memory_space<vmem>>, vector<1x1x128x128xf32>
    %80 = vector.shape_cast %79 : vector<1x1x128x128xf32> to vector<128x128xf32>
    %cst_41 = arith.constant dense<0.000000e+00> : vector<72x128xf32>
    %81 = tpu.matmul %76, %80, %cst_41 {dimension_numbers = #tpu.dot_dimension_numbers<[1], [0], [0], [1], [0, 0, 1, 1], [], []>} : vector<72x128xf32>, vector<128x128xf32>, vector<72x128xf32> -> vector<72x128xf32>
    %c1_42 = arith.constant 1 : index
    %c1_43 = arith.constant 1 : index
    %c0_44 = arith.constant 0 : index
    %c0_45 = arith.constant 0 : index
    %82 = vector.load %arg6[%c1_42, %c1_43, %c0_44, %c0_45] : memref<6x3x128x128xf32, #tpu.memory_space<vmem>>, vector<1x1x128x128xf32>
    %83 = vector.shape_cast %82 : vector<1x1x128x128xf32> to vector<128x128xf32>
    %cst_46 = arith.constant dense<0.000000e+00> : vector<72x128xf32>
    %84 = tpu.matmul %73, %83, %cst_46 {dimension_numbers = #tpu.dot_dimension_numbers<[1], [0], [0], [1], [0, 0, 1, 1], [], []>} : vector<72x128xf32>, vector<128x128xf32>, vector<72x128xf32> -> vector<72x128xf32>
    %85 = arith.addf %81, %84 : vector<72x128xf32>
    %c1_47 = arith.constant 1 : index
    %c2_48 = arith.constant 2 : index
    %c0_49 = arith.constant 0 : index
    %c0_50 = arith.constant 0 : index
    %86 = vector.load %arg6[%c1_47, %c2_48, %c0_49, %c0_50] : memref<6x3x128x128xf32, #tpu.memory_space<vmem>>, vector<1x1x128x128xf32>
    %87 = vector.shape_cast %86 : vector<1x1x128x128xf32> to vector<128x128xf32>
    %cst_51 = arith.constant dense<0.000000e+00> : vector<72x128xf32>
    %88 = tpu.matmul %78, %87, %cst_51 {dimension_numbers = #tpu.dot_dimension_numbers<[1], [0], [0], [1], [0, 0, 1, 1], [], []>} : vector<72x128xf32>, vector<128x128xf32>, vector<72x128xf32> -> vector<72x128xf32>
    %89 = arith.addf %85, %88 : vector<72x128xf32>
    %c1_52 = arith.constant 1 : index
    %c0_53 = arith.constant 0 : index
    %90 = vector.load %arg4[%c1_52, %c0_53] : memref<6x128xf32, #tpu.memory_space<vmem>>, vector<1x128xf32>
    %91 = vector.broadcast %90 : vector<1x128xf32> to vector<72x128xf32>
    %92 = arith.addf %89, %91 : vector<72x128xf32>
    %93 = arith.addf %36, %92 : vector<72x128xf32>
    %cst_54 = arith.constant 0.000000e+00 : f32
    %94 = vector.broadcast %cst_54 : f32 to vector<72x128xf32>
    %95 = arith.cmpf ogt, %93, %94 : vector<72x128xf32>
    %cst_55 = arith.constant 0.00999999977 : f32
    %96 = vector.broadcast %cst_55 : f32 to vector<72x128xf32>
    %97 = arith.mulf %96, %93 : vector<72x128xf32>
    %98 = arith.select %95, %93, %97 : vector<72x128xi1>, vector<72x128xf32>
    %cst_56 = arith.constant 0.000000e+00 : f32
    %99 = vector.shape_cast %33 : vector<72x1xi1> to vector<72x1xi1>
    %100 = vector.broadcast %99 : vector<72x1xi1> to vector<72x128xi1>
    %101 = vector.broadcast %cst_56 : f32 to vector<72x128xf32>
    %102 = arith.select %100, %98, %101 : vector<72x128xi1>, vector<72x128xf32>
    %cst_57 = arith.constant 0.000000e+00 : f32
    %103 = vector.broadcast %cst_57 : f32 to vector<3x128xf32>
    %104 = vector.extract_strided_slice %102 {offsets = [0, 0], sizes = [69, 128], strides = [1, 1]} : vector<72x128xf32> to vector<69x128xf32>
    %105 = tpu.concatenate %103, %104 in 0 : vector<3x128xf32>, vector<69x128xf32> -> vector<72x128xf32>
    %106 = vector.extract_strided_slice %102 {offsets = [3, 0], sizes = [69, 128], strides = [1, 1]} : vector<72x128xf32> to vector<69x128xf32>
    %107 = tpu.concatenate %106, %103 in 0 : vector<69x128xf32>, vector<3x128xf32> -> vector<72x128xf32>
    %c2_58 = arith.constant 2 : index
    %c0_59 = arith.constant 0 : index
    %c0_60 = arith.constant 0 : index
    %c0_61 = arith.constant 0 : index
    %108 = vector.load %arg6[%c2_58, %c0_59, %c0_60, %c0_61] : memref<6x3x128x128xf32, #tpu.memory_space<vmem>>, vector<1x1x128x128xf32>
    %109 = vector.shape_cast %108 : vector<1x1x128x128xf32> to vector<128x128xf32>
    %cst_62 = arith.constant dense<0.000000e+00> : vector<72x128xf32>
    %110 = tpu.matmul %105, %109, %cst_62 {dimension_numbers = #tpu.dot_dimension_numbers<[1], [0], [0], [1], [0, 0, 1, 1], [], []>} : vector<72x128xf32>, vector<128x128xf32>, vector<72x128xf32> -> vector<72x128xf32>
    %c2_63 = arith.constant 2 : index
    %c1_64 = arith.constant 1 : index
    %c0_65 = arith.constant 0 : index
    %c0_66 = arith.constant 0 : index
    %111 = vector.load %arg6[%c2_63, %c1_64, %c0_65, %c0_66] : memref<6x3x128x128xf32, #tpu.memory_space<vmem>>, vector<1x1x128x128xf32>
    %112 = vector.shape_cast %111 : vector<1x1x128x128xf32> to vector<128x128xf32>
    %cst_67 = arith.constant dense<0.000000e+00> : vector<72x128xf32>
    %113 = tpu.matmul %102, %112, %cst_67 {dimension_numbers = #tpu.dot_dimension_numbers<[1], [0], [0], [1], [0, 0, 1, 1], [], []>} : vector<72x128xf32>, vector<128x128xf32>, vector<72x128xf32> -> vector<72x128xf32>
    %114 = arith.addf %110, %113 : vector<72x128xf32>
    %c2_68 = arith.constant 2 : index
    %c2_69 = arith.constant 2 : index
    %c0_70 = arith.constant 0 : index
    %c0_71 = arith.constant 0 : index
    %115 = vector.load %arg6[%c2_68, %c2_69, %c0_70, %c0_71] : memref<6x3x128x128xf32, #tpu.memory_space<vmem>>, vector<1x1x128x128xf32>
    %116 = vector.shape_cast %115 : vector<1x1x128x128xf32> to vector<128x128xf32>
    %cst_72 = arith.constant dense<0.000000e+00> : vector<72x128xf32>
    %117 = tpu.matmul %107, %116, %cst_72 {dimension_numbers = #tpu.dot_dimension_numbers<[1], [0], [0], [1], [0, 0, 1, 1], [], []>} : vector<72x128xf32>, vector<128x128xf32>, vector<72x128xf32> -> vector<72x128xf32>
    %118 = arith.addf %114, %117 : vector<72x128xf32>
    %c2_73 = arith.constant 2 : index
    %c0_74 = arith.constant 0 : index
    %119 = vector.load %arg4[%c2_73, %c0_74] : memref<6x128xf32, #tpu.memory_space<vmem>>, vector<1x128xf32>
    %120 = vector.broadcast %119 : vector<1x128xf32> to vector<72x128xf32>
    %121 = arith.addf %118, %120 : vector<72x128xf32>
    %cst_75 = arith.constant 0.000000e+00 : f32
    %122 = vector.broadcast %cst_75 : f32 to vector<72x128xf32>
    %123 = arith.cmpf ogt, %121, %122 : vector<72x128xf32>
    %cst_76 = arith.constant 0.00999999977 : f32
    %124 = vector.broadcast %cst_76 : f32 to vector<72x128xf32>
    %125 = arith.mulf %124, %121 : vector<72x128xf32>
    %126 = arith.select %123, %121, %125 : vector<72x128xi1>, vector<72x128xf32>
    %cst_77 = arith.constant 0.000000e+00 : f32
    %127 = vector.shape_cast %33 : vector<72x1xi1> to vector<72x1xi1>
    %128 = vector.broadcast %127 : vector<72x1xi1> to vector<72x128xi1>
    %129 = vector.broadcast %cst_77 : f32 to vector<72x128xf32>
    %130 = arith.select %128, %126, %129 : vector<72x128xi1>, vector<72x128xf32>
    %cst_78 = arith.constant 0.000000e+00 : f32
    %131 = vector.broadcast %cst_78 : f32 to vector<1x128xf32>
    %132 = vector.extract_strided_slice %130 {offsets = [0, 0], sizes = [71, 128], strides = [1, 1]} : vector<72x128xf32> to vector<71x128xf32>
    %133 = tpu.concatenate %131, %132 in 0 : vector<1x128xf32>, vector<71x128xf32> -> vector<72x128xf32>
    %134 = vector.extract_strided_slice %130 {offsets = [1, 0], sizes = [71, 128], strides = [1, 1]} : vector<72x128xf32> to vector<71x128xf32>
    %135 = tpu.concatenate %134, %131 in 0 : vector<71x128xf32>, vector<1x128xf32> -> vector<72x128xf32>
    %c3 = arith.constant 3 : index
    %c0_79 = arith.constant 0 : index
    %c0_80 = arith.constant 0 : index
    %c0_81 = arith.constant 0 : index
    %136 = vector.load %arg6[%c3, %c0_79, %c0_80, %c0_81] : memref<6x3x128x128xf32, #tpu.memory_space<vmem>>, vector<1x1x128x128xf32>
    %137 = vector.shape_cast %136 : vector<1x1x128x128xf32> to vector<128x128xf32>
    %cst_82 = arith.constant dense<0.000000e+00> : vector<72x128xf32>
    %138 = tpu.matmul %133, %137, %cst_82 {dimension_numbers = #tpu.dot_dimension_numbers<[1], [0], [0], [1], [0, 0, 1, 1], [], []>} : vector<72x128xf32>, vector<128x128xf32>, vector<72x128xf32> -> vector<72x128xf32>
    %c3_83 = arith.constant 3 : index
    %c1_84 = arith.constant 1 : index
    %c0_85 = arith.constant 0 : index
    %c0_86 = arith.constant 0 : index
    %139 = vector.load %arg6[%c3_83, %c1_84, %c0_85, %c0_86] : memref<6x3x128x128xf32, #tpu.memory_space<vmem>>, vector<1x1x128x128xf32>
    %140 = vector.shape_cast %139 : vector<1x1x128x128xf32> to vector<128x128xf32>
    %cst_87 = arith.constant dense<0.000000e+00> : vector<72x128xf32>
    %141 = tpu.matmul %130, %140, %cst_87 {dimension_numbers = #tpu.dot_dimension_numbers<[1], [0], [0], [1], [0, 0, 1, 1], [], []>} : vector<72x128xf32>, vector<128x128xf32>, vector<72x128xf32> -> vector<72x128xf32>
    %142 = arith.addf %138, %141 : vector<72x128xf32>
    %c3_88 = arith.constant 3 : index
    %c2_89 = arith.constant 2 : index
    %c0_90 = arith.constant 0 : index
    %c0_91 = arith.constant 0 : index
    %143 = vector.load %arg6[%c3_88, %c2_89, %c0_90, %c0_91] : memref<6x3x128x128xf32, #tpu.memory_space<vmem>>, vector<1x1x128x128xf32>
    %144 = vector.shape_cast %143 : vector<1x1x128x128xf32> to vector<128x128xf32>
    %cst_92 = arith.constant dense<0.000000e+00> : vector<72x128xf32>
    %145 = tpu.matmul %135, %144, %cst_92 {dimension_numbers = #tpu.dot_dimension_numbers<[1], [0], [0], [1], [0, 0, 1, 1], [], []>} : vector<72x128xf32>, vector<128x128xf32>, vector<72x128xf32> -> vector<72x128xf32>
    %146 = arith.addf %142, %145 : vector<72x128xf32>
    %c3_93 = arith.constant 3 : index
    %c0_94 = arith.constant 0 : index
    %147 = vector.load %arg4[%c3_93, %c0_94] : memref<6x128xf32, #tpu.memory_space<vmem>>, vector<1x128xf32>
    %148 = vector.broadcast %147 : vector<1x128xf32> to vector<72x128xf32>
    %149 = arith.addf %146, %148 : vector<72x128xf32>
    %150 = arith.addf %93, %149 : vector<72x128xf32>
    %cst_95 = arith.constant 0.000000e+00 : f32
    %151 = vector.broadcast %cst_95 : f32 to vector<72x128xf32>
    %152 = arith.cmpf ogt, %150, %151 : vector<72x128xf32>
    %cst_96 = arith.constant 0.00999999977 : f32
    %153 = vector.broadcast %cst_96 : f32 to vector<72x128xf32>
    %154 = arith.mulf %153, %150 : vector<72x128xf32>
    %155 = arith.select %152, %150, %154 : vector<72x128xi1>, vector<72x128xf32>
    %cst_97 = arith.constant 0.000000e+00 : f32
    %156 = vector.shape_cast %33 : vector<72x1xi1> to vector<72x1xi1>
    %157 = vector.broadcast %156 : vector<72x1xi1> to vector<72x128xi1>
    %158 = vector.broadcast %cst_97 : f32 to vector<72x128xf32>
    %159 = arith.select %157, %155, %158 : vector<72x128xi1>, vector<72x128xf32>
    %cst_98 = arith.constant 0.000000e+00 : f32
    %160 = vector.broadcast %cst_98 : f32 to vector<9x128xf32>
    %161 = vector.extract_strided_slice %159 {offsets = [0, 0], sizes = [63, 128], strides = [1, 1]} : vector<72x128xf32> to vector<63x128xf32>
    %162 = tpu.concatenate %160, %161 in 0 : vector<9x128xf32>, vector<63x128xf32> -> vector<72x128xf32>
    %163 = vector.extract_strided_slice %159 {offsets = [9, 0], sizes = [63, 128], strides = [1, 1]} : vector<72x128xf32> to vector<63x128xf32>
    %164 = tpu.concatenate %163, %160 in 0 : vector<63x128xf32>, vector<9x128xf32> -> vector<72x128xf32>
    %c4 = arith.constant 4 : index
    %c0_99 = arith.constant 0 : index
    %c0_100 = arith.constant 0 : index
    %c0_101 = arith.constant 0 : index
    %165 = vector.load %arg6[%c4, %c0_99, %c0_100, %c0_101] : memref<6x3x128x128xf32, #tpu.memory_space<vmem>>, vector<1x1x128x128xf32>
    %166 = vector.shape_cast %165 : vector<1x1x128x128xf32> to vector<128x128xf32>
    %cst_102 = arith.constant dense<0.000000e+00> : vector<72x128xf32>
    %167 = tpu.matmul %162, %166, %cst_102 {dimension_numbers = #tpu.dot_dimension_numbers<[1], [0], [0], [1], [0, 0, 1, 1], [], []>} : vector<72x128xf32>, vector<128x128xf32>, vector<72x128xf32> -> vector<72x128xf32>
    %c4_103 = arith.constant 4 : index
    %c1_104 = arith.constant 1 : index
    %c0_105 = arith.constant 0 : index
    %c0_106 = arith.constant 0 : index
    %168 = vector.load %arg6[%c4_103, %c1_104, %c0_105, %c0_106] : memref<6x3x128x128xf32, #tpu.memory_space<vmem>>, vector<1x1x128x128xf32>
    %169 = vector.shape_cast %168 : vector<1x1x128x128xf32> to vector<128x128xf32>
    %cst_107 = arith.constant dense<0.000000e+00> : vector<72x128xf32>
    %170 = tpu.matmul %159, %169, %cst_107 {dimension_numbers = #tpu.dot_dimension_numbers<[1], [0], [0], [1], [0, 0, 1, 1], [], []>} : vector<72x128xf32>, vector<128x128xf32>, vector<72x128xf32> -> vector<72x128xf32>
    %171 = arith.addf %167, %170 : vector<72x128xf32>
    %c4_108 = arith.constant 4 : index
    %c2_109 = arith.constant 2 : index
    %c0_110 = arith.constant 0 : index
    %c0_111 = arith.constant 0 : index
    %172 = vector.load %arg6[%c4_108, %c2_109, %c0_110, %c0_111] : memref<6x3x128x128xf32, #tpu.memory_space<vmem>>, vector<1x1x128x128xf32>
    %173 = vector.shape_cast %172 : vector<1x1x128x128xf32> to vector<128x128xf32>
    %cst_112 = arith.constant dense<0.000000e+00> : vector<72x128xf32>
    %174 = tpu.matmul %164, %173, %cst_112 {dimension_numbers = #tpu.dot_dimension_numbers<[1], [0], [0], [1], [0, 0, 1, 1], [], []>} : vector<72x128xf32>, vector<128x128xf32>, vector<72x128xf32> -> vector<72x128xf32>
    %175 = arith.addf %171, %174 : vector<72x128xf32>
    %c4_113 = arith.constant 4 : index
    %c0_114 = arith.constant 0 : index
    %176 = vector.load %arg4[%c4_113, %c0_114] : memref<6x128xf32, #tpu.memory_space<vmem>>, vector<1x128xf32>
    %177 = vector.broadcast %176 : vector<1x128xf32> to vector<72x128xf32>
    %178 = arith.addf %175, %177 : vector<72x128xf32>
    %cst_115 = arith.constant 0.000000e+00 : f32
    %179 = vector.broadcast %cst_115 : f32 to vector<72x128xf32>
    %180 = arith.cmpf ogt, %178, %179 : vector<72x128xf32>
    %cst_116 = arith.constant 0.00999999977 : f32
    %181 = vector.broadcast %cst_116 : f32 to vector<72x128xf32>
    %182 = arith.mulf %181, %178 : vector<72x128xf32>
    %183 = arith.select %180, %178, %182 : vector<72x128xi1>, vector<72x128xf32>
    %cst_117 = arith.constant 0.000000e+00 : f32
    %184 = vector.shape_cast %33 : vector<72x1xi1> to vector<72x1xi1>
    %185 = vector.broadcast %184 : vector<72x1xi1> to vector<72x128xi1>
    %186 = vector.broadcast %cst_117 : f32 to vector<72x128xf32>
    %187 = arith.select %185, %183, %186 : vector<72x128xi1>, vector<72x128xf32>
    %cst_118 = arith.constant 0.000000e+00 : f32
    %188 = vector.broadcast %cst_118 : f32 to vector<1x128xf32>
    %189 = vector.extract_strided_slice %187 {offsets = [0, 0], sizes = [71, 128], strides = [1, 1]} : vector<72x128xf32> to vector<71x128xf32>
    %190 = tpu.concatenate %188, %189 in 0 : vector<1x128xf32>, vector<71x128xf32> -> vector<72x128xf32>
    %191 = vector.extract_strided_slice %187 {offsets = [1, 0], sizes = [71, 128], strides = [1, 1]} : vector<72x128xf32> to vector<71x128xf32>
    %192 = tpu.concatenate %191, %188 in 0 : vector<71x128xf32>, vector<1x128xf32> -> vector<72x128xf32>
    %c5 = arith.constant 5 : index
    %c0_119 = arith.constant 0 : index
    %c0_120 = arith.constant 0 : index
    %c0_121 = arith.constant 0 : index
    %193 = vector.load %arg6[%c5, %c0_119, %c0_120, %c0_121] : memref<6x3x128x128xf32, #tpu.memory_space<vmem>>, vector<1x1x128x128xf32>
    %194 = vector.shape_cast %193 : vector<1x1x128x128xf32> to vector<128x128xf32>
    %cst_122 = arith.constant dense<0.000000e+00> : vector<72x128xf32>
    %195 = tpu.matmul %190, %194, %cst_122 {dimension_numbers = #tpu.dot_dimension_numbers<[1], [0], [0], [1], [0, 0, 1, 1], [], []>} : vector<72x128xf32>, vector<128x128xf32>, vector<72x128xf32> -> vector<72x128xf32>
    %c5_123 = arith.constant 5 : index
    %c1_124 = arith.constant 1 : index
    %c0_125 = arith.constant 0 : index
    %c0_126 = arith.constant 0 : index
    %196 = vector.load %arg6[%c5_123, %c1_124, %c0_125, %c0_126] : memref<6x3x128x128xf32, #tpu.memory_space<vmem>>, vector<1x1x128x128xf32>
    %197 = vector.shape_cast %196 : vector<1x1x128x128xf32> to vector<128x128xf32>
    %cst_127 = arith.constant dense<0.000000e+00> : vector<72x128xf32>
    %198 = tpu.matmul %187, %197, %cst_127 {dimension_numbers = #tpu.dot_dimension_numbers<[1], [0], [0], [1], [0, 0, 1, 1], [], []>} : vector<72x128xf32>, vector<128x128xf32>, vector<72x128xf32> -> vector<72x128xf32>
    %199 = arith.addf %195, %198 : vector<72x128xf32>
    %c5_128 = arith.constant 5 : index
    %c2_129 = arith.constant 2 : index
    %c0_130 = arith.constant 0 : index
    %c0_131 = arith.constant 0 : index
    %200 = vector.load %arg6[%c5_128, %c2_129, %c0_130, %c0_131] : memref<6x3x128x128xf32, #tpu.memory_space<vmem>>, vector<1x1x128x128xf32>
    %201 = vector.shape_cast %200 : vector<1x1x128x128xf32> to vector<128x128xf32>
    %cst_132 = arith.constant dense<0.000000e+00> : vector<72x128xf32>
    %202 = tpu.matmul %192, %201, %cst_132 {dimension_numbers = #tpu.dot_dimension_numbers<[1], [0], [0], [1], [0, 0, 1, 1], [], []>} : vector<72x128xf32>, vector<128x128xf32>, vector<72x128xf32> -> vector<72x128xf32>
    %203 = arith.addf %199, %202 : vector<72x128xf32>
    %c5_133 = arith.constant 5 : index
    %c0_134 = arith.constant 0 : index
    %204 = vector.load %arg4[%c5_133, %c0_134] : memref<6x128xf32, #tpu.memory_space<vmem>>, vector<1x128xf32>
    %205 = vector.broadcast %204 : vector<1x128xf32> to vector<72x128xf32>
    %206 = arith.addf %203, %205 : vector<72x128xf32>
    %207 = arith.addf %150, %206 : vector<72x128xf32>
    %208 = vector.extract_strided_slice %207 {offsets = [16, 0], sizes = [40, 128], strides = [1, 1]} : vector<72x128xf32> to vector<40x128xf32>
    %c0_135 = arith.constant 0 : index
    %c0_136 = arith.constant 0 : index
    %c0_137 = arith.constant 0 : index
    %209 = vector.load %arg5[%c0_135, %c0_136, %c0_137] : memref<1x40x128xf32, #tpu.memory_space<vmem>>, vector<1x40x128xf32>
    %210 = vector.shape_cast %209 : vector<1x40x128xf32> to vector<40x128xf32>
    %211 = vector.shape_cast %208 : vector<40x128xf32> to vector<1x40x128xf32>
    tpu.vector_store %arg5[%c0_135, %c0_136, %c0_137], %211 {strides = array<i32>} : memref<1x40x128xf32, #tpu.memory_space<vmem>>, vector<1x40x128xf32>,
    return
  }
  func.func @transform_2(%arg0: i32, %arg1: i32) -> (i32, i32) {
    %c0_i32 = arith.constant 0 : i32
    %c0_i32_0 = arith.constant 0 : i32
    %c0_i32_1 = arith.constant 0 : i32
    return %c0_i32, %c0_i32_0 : i32, i32
  }
  func.func @transform_3(%arg0: i32, %arg1: i32) -> (i32, i32, i32) {
    %c0_i32 = arith.constant 0 : i32
    %c0_i32_0 = arith.constant 0 : i32
    return %arg0, %arg1, %c0_i32 : i32, i32, i32
  }
}

</mosaic_0001>

<llo_original>
// kernel: tpu_custom_call.1
$region0: #{tpu_custom_call.1}
  #allocation0 [shape = 'u32[]', space=smem, size = 0x4, offset = 0x4, fixed_abs, tag = 'smem constant byte address 0x4 - core index']
  #allocation1 [shape = 'u32[144,128]{1,0:T(1,128)}', space=vmem, size = 0x12000, scoped, tag = 'internal scratch']
  #allocation2 [shape = 'f32[6,3,128,128]{3,2,1,0:T(8,128)}', space=vmem, size = 0x120000, scoped, tag = 'scratch operand']
  #allocation3 [shape = 'f32[2,72,128]{2,1,0:T(8,128)}', space=vmem, size = 0x12000, scoped, tag = 'scratch operand']
  #allocation4 [shape = 's32[3]{0}', space=sflag, size = 0xc, scoped, tag = 'scratch operand']
  #allocation9 [shape = 's32[]', space=sflag, size = 0x4, offset = 0, fixed_abs, tag = 'sflag constant byte address 0x0 - dummy sync flag']
  #allocation10 [shape = 's32[]', space=sflag, size = 0x4, offset = 0, fixed_abs, tag = 'sflag constant byte address 0x0 - dummy sync flag']
  #allocation11 [shape = 'u32[]', space=smem, size = 0x4, offset = 0x44, fixed_abs, tag = 'smem constant byte address 0x44 - assertion arg 0']
  #allocation12 [shape = 'u32[]', space=smem, size = 0x4, offset = 0x48, fixed_abs, tag = 'smem constant byte address 0x48 - assertion arg 1']
  #allocation13 [shape = 's32[]', space=sflag, size = 0x4, offset = 0, fixed_abs, tag = 'sflag constant byte address 0x0 - dummy sync flag']
  #allocation14 [shape = 's32[]', space=sflag, size = 0x4, offset = 0, fixed_abs, tag = 'sflag constant byte address 0x0 - dummy sync flag']
  #allocation15 [shape = 's32[]', space=sflag, size = 0x4, offset = 0, fixed_abs, tag = 'sflag constant byte address 0x0 - dummy sync flag']
  #allocation16 [shape = 's32[]', space=sflag, size = 0x4, offset = 0, fixed_abs, tag = 'sflag constant byte address 0x0 - dummy sync flag']
  %s0 = inlined_call_operand.hbm [shape: f32[2,72,128], index: 0, kind: input, shape index: {}]
  %s1 = inlined_call_operand.hbm [shape: f32[6,3,128,128], index: 1, kind: input, shape index: {}]
  %s2 = inlined_call_operand.hbm [shape: f32[6,128], index: 2, kind: input, shape index: {}]
  %s3 = inlined_call_operand.hbm [shape: f32[2,40,128], index: 3, kind: output, shape index: {}]
  %s4 = sld [smem:[#allocation0]]
  $region61: #{tpu_custom_call.1} parent=0
    _
  %s6 = ssub.s32 1, %s4
  %s7 = scalar_select 0, %s6, %s4
  $region1: #{tpu_custom_call.1} parent=0
    #allocation5 [shape = 'u8[4096]{0}', space=vmem, size = 0x1000, scoped, tag = 'input window, operand 2, single buffered']
    #allocation6 [shape = 's32[2]{0}', space=sflag, size = 0x8, scoped, tag = 'scoped memory for tpu_custom_call.1']
    #allocation7 [shape = 's32[2]{0}', space=sflag, size = 0x8, scoped, tag = 'scoped memory for tpu_custom_call.1']
    #allocation8 [shape = 'u8[40960]{0}', space=vmem, size = 0xa000, scoped, tag = 'output window, operand 0']
    %8 = vsyncpa [#allocation6], 0
    %9 = vsyncpa [#allocation7], 0
    %s10 = scalar_lea.sflag [#allocation7], 1
    %11 = vsyncpa %s10, 0
    loop: start=0, step=1, limit=4
    $region2: #{tpu_custom_call.1} parent=1 // loop_pre_header
      _
    $region3: #{tpu_custom_call.1} parent=1 // loop_header
      %s13 = sphi 0, %s17
      %p14 = scmp.ge.s32.totalorder %s13, 4
      %s20 = sphi 0, %s32
      %s21 = sphi 0, %s28
      %s22 = sphi 0, %s20
      %s23 = sphi 0, %s21
      %s24 = sphi 0, %s22
      %s25 = sphi 0, %s23
      %s33 = sphi 0, %s33
      %s35 = sphi 0, %s33
      %s36 = sphi 0, %s35
      %s50 = sphi 0, %s36
      %s58 = sphi 0, %s60
      %s61 = sphi 0, %s58
      %s62 = sphi 0, %s61
      %s78 = sphi 0, %s62
    $region4: #{tpu_custom_call.1} parent=1 // loop_header_branch
      %16 = sbr.rel (%p14) target = $region8
    $region5: #{tpu_custom_call.1} parent=1 // loop_body
      %s18 = ssub.s32 %s13, 1
      %s19 = ssub.s32 %s13, 2
      %s26 = sadd.s32 1, %s21
      %p27 = scmp.ge.s32.totalorder %s26, 1
      %s28 = scalar_select %p27, 0, %s26
      %s29 = sadd.s32 1, %s20
      %s30 = scalar_select %p27, %s29, %s20
      %p31 = scmp.ge.s32.totalorder %s30, 2
      %s32 = scalar_select %p31, 0, %s30
      %s34 = sadd.s32 %s33, 1
      %p37 = scmp.eq.s32.totalorder %s13, 1
      %p38 = scmp.ne.s32.totalorder %s33, %s35
      %p39 = scmp.eq.s32.totalorder %s13, 0
      %p40 = por %p38, %p39
      %p41 = scmp.ne.s32.totalorder %s33, %s35
      %p42 = scmp.eq.s32.totalorder %s18, 1
      %p43 = por %p41, %p42
      %p44 = scmp.ne.s32.totalorder %s35, %s36
      %p45 = scmp.eq.s32.totalorder %s18, 0
      %p46 = por %p44, %p45
      %p47 = scmp.ne.s32.totalorder %s35, %s36
      %p48 = scmp.eq.s32.totalorder %s19, 1
      %p49 = por %p47, %p48
      %p51 = scmp.ne.s32.totalorder %s36, %s50
      %p52 = scmp.eq.s32.totalorder %s19, 0
      %p53 = por %p51, %p52
      %s54 = ssub.s32 %s20, %s32
      %s55 = ssub.s32 %s21, %s28
      %s56 = sor.u32 %s54, %s55
      %p57 = scmp.eq.s32.totalorder %s56, 0
      %s59 = sadd.s32 %s58, 1
      %s60 = scalar_select %p57, %s58, %s59
      %p63 = pneg %p57
      %p64 = scmp.eq.s32.totalorder %s13, 1
      %p65 = por %p63, %p64
      %p66 = scmp.ne.s32.totalorder %s58, %s61
      %p67 = scmp.eq.s32.totalorder %s13, 0
      %p68 = por %p66, %p67
      %p69 = scmp.ne.s32.totalorder %s58, %s61
      %p70 = scmp.eq.s32.totalorder %s18, 1
      %p71 = por %p69, %p70
      %p72 = scmp.ne.s32.totalorder %s61, %s62
      %p73 = scmp.eq.s32.totalorder %s18, 0
      %p74 = por %p72, %p73
      %p75 = scmp.ne.s32.totalorder %s61, %s62
      %p76 = scmp.eq.s32.totalorder %s19, 1
      %p77 = por %p75, %p76
      %p79 = scmp.ne.s32.totalorder %s62, %s78
      %p80 = scmp.eq.s32.totalorder %s19, 0
      %p81 = por %p79, %p80
      %p82 = scmp.le.s32.totalorder 1, %s13
      %p83 = scmp.lt.s32.totalorder %s13, 3
      %p84 = pnand %p82, %p83
      %p85 = pneg %p84
      // Predicated region
      $region9: #{tpu_custom_call.1} parent=5 // pred_check
        _
      $region10: #{tpu_custom_call.1} parent=5 // pred_check_branch
        %87 = sbr.rel (%p84) target = $region12
      $region11: #{tpu_custom_call.1} parent=5 // pred_region
        %s88 = ssub.s32 %s13, 1
        // Predicated region
        $region13: #{tpu_custom_call.1} parent=11 // pred_check
          %p89 = pneg %p46
        $region14: #{tpu_custom_call.1} parent=11 // pred_check_branch
          %91 = sbr.rel (%p89) target = $region16
        $region15: #{tpu_custom_call.1} parent=11 // pred_region
          %s93 = ssub.s32 128, 128
          %94 = vsyncadd [#allocation6], %s93
          %s96 = sshll.u32 [#allocation5], 4
          %s97 = int_to_ptr.vmem [resolvable:$true] %s96
          %99 = dma.hbm_to_vmem [thread:$0]  %s2, 128, %s97, [#allocation6]
        $region16: #{tpu_custom_call.1} parent=11 // pred_fallthru
          _
      $region12: #{tpu_custom_call.1} parent=5 // pred_fallthru
        _
      %p100 = scmp.lt.s32.totalorder %s13, 2
      // Predicated region
      $region17: #{tpu_custom_call.1} parent=5 // pred_check
        %p101 = pneg %p100
      $region18: #{tpu_custom_call.1} parent=5 // pred_check_branch
        %103 = sbr.rel (%p101) target = $region20
      $region19: #{tpu_custom_call.1} parent=5 // pred_region
        _
      $region20: #{tpu_custom_call.1} parent=5 // pred_fallthru
        _
      %p104 = scmp.le.s32.totalorder 1, %s13
      %p105 = scmp.lt.s32.totalorder %s13, 3
      %p106 = pnand %p104, %p105
      %p107 = pneg %p106
      // Predicated region
      $region21: #{tpu_custom_call.1} parent=5 // pred_check
        _
      $region22: #{tpu_custom_call.1} parent=5 // pred_check_branch
        %109 = sbr.rel (%p106) target = $region24
      $region23: #{tpu_custom_call.1} parent=5 // pred_region
        %s110 = ssub.s32 %s13, 1
        // Predicated region
        $region25: #{tpu_custom_call.1} parent=23 // pred_check
          %p111 = pneg %p46
        $region26: #{tpu_custom_call.1} parent=23 // pred_check_branch
          %113 = sbr.rel (%p111) target = $region28
        $region27: #{tpu_custom_call.1} parent=23 // pred_region
          %114 = dma.done [#allocation6], 128
        $region28: #{tpu_custom_call.1} parent=23 // pred_fallthru
          _
        %p115 = pneg %p46
        %p116 = pneg %p43
        %p117 = pneg %p74
        %p118 = pneg %p71
        %s119 = sand.u32 %s61, 1
        %s120 = scalar_lea.sflag [#allocation7], %s119
        %s121 = sand.u32 %s61, 1
        %s122 = smul.addr %s121, 40
        %s123 = scalar_lea.vmem [#allocation8], %s122
        %s124 = smul.u32 5, %s23
        %p125 = scmp.lt.s32.totalorder %s23, 0
        %s126 = ssub.s32 0, %s23
        %s127 = scalar_select %p125, %s126, %s23
        %s128 = sand.u32 %s127, 1
        %s129 = ssub.s32 0, %s128
        %s130 = scalar_select %p125, %s129, %s128
        %p131 = scmp.ne.s32.totalorder %s130, 0
        %p132 = scmp.lt.s32.totalorder %s130, 0
        %p133 = pnand %p132, %p131
        %p134 = pneg %p133
        %s135 = sadd.s32 %s130, 2
        %s136 = scalar_select %p134, %s135, %s130
        %p137 = scmp.eq.s32.totalorder %s23, 0
        // Predicated region
        $region29: #{tpu_custom_call.1} parent=23 // pred_check
          %p138 = pneg %p137
        $region30: #{tpu_custom_call.1} parent=23 // pred_check_branch
          %140 = sbr.rel (%p138) target = $region32
        $region31: #{tpu_custom_call.1} parent=23 // pred_region
          %s141 = scalar_lea.sflag [#allocation4], 2
          // Predicated region
          $region33: #{tpu_custom_call.1} parent=31 // pred_check
            _
          $region34: #{tpu_custom_call.1} parent=31 // pred_check_branch
            %143 = sbr.rel target = $region36
          $region35: #{tpu_custom_call.1} parent=31 // pred_region
            %144 = sst [smem:[#allocation11]] [#allocation10]
            %145 = sst [smem:[#allocation12]] [#allocation9]
          $region36: #{tpu_custom_call.1} parent=31 // pred_fallthru
            _
          %147 = shalt.err (0)
          %s149 = sshll.u32 [#allocation2], 4
          %s150 = int_to_ptr.vmem [resolvable:$true] %s149
          %152 = dma.hbm_to_vmem [thread:$0]  %s1, 36864, %s150, %s141
          %s153 = smul.u32 %s22, 72
          %s154 = smul.addr %s153, 16
          %s155 = scalar_lea.hbm %s0, %s154
          // Predicated region
          $region37: #{tpu_custom_call.1} parent=31 // pred_check
            _
          $region38: #{tpu_custom_call.1} parent=31 // pred_check_branch
            %157 = sbr.rel target = $region40
          $region39: #{tpu_custom_call.1} parent=31 // pred_region
            %158 = sst [smem:[#allocation11]] [#allocation14]
            %159 = sst [smem:[#allocation12]] [#allocation13]
          $region40: #{tpu_custom_call.1} parent=31 // pred_fallthru
            _
          %161 = shalt.err (0)
          %s163 = sshll.u32 [#allocation3], 4
          %s164 = int_to_ptr.vmem [resolvable:$true] %s163
          %166 = dma.hbm_to_vmem [thread:$0]  %s155, 1152, %s164, [#allocation4]
          %s167 = smul.u32 6, 3
          %s168 = smul.u32 %s167, 128
          %s169 = smul.u32 %s168, 1
          %s170 = sshll.u32 %s169, 4
          %171 = dma.done %s141, %s170
        $region32: #{tpu_custom_call.1} parent=23 // pred_fallthru
          _
        %s172 = smul.u32 %s23, 40
        %s173 = smul.u32 %s136, 72
        %s174 = scalar_lea.vmem [#allocation3], %s173
        %s175 = scalar_lea.sflag [#allocation4], %s136
        %s176 = smul.u32 72, 1
        %s177 = sshll.u32 %s176, 4
        %178 = dma.done %s175, %s177
        %s179 = sadd.s32 %s23, 1
        %p180 = scmp.lt.s32.totalorder %s179, 1
        // Predicated region
        $region41: #{tpu_custom_call.1} parent=23 // pred_check
          %p181 = pneg %p180
        $region42: #{tpu_custom_call.1} parent=23 // pred_check_branch
          %183 = sbr.rel (%p181) target = $region44
        $region43: #{tpu_custom_call.1} parent=23 // pred_region
          %s184 = ssub.s32 1, %s136
          %s185 = smul.u32 %s179, 40
          %s186 = smul.u32 %s22, 72
          %s187 = sadd.s32 %s185, %s186
          %s188 = smul.addr %s187, 16
          %s189 = scalar_lea.hbm %s0, %s188
          %s190 = smul.u32 %s184, 72
          %s191 = scalar_lea.vmem [#allocation3], %s190
          %s192 = scalar_lea.sflag [#allocation4], %s184
          // Predicated region
          $region45: #{tpu_custom_call.1} parent=43 // pred_check
            _
          $region46: #{tpu_custom_call.1} parent=43 // pred_check_branch
            %194 = sbr.rel target = $region48
          $region47: #{tpu_custom_call.1} parent=43 // pred_region
            %195 = sst [smem:[#allocation11]] [#allocation16]
            %196 = sst [smem:[#allocation12]] [#allocation15]
          $region48: #{tpu_custom_call.1} parent=43 // pred_fallthru
            _
          %198 = shalt.err (0)
          %s200 = sshll.u32 %s191, 4
          %s201 = int_to_ptr.vmem [resolvable:$true] %s200
          %203 = dma.hbm_to_vmem [thread:$0]  %s189, 1152, %s201, %s192
        $region44: #{tpu_custom_call.1} parent=23 // pred_fallthru
          _
        %s204 = ssub.s32 %s172, 16
        %v205 = vlaneseq
        %v206 = vshrl.u32 %v205, 7
        %v207 = vadd.s32 %v206, 8
        %v208 = vadd.s32 %v206, 16
        %v209 = vadd.s32 %v206, 24
        %v210 = vadd.s32 %v206, 32
        %v211 = vadd.s32 %v206, 40
        %v212 = vadd.s32 %v206, 48
        %v213 = vadd.s32 %v206, 56
        %v214 = vadd.s32 %v206, 64
        %v215 = vstv %s204
        %v216 = vadd.s32 %v206, %v215
        %v217 = vadd.s32 %v207, %v215
        %v218 = vadd.s32 %v208, %v215
        %v219 = vadd.s32 %v209, %v215
        %v220 = vadd.s32 %v210, %v215
        %v221 = vadd.s32 %v211, %v215
        %v222 = vadd.s32 %v212, %v215
        %v223 = vadd.s32 %v213, %v215
        %v224 = vadd.s32 %v214, %v215
        %vm225 = vcmp.ge.s32.totalorder %v216, 0
        %vm226 = vcmp.ge.s32.totalorder %v217, 0
        %vm227 = vcmp.ge.s32.totalorder %v218, 0
        %vm228 = vcmp.ge.s32.totalorder %v219, 0
        %vm229 = vcmp.ge.s32.totalorder %v220, 0
        %vm230 = vcmp.ge.s32.totalorder %v221, 0
        %vm231 = vcmp.ge.s32.totalorder %v222, 0
        %vm232 = vcmp.ge.s32.totalorder %v223, 0
        %vm233 = vcmp.ge.s32.totalorder %v224, 0
        %vm234 = vcmp.lt.s32.totalorder %v216, 40
        %vm235 = vcmp.lt.s32.totalorder %v217, 40
        %vm236 = vcmp.lt.s32.totalorder %v218, 40
        %vm237 = vcmp.lt.s32.totalorder %v219, 40
        %vm238 = vcmp.lt.s32.totalorder %v220, 40
        %vm239 = vcmp.lt.s32.totalorder %v221, 40
        %vm240 = vcmp.lt.s32.totalorder %v222, 40
        %vm241 = vcmp.lt.s32.totalorder %v223, 40
        %vm242 = vcmp.lt.s32.totalorder %v224, 40
        %vm243 = vmand %vm225, %vm234
        %vm244 = vmand %vm226, %vm235
        %vm245 = vmand %vm227, %vm236
        %vm246 = vmand %vm228, %vm237
        %vm247 = vmand %vm229, %vm238
        %vm248 = vmand %vm230, %vm239
        %vm249 = vmand %vm231, %vm240
        %vm250 = vmand %vm232, %vm241
        %vm251 = vmand %vm233, %vm242
        %v252 = vld [vmem:[%s174] sm:$0xff]
        %v253 = vld [vmem:[%s174 + $0x8] sm:$0xff]
        %v254 = vld [vmem:[%s174 + $0x10] sm:$0xff]
        %v255 = vld [vmem:[%s174 + $0x18] sm:$0xff]
        %v256 = vld [vmem:[%s174 + $0x20] sm:$0xff]
        %v257 = vld [vmem:[%s174 + $0x28] sm:$0xff]
        %v258 = vld [vmem:[%s174 + $0x30] sm:$0xff]
        %v259 = vld [vmem:[%s174 + $0x38] sm:$0xff]
        %v260 = vld [vmem:[%s174 + $0x40] sm:$0xff]
        %vm261 = vcmp.gt.f32.partialorder %v252, 0.0
        %vm262 = vcmp.gt.f32.partialorder %v253, 0.0
        %vm263 = vcmp.gt.f32.partialorder %v254, 0.0
        %vm264 = vcmp.gt.f32.partialorder %v255, 0.0
        %vm265 = vcmp.gt.f32.partialorder %v256, 0.0
        %vm266 = vcmp.gt.f32.partialorder %v257, 0.0
        %vm267 = vcmp.gt.f32.partialorder %v258, 0.0
        %vm268 = vcmp.gt.f32.partialorder %v259, 0.0
        %vm269 = vcmp.gt.f32.partialorder %v260, 0.0
        %v270 = vmul.f32 %v252, 0.01
        %v271 = vmul.f32 %v253, 0.01
        %v272 = vmul.f32 %v254, 0.01
        %v273 = vmul.f32 %v255, 0.01
        %v274 = vmul.f32 %v256, 0.01
        %v275 = vmul.f32 %v257, 0.01
        %v276 = vmul.f32 %v258, 0.01
        %v277 = vmul.f32 %v259, 0.01
        %v278 = vmul.f32 %v260, 0.01
        %v279 = vsel %vm261, %v252, %v270
        %v280 = vsel %vm262, %v253, %v271
        %v281 = vsel %vm263, %v254, %v272
        %v282 = vsel %vm264, %v255, %v273
        %v283 = vsel %vm265, %v256, %v274
        %v284 = vsel %vm266, %v257, %v275
        %v285 = vsel %vm267, %v258, %v276
        %v286 = vsel %vm268, %v259, %v277
        %v287 = vsel %vm269, %v260, %v278
        %v288 = vsel %vm243, 1, 0
        %v289 = vsel %vm244, 1, 0
        %v290 = vsel %vm245, 1, 0
        %v291 = vsel %vm246, 1, 0
        %v292 = vsel %vm247, 1, 0
        %v293 = vsel %vm248, 1, 0
        %v294 = vsel %vm249, 1, 0
        %v295 = vsel %vm250, 1, 0
        %v296 = vsel %vm251, 1, 0
        %vm297 = vcmp.eq.s32.totalorder %v288, 1
        %vm298 = vcmp.eq.s32.totalorder %v289, 1
        %vm299 = vcmp.eq.s32.totalorder %v290, 1
        %vm300 = vcmp.eq.s32.totalorder %v291, 1
        %vm301 = vcmp.eq.s32.totalorder %v292, 1
        %vm302 = vcmp.eq.s32.totalorder %v293, 1
        %vm303 = vcmp.eq.s32.totalorder %v294, 1
        %vm304 = vcmp.eq.s32.totalorder %v295, 1
        %vm305 = vcmp.eq.s32.totalorder %v296, 1
        %v306 = vsel %vm297, %v279, 0.0
        %v307 = vsel %vm298, %v280, 0.0
        %v308 = vsel %vm299, %v281, 0.0
        %v309 = vsel %vm300, %v282, 0.0
        %v310 = vsel %vm301, %v283, 0.0
        %v311 = vsel %vm302, %v284, 0.0
        %v312 = vsel %vm303, %v285, 0.0
        %v313 = vsel %vm304, %v286, 0.0
        %v314 = vsel %vm305, %v287, 0.0
        %vm324 = vcmask 1040384
        %v325 = vrot.slane %v306, 7
        %v326 = vrot.slane %v307, 7
        %v327 = vsel %vm324, %v325, %v326
        %v328 = vrot.slane %v308, 7
        %v329 = vsel %vm324, %v326, %v328
        %v330 = vrot.slane %v309, 7
        %v331 = vsel %vm324, %v328, %v330
        %v332 = vrot.slane %v310, 7
        %v333 = vsel %vm324, %v330, %v332
        %v334 = vrot.slane %v311, 7
        %v335 = vsel %vm324, %v332, %v334
        %v336 = vrot.slane %v312, 7
        %v337 = vsel %vm324, %v334, %v336
        %v338 = vrot.slane %v313, 7
        %v339 = vsel %vm324, %v336, %v338
        %v340 = vrot.slane %v314, 7
        %v341 = vsel %vm324, %v338, %v340
        %v351 = vsel %vm324, 0.0, %v325
        %vm352 = vcmask 1046528
        %v353 = vrot.slane %v306, 1
        %v354 = vrot.slane %v307, 1
        %v355 = vsel %vm352, %v353, %v354
        %v356 = vrot.slane %v308, 1
        %v357 = vsel %vm352, %v354, %v356
        %v358 = vrot.slane %v309, 1
        %v359 = vsel %vm352, %v356, %v358
        %v360 = vrot.slane %v310, 1
        %v361 = vsel %vm352, %v358, %v360
        %v362 = vrot.slane %v311, 1
        %v363 = vsel %vm352, %v360, %v362
        %v364 = vrot.slane %v312, 1
        %v365 = vsel %vm352, %v362, %v364
        %v366 = vrot.slane %v313, 1
        %v367 = vsel %vm352, %v364, %v366
        %v368 = vrot.slane %v314, 1
        %v369 = vsel %vm352, %v366, %v368
        %v379 = vsel %vm352, %v368, 0.0
        %v380 = vld [vmem:[#allocation2] sm:$0xff]
        %v381 = vld [vmem:[#allocation2 + $0x8] sm:$0xff]
        %v382 = vld [vmem:[#allocation2 + $0x10] sm:$0xff]
        %v383 = vld [vmem:[#allocation2 + $0x18] sm:$0xff]
        %v384 = vld [vmem:[#allocation2 + $0x20] sm:$0xff]
        %v385 = vld [vmem:[#allocation2 + $0x28] sm:$0xff]
        %v386 = vld [vmem:[#allocation2 + $0x30] sm:$0xff]
        %v387 = vld [vmem:[#allocation2 + $0x38] sm:$0xff]
        %v388 = vld [vmem:[#allocation2 + $0x40] sm:$0xff]
        %v389 = vld [vmem:[#allocation2 + $0x48] sm:$0xff]
        %v390 = vld [vmem:[#allocation2 + $0x50] sm:$0xff]
        %v391 = vld [vmem:[#allocation2 + $0x58] sm:$0xff]
        %v392 = vld [vmem:[#allocation2 + $0x60] sm:$0xff]
        %v393 = vld [vmem:[#allocation2 + $0x68] sm:$0xff]
        %v394 = vld [vmem:[#allocation2 + $0x70] sm:$0xff]
        %v395 = vld [vmem:[#allocation2 + $0x78] sm:$0xff]
        %s396 = scalar_lea.vmem [#allocation2], 128
        %v397 = vld [vmem:[%s396] sm:$0xff]
        %v398 = vld [vmem:[%s396 + $0x8] sm:$0xff]
        %v399 = vld [vmem:[%s396 + $0x10] sm:$0xff]
        %v400 = vld [vmem:[%s396 + $0x18] sm:$0xff]
        %v401 = vld [vmem:[%s396 + $0x20] sm:$0xff]
        %v402 = vld [vmem:[%s396 + $0x28] sm:$0xff]
        %v403 = vld [vmem:[%s396 + $0x30] sm:$0xff]
        %v404 = vld [vmem:[%s396 + $0x38] sm:$0xff]
        %v405 = vld [vmem:[%s396 + $0x40] sm:$0xff]
        %v406 = vld [vmem:[%s396 + $0x48] sm:$0xff]
        %v407 = vld [vmem:[%s396 + $0x50] sm:$0xff]
        %v408 = vld [vmem:[%s396 + $0x58] sm:$0xff]
        %v409 = vld [vmem:[%s396 + $0x60] sm:$0xff]
        %v410 = vld [vmem:[%s396 + $0x68] sm:$0xff]
        %v411 = vld [vmem:[%s396 + $0x70] sm:$0xff]
        %v412 = vld [vmem:[%s396 + $0x78] sm:$0xff]
        %413 = vmatprep.subr.mxu0 0.0
        %414 = vmatpush1.msra.mxu0 %v412
        %415 = vmatprep.subr.mxu0 0.0
        %416 = vmatpush1.msra.mxu0 %v411
        %417 = vmatprep.subr.mxu0 0.0
        %418 = vmatpush1.msra.mxu0 %v410
        %419 = vmatprep.subr.mxu0 0.0
        %420 = vmatpush1.msra.mxu0 %v409
        %421 = vmatprep.subr.mxu0 0.0
        %422 = vmatpush1.msra.mxu0 %v408
        %423 = vmatprep.subr.mxu0 0.0
        %424 = vmatpush1.msra.mxu0 %v407
        %425 = vmatprep.subr.mxu0 0.0
        %426 = vmatpush1.msra.mxu0 %v406
        %427 = vmatprep.subr.mxu0 0.0
        %428 = vmatpush1.msra.mxu0 %v405
        %429 = vmatprep.subr.mxu0 0.0
        %430 = vmatpush1.msra.mxu0 %v404
        %431 = vmatprep.subr.mxu0 0.0
        %432 = vmatpush1.msra.mxu0 %v403
        %433 = vmatprep.subr.mxu0 0.0
        %434 = vmatpush1.msra.mxu0 %v402
        %435 = vmatprep.subr.mxu0 0.0
        %436 = vmatpush1.msra.mxu0 %v401
        %437 = vmatprep.subr.mxu0 0.0
        %438 = vmatpush1.msra.mxu0 %v400
        %439 = vmatprep.subr.mxu0 0.0
        %440 = vmatpush1.msra.mxu0 %v399
        %441 = vmatprep.subr.mxu0 0.0
        %442 = vmatpush1.msra.mxu0 %v398
        %443 = vmatprep.subr.mxu0 0.0
        %444 = vmatpush1.msra.mxu0 %v397
        %445 = vmatprep.subr.mxu0 0.0
        %446 = vmatpush2.msra.mxu0 0.0
        %447 = vmatprep.subr.mxu0 0.0
        %448 = vmatpush2.msra.mxu0 0.0
        %449 = vmatprep.subr.mxu0 0.0
        %450 = vmatpush2.msra.mxu0 0.0
        %451 = vmatprep.subr.mxu0 0.0
        %452 = vmatpush2.msra.mxu0 0.0
        %453 = vmatprep.subr.mxu0 0.0
        %454 = vmatpush2.msra.mxu0 0.0
        %455 = vmatprep.subr.mxu0 0.0
        %456 = vmatpush2.msra.mxu0 0.0
        %457 = vmatprep.subr.mxu0 0.0
        %458 = vmatpush2.msra.mxu0 0.0
        %459 = vmatprep.subr.mxu0 0.0
        %460 = vmatpush2.msra.mxu0 0.0
        %461 = vmatprep.subr.mxu0 0.0
        %462 = vmatpush2.msra.mxu0 0.0
        %463 = vmatprep.subr.mxu0 0.0
        %464 = vmatpush2.msra.mxu0 0.0
        %465 = vmatprep.subr.mxu0 0.0
        %466 = vmatpush2.msra.mxu0 0.0
        %467 = vmatprep.subr.mxu0 0.0
        %468 = vmatpush2.msra.mxu0 0.0
        %469 = vmatprep.subr.mxu0 0.0
        %470 = vmatpush2.msra.mxu0 0.0
        %471 = vmatprep.subr.mxu0 0.0
        %472 = vmatpush2.msra.mxu0 0.0
        %473 = vmatprep.subr.mxu0 0.0
        %474 = vmatpush2.msra.mxu0 0.0
        %475 = vmatprep.subr.mxu0 0.0
        %476 = vmatpush2.msra.mxu0 0.0
        %477 = vmatprep.mubr.f32.mxu0 0.0
        %478 = vmatmul.mubr.f32.gmra.mxu0 %v306
        %v479 = vpop.f32.mrf.mxu0
        %v480 = vadd.f32 0.0, %v479
        %v481 = vpop.f32.mrf.mxu0
        %482 = vmatprep.mubr.f32.mxu0 0.0
        %483 = vmatmul.mubr.f32.gmra.mxu0 %v307
        %v484 = vpop.f32.mrf.mxu0
        %v485 = vadd.f32 0.0, %v484
        %v486 = vpop.f32.mrf.mxu0
        %487 = vmatprep.mubr.f32.mxu0 0.0
        %488 = vmatmul.mubr.f32.gmra.mxu0 %v308
        %v489 = vpop.f32.mrf.mxu0
        %v490 = vadd.f32 0.0, %v489
        %v491 = vpop.f32.mrf.mxu0
        %492 = vmatprep.mubr.f32.mxu0 0.0
        %493 = vmatmul.mubr.f32.gmra.mxu0 %v309
        %v494 = vpop.f32.mrf.mxu0
        %v495 = vadd.f32 0.0, %v494
        %v496 = vpop.f32.mrf.mxu0
        %497 = vmatprep.mubr.f32.mxu0 0.0
        %498 = vmatmul.mubr.f32.gmra.mxu0 %v310
        %v499 = vpop.f32.mrf.mxu0
        %v500 = vadd.f32 0.0, %v499
        %v501 = vpop.f32.mrf.mxu0
        %502 = vmatprep.mubr.f32.mxu0 0.0
        %503 = vmatmul.mubr.f32.gmra.mxu0 %v311
        %v504 = vpop.f32.mrf.mxu0
        %v505 = vadd.f32 0.0, %v504
        %v506 = vpop.f32.mrf.mxu0
        %507 = vmatprep.mubr.f32.mxu0 0.0
        %508 = vmatmul.mubr.f32.gmra.mxu0 %v312
        %v509 = vpop.f32.mrf.mxu0
        %v510 = vadd.f32 0.0, %v509
        %v511 = vpop.f32.mrf.mxu0
        %512 = vmatprep.mubr.f32.mxu0 0.0
        %513 = vmatmul.mubr.f32.gmra.mxu0 %v313
        %v514 = vpop.f32.mrf.mxu0
        %v515 = vadd.f32 0.0, %v514
        %v516 = vpop.f32.mrf.mxu0
        %517 = vmatprep.mubr.f32.mxu0 0.0
        %518 = vmatmul.mubr.f32.gmra.mxu0 %v314
        %v519 = vpop.f32.mrf.mxu0
        %v520 = vadd.f32 0.0, %v519
        %v521 = vpop.f32.mrf.mxu0
        %522 = vdwg.mxu0
        %523 = vmatprep.subr.mxu0 0.0
        %524 = vmatpush1.msra.mxu0 %v395
        %525 = vmatprep.subr.mxu0 0.0
        %526 = vmatpush1.msra.mxu0 %v394
        %527 = vmatprep.subr.mxu0 0.0
        %528 = vmatpush1.msra.mxu0 %v393
        %529 = vmatprep.subr.mxu0 0.0
        %530 = vmatpush1.msra.mxu0 %v392
        %531 = vmatprep.subr.mxu0 0.0
        %532 = vmatpush1.msra.mxu0 %v391
        %533 = vmatprep.subr.mxu0 0.0
        %534 = vmatpush1.msra.mxu0 %v390
        %535 = vmatprep.subr.mxu0 0.0
        %536 = vmatpush1.msra.mxu0 %v389
        %537 = vmatprep.subr.mxu0 0.0
        %538 = vmatpush1.msra.mxu0 %v388
        %539 = vmatprep.subr.mxu0 0.0
        %540 = vmatpush1.msra.mxu0 %v387
        %541 = vmatprep.subr.mxu0 0.0
        %542 = vmatpush1.msra.mxu0 %v386
        %543 = vmatprep.subr.mxu0 0.0
        %544 = vmatpush1.msra.mxu0 %v385
        %545 = vmatprep.subr.mxu0 0.0
        %546 = vmatpush1.msra.mxu0 %v384
        %547 = vmatprep.subr.mxu0 0.0
        %548 = vmatpush1.msra.mxu0 %v383
        %549 = vmatprep.subr.mxu0 0.0
        %550 = vmatpush1.msra.mxu0 %v382
        %551 = vmatprep.subr.mxu0 0.0
        %552 = vmatpush1.msra.mxu0 %v381
        %553 = vmatprep.subr.mxu0 0.0
        %554 = vmatpush1.msra.mxu0 %v380
        %555 = vmatprep.subr.mxu0 0.0
        %556 = vmatpush2.msra.mxu0 0.0
        %557 = vmatprep.subr.mxu0 0.0
        %558 = vmatpush2.msra.mxu0 0.0
        %559 = vmatprep.subr.mxu0 0.0
        %560 = vmatpush2.msra.mxu0 0.0
        %561 = vmatprep.subr.mxu0 0.0
        %562 = vmatpush2.msra.mxu0 0.0
        %563 = vmatprep.subr.mxu0 0.0
        %564 = vmatpush2.msra.mxu0 0.0
        %565 = vmatprep.subr.mxu0 0.0
        %566 = vmatpush2.msra.mxu0 0.0
        %567 = vmatprep.subr.mxu0 0.0
        %568 = vmatpush2.msra.mxu0 0.0
        %569 = vmatprep.subr.mxu0 0.0
        %570 = vmatpush2.msra.mxu0 0.0
        %571 = vmatprep.subr.mxu0 0.0
        %572 = vmatpush2.msra.mxu0 0.0
        %573 = vmatprep.subr.mxu0 0.0
        %574 = vmatpush2.msra.mxu0 0.0
        %575 = vmatprep.subr.mxu0 0.0
        %576 = vmatpush2.msra.mxu0 0.0
        %577 = vmatprep.subr.mxu0 0.0
        %578 = vmatpush2.msra.mxu0 0.0
        %579 = vmatprep.subr.mxu0 0.0
        %580 = vmatpush2.msra.mxu0 0.0
        %581 = vmatprep.subr.mxu0 0.0
        %582 = vmatpush2.msra.mxu0 0.0
        %583 = vmatprep.subr.mxu0 0.0
        %584 = vmatpush2.msra.mxu0 0.0
        %585 = vmatprep.subr.mxu0 0.0
        %586 = vmatpush2.msra.mxu0 0.0
        %587 = vmatprep.mubr.f32.mxu0 0.0
        %588 = vmatmul.mubr.f32.gmra.mxu0 %v351
        %v589 = vpop.f32.mrf.mxu0
        %v590 = vadd.f32 %v480, %v589
        %v591 = vpop.f32.mrf.mxu0
        %592 = vmatprep.mubr.f32.mxu0 0.0
        %593 = vmatmul.mubr.f32.gmra.mxu0 %v327
        %v594 = vpop.f32.mrf.mxu0
        %v595 = vadd.f32 %v485, %v594
        %v596 = vpop.f32.mrf.mxu0
        %597 = vmatprep.mubr.f32.mxu0 0.0
        %598 = vmatmul.mubr.f32.gmra.mxu0 %v329
        %v599 = vpop.f32.mrf.mxu0
        %v600 = vadd.f32 %v490, %v599
        %v601 = vpop.f32.mrf.mxu0
        %602 = vmatprep.mubr.f32.mxu0 0.0
        %603 = vmatmul.mubr.f32.gmra.mxu0 %v331
        %v604 = vpop.f32.mrf.mxu0
        %v605 = vadd.f32 %v495, %v604
        %v606 = vpop.f32.mrf.mxu0
        %607 = vmatprep.mubr.f32.mxu0 0.0
        %608 = vmatmul.mubr.f32.gmra.mxu0 %v333
        %v609 = vpop.f32.mrf.mxu0
        %v610 = vadd.f32 %v500, %v609
        %v611 = vpop.f32.mrf.mxu0
        %612 = vmatprep.mubr.f32.mxu0 0.0
        %613 = vmatmul.mubr.f32.gmra.mxu0 %v335
        %v614 = vpop.f32.mrf.mxu0
        %v615 = vadd.f32 %v505, %v614
        %v616 = vpop.f32.mrf.mxu0
        %617 = vmatprep.mubr.f32.mxu0 0.0
        %618 = vmatmul.mubr.f32.gmra.mxu0 %v337
        %v619 = vpop.f32.mrf.mxu0
        %v620 = vadd.f32 %v510, %v619
        %v621 = vpop.f32.mrf.mxu0
        %622 = vmatprep.mubr.f32.mxu0 0.0
        %623 = vmatmul.mubr.f32.gmra.mxu0 %v339
        %v624 = vpop.f32.mrf.mxu0
        %v625 = vadd.f32 %v515, %v624
        %v626 = vpop.f32.mrf.mxu0
        %627 = vmatprep.mubr.f32.mxu0 0.0
        %628 = vmatmul.mubr.f32.gmra.mxu0 %v341
        %v629 = vpop.f32.mrf.mxu0
        %v630 = vadd.f32 %v520, %v629
        %v631 = vpop.f32.mrf.mxu0
        %632 = vdwg.mxu0
        %s633 = scalar_lea.vmem [#allocation2], 256
        %v634 = vld [vmem:[%s633] sm:$0xff]
        %v635 = vld [vmem:[%s633 + $0x8] sm:$0xff]
        %v636 = vld [vmem:[%s633 + $0x10] sm:$0xff]
        %v637 = vld [vmem:[%s633 + $0x18] sm:$0xff]
        %v638 = vld [vmem:[%s633 + $0x20] sm:$0xff]
        %v639 = vld [vmem:[%s633 + $0x28] sm:$0xff]
        %v640 = vld [vmem:[%s633 + $0x30] sm:$0xff]
        %v641 = vld [vmem:[%s633 + $0x38] sm:$0xff]
        %v642 = vld [vmem:[%s633 + $0x40] sm:$0xff]
        %v643 = vld [vmem:[%s633 + $0x48] sm:$0xff]
        %v644 = vld [vmem:[%s633 + $0x50] sm:$0xff]
        %v645 = vld [vmem:[%s633 + $0x58] sm:$0xff]
        %v646 = vld [vmem:[%s633 + $0x60] sm:$0xff]
        %v647 = vld [vmem:[%s633 + $0x68] sm:$0xff]
        %v648 = vld [vmem:[%s633 + $0x70] sm:$0xff]
        %v649 = vld [vmem:[%s633 + $0x78] sm:$0xff]
        %650 = vmatprep.subr.mxu0 0.0
        %651 = vmatpush1.msra.mxu0 %v649
        %652 = vmatprep.subr.mxu0 0.0
        %653 = vmatpush1.msra.mxu0 %v648
        %654 = vmatprep.subr.mxu0 0.0
        %655 = vmatpush1.msra.mxu0 %v647
        %656 = vmatprep.subr.mxu0 0.0
        %657 = vmatpush1.msra.mxu0 %v646
        %658 = vmatprep.subr.mxu0 0.0
        %659 = vmatpush1.msra.mxu0 %v645
        %660 = vmatprep.subr.mxu0 0.0
        %661 = vmatpush1.msra.mxu0 %v644
        %662 = vmatprep.subr.mxu0 0.0
        %663 = vmatpush1.msra.mxu0 %v643
        %664 = vmatprep.subr.mxu0 0.0
        %665 = vmatpush1.msra.mxu0 %v642
        %666 = vmatprep.subr.mxu0 0.0
        %667 = vmatpush1.msra.mxu0 %v641
        %668 = vmatprep.subr.mxu0 0.0
        %669 = vmatpush1.msra.mxu0 %v640
        %670 = vmatprep.subr.mxu0 0.0
        %671 = vmatpush1.msra.mxu0 %v639
        %672 = vmatprep.subr.mxu0 0.0
        %673 = vmatpush1.msra.mxu0 %v638
        %674 = vmatprep.subr.mxu0 0.0
        %675 = vmatpush1.msra.mxu0 %v637
        %676 = vmatprep.subr.mxu0 0.0
        %677 = vmatpush1.msra.mxu0 %v636
        %678 = vmatprep.subr.mxu0 0.0
        %679 = vmatpush1.msra.mxu0 %v635
        %680 = vmatprep.subr.mxu0 0.0
        %681 = vmatpush1.msra.mxu0 %v634
        %682 = vmatprep.subr.mxu0 0.0
        %683 = vmatpush2.msra.mxu0 0.0
        %684 = vmatprep.subr.mxu0 0.0
        %685 = vmatpush2.msra.mxu0 0.0
        %686 = vmatprep.subr.mxu0 0.0
        %687 = vmatpush2.msra.mxu0 0.0
        %688 = vmatprep.subr.mxu0 0.0
        %689 = vmatpush2.msra.mxu0 0.0
        %690 = vmatprep.subr.mxu0 0.0
        %691 = vmatpush2.msra.mxu0 0.0
        %692 = vmatprep.subr.mxu0 0.0
        %693 = vmatpush2.msra.mxu0 0.0
        %694 = vmatprep.subr.mxu0 0.0
        %695 = vmatpush2.msra.mxu0 0.0
        %696 = vmatprep.subr.mxu0 0.0
        %697 = vmatpush2.msra.mxu0 0.0
        %698 = vmatprep.subr.mxu0 0.0
        %699 = vmatpush2.msra.mxu0 0.0
        %700 = vmatprep.subr.mxu0 0.0
        %701 = vmatpush2.msra.mxu0 0.0
        %702 = vmatprep.subr.mxu0 0.0
        %703 = vmatpush2.msra.mxu0 0.0
        %704 = vmatprep.subr.mxu0 0.0
        %705 = vmatpush2.msra.mxu0 0.0
        %706 = vmatprep.subr.mxu0 0.0
        %707 = vmatpush2.msra.mxu0 0.0
        %708 = vmatprep.subr.mxu0 0.0
        %709 = vmatpush2.msra.mxu0 0.0
        %710 = vmatprep.subr.mxu0 0.0
        %711 = vmatpush2.msra.mxu0 0.0
        %712 = vmatprep.subr.mxu0 0.0
        %713 = vmatpush2.msra.mxu0 0.0
        %714 = vmatprep.mubr.f32.mxu0 0.0
        %715 = vmatmul.mubr.f32.gmra.mxu0 %v355
        %v716 = vpop.f32.mrf.mxu0
        %v717 = vadd.f32 0.0, %v716
        %v718 = vpop.f32.mrf.mxu0
        %719 = vmatprep.mubr.f32.mxu0 0.0
        %720 = vmatmul.mubr.f32.gmra.mxu0 %v357
        %v721 = vpop.f32.mrf.mxu0
        %v722 = vadd.f32 0.0, %v721
        %v723 = vpop.f32.mrf.mxu0
        %724 = vmatprep.mubr.f32.mxu0 0.0
        %725 = vmatmul.mubr.f32.gmra.mxu0 %v359
        %v726 = vpop.f32.mrf.mxu0
        %v727 = vadd.f32 0.0, %v726
        %v728 = vpop.f32.mrf.mxu0
        %729 = vmatprep.mubr.f32.mxu0 0.0
        %730 = vmatmul.mubr.f32.gmra.mxu0 %v361
        %v731 = vpop.f32.mrf.mxu0
        %v732 = vadd.f32 0.0, %v731
        %v733 = vpop.f32.mrf.mxu0
        %734 = vmatprep.mubr.f32.mxu0 0.0
        %735 = vmatmul.mubr.f32.gmra.mxu0 %v363
        %v736 = vpop.f32.mrf.mxu0
        %v737 = vadd.f32 0.0, %v736
        %v738 = vpop.f32.mrf.mxu0
        %739 = vmatprep.mubr.f32.mxu0 0.0
        %740 = vmatmul.mubr.f32.gmra.mxu0 %v365
        %v741 = vpop.f32.mrf.mxu0
        %v742 = vadd.f32 0.0, %v741
        %v743 = vpop.f32.mrf.mxu0
        %744 = vmatprep.mubr.f32.mxu0 0.0
        %745 = vmatmul.mubr.f32.gmra.mxu0 %v367
        %v746 = vpop.f32.mrf.mxu0
        %v747 = vadd.f32 0.0, %v746
        %v748 = vpop.f32.mrf.mxu0
        %749 = vmatprep.mubr.f32.mxu0 0.0
        %750 = vmatmul.mubr.f32.gmra.mxu0 %v369
        %v751 = vpop.f32.mrf.mxu0
        %v752 = vadd.f32 0.0, %v751
        %v753 = vpop.f32.mrf.mxu0
        %754 = vmatprep.mubr.f32.mxu0 0.0
        %755 = vmatmul.mubr.f32.gmra.mxu0 %v379
        %v756 = vpop.f32.mrf.mxu0
        %v757 = vadd.f32 0.0, %v756
        %v758 = vpop.f32.mrf.mxu0
        %759 = vdwg.mxu0
        %v760 = vadd.f32 %v590, %v717
        %v761 = vadd.f32 %v595, %v722
        %v762 = vadd.f32 %v600, %v727
        %v763 = vadd.f32 %v605, %v732
        %v764 = vadd.f32 %v610, %v737
        %v765 = vadd.f32 %v615, %v742
        %v766 = vadd.f32 %v620, %v747
        %v767 = vadd.f32 %v625, %v752
        %v768 = vadd.f32 %v630, %v757
        %v769 = vld [vmem:[#allocation5] sm:$0x1]
        %v770 = vlaneseq
        %v771 = vshrl.u32 %v770, 7
        %v772 = vsub.s32 0, %v771
        %v773 = vrot.slane %v769, %v772
        %v774 = vadd.f32 %v760, %v773
        %v775 = vadd.f32 %v761, %v773
        %v776 = vadd.f32 %v762, %v773
        %v777 = vadd.f32 %v763, %v773
        %v778 = vadd.f32 %v764, %v773
        %v779 = vadd.f32 %v765, %v773
        %v780 = vadd.f32 %v766, %v773
        %v781 = vadd.f32 %v767, %v773
        %v782 = vadd.f32 %v768, %v773
        %vm783 = vcmp.gt.f32.partialorder %v774, 0.0
        %vm784 = vcmp.gt.f32.partialorder %v775, 0.0
        %vm785 = vcmp.gt.f32.partialorder %v776, 0.0
        %vm786 = vcmp.gt.f32.partialorder %v777, 0.0
        %vm787 = vcmp.gt.f32.partialorder %v778, 0.0
        %vm788 = vcmp.gt.f32.partialorder %v779, 0.0
        %vm789 = vcmp.gt.f32.partialorder %v780, 0.0
        %vm790 = vcmp.gt.f32.partialorder %v781, 0.0
        %vm791 = vcmp.gt.f32.partialorder %v782, 0.0
        %v792 = vmul.f32 %v774, 0.01
        %v793 = vmul.f32 %v775, 0.01
        %v794 = vmul.f32 %v776, 0.01
        %v795 = vmul.f32 %v777, 0.01
        %v796 = vmul.f32 %v778, 0.01
        %v797 = vmul.f32 %v779, 0.01
        %v798 = vmul.f32 %v780, 0.01
        %v799 = vmul.f32 %v781, 0.01
        %v800 = vmul.f32 %v782, 0.01
        %v801 = vsel %vm783, %v774, %v792
        %v802 = vsel %vm784, %v775, %v793
        %v803 = vsel %vm785, %v776, %v794
        %v804 = vsel %vm786, %v777, %v795
        %v805 = vsel %vm787, %v778, %v796
        %v806 = vsel %vm788, %v779, %v797
        %v807 = vsel %vm789, %v780, %v798
        %v808 = vsel %vm790, %v781, %v799
        %v809 = vsel %vm791, %v782, %v800
        %v810 = vsel %vm297, %v801, 0.0
        %v811 = vsel %vm298, %v802, 0.0
        %v812 = vsel %vm299, %v803, 0.0
        %v813 = vsel %vm300, %v804, 0.0
        %v814 = vsel %vm301, %v805, 0.0
        %v815 = vsel %vm302, %v806, 0.0
        %v816 = vsel %vm303, %v807, 0.0
        %v817 = vsel %vm304, %v808, 0.0
        %v818 = vsel %vm305, %v809, 0.0
        %v828 = vrot.slane %v810, 7
        %v829 = vrot.slane %v811, 7
        %v830 = vsel %vm324, %v828, %v829
        %v831 = vrot.slane %v812, 7
        %v832 = vsel %vm324, %v829, %v831
        %v833 = vrot.slane %v813, 7
        %v834 = vsel %vm324, %v831, %v833
        %v835 = vrot.slane %v814, 7
        %v836 = vsel %vm324, %v833, %v835
        %v837 = vrot.slane %v815, 7
        %v838 = vsel %vm324, %v835, %v837
        %v839 = vrot.slane %v816, 7
        %v840 = vsel %vm324, %v837, %v839
        %v841 = vrot.slane %v817, 7
        %v842 = vsel %vm324, %v839, %v841
        %v843 = vrot.slane %v818, 7
        %v844 = vsel %vm324, %v841, %v843
        %v854 = vsel %vm324, 0.0, %v828
        %v855 = vrot.slane %v810, 1
        %v856 = vrot.slane %v811, 1
        %v857 = vsel %vm352, %v855, %v856
        %v858 = vrot.slane %v812, 1
        %v859 = vsel %vm352, %v856, %v858
        %v860 = vrot.slane %v813, 1
        %v861 = vsel %vm352, %v858, %v860
        %v862 = vrot.slane %v814, 1
        %v863 = vsel %vm352, %v860, %v862
        %v864 = vrot.slane %v815, 1
        %v865 = vsel %vm352, %v862, %v864
        %v866 = vrot.slane %v816, 1
        %v867 = vsel %vm352, %v864, %v866
        %v868 = vrot.slane %v817, 1
        %v869 = vsel %vm352, %v866, %v868
        %v870 = vrot.slane %v818, 1
        %v871 = vsel %vm352, %v868, %v870
        %v881 = vsel %vm352, %v870, 0.0
        %s882 = scalar_lea.vmem [#allocation2], 384
        %v883 = vld [vmem:[%s882] sm:$0xff]
        %v884 = vld [vmem:[%s882 + $0x8] sm:$0xff]
        %v885 = vld [vmem:[%s882 + $0x10] sm:$0xff]
        %v886 = vld [vmem:[%s882 + $0x18] sm:$0xff]
        %v887 = vld [vmem:[%s882 + $0x20] sm:$0xff]
        %v888 = vld [vmem:[%s882 + $0x28] sm:$0xff]
        %v889 = vld [vmem:[%s882 + $0x30] sm:$0xff]
        %v890 = vld [vmem:[%s882 + $0x38] sm:$0xff]
        %v891 = vld [vmem:[%s882 + $0x40] sm:$0xff]
        %v892 = vld [vmem:[%s882 + $0x48] sm:$0xff]
        %v893 = vld [vmem:[%s882 + $0x50] sm:$0xff]
        %v894 = vld [vmem:[%s882 + $0x58] sm:$0xff]
        %v895 = vld [vmem:[%s882 + $0x60] sm:$0xff]
        %v896 = vld [vmem:[%s882 + $0x68] sm:$0xff]
        %v897 = vld [vmem:[%s882 + $0x70] sm:$0xff]
        %v898 = vld [vmem:[%s882 + $0x78] sm:$0xff]
        %s899 = scalar_lea.vmem [#allocation2], 512
        %v900 = vld [vmem:[%s899] sm:$0xff]
        %v901 = vld [vmem:[%s899 + $0x8] sm:$0xff]
        %v902 = vld [vmem:[%s899 + $0x10] sm:$0xff]
        %v903 = vld [vmem:[%s899 + $0x18] sm:$0xff]
        %v904 = vld [vmem:[%s899 + $0x20] sm:$0xff]
        %v905 = vld [vmem:[%s899 + $0x28] sm:$0xff]
        %v906 = vld [vmem:[%s899 + $0x30] sm:$0xff]
        %v907 = vld [vmem:[%s899 + $0x38] sm:$0xff]
        %v908 = vld [vmem:[%s899 + $0x40] sm:$0xff]
        %v909 = vld [vmem:[%s899 + $0x48] sm:$0xff]
        %v910 = vld [vmem:[%s899 + $0x50] sm:$0xff]
        %v911 = vld [vmem:[%s899 + $0x58] sm:$0xff]
        %v912 = vld [vmem:[%s899 + $0x60] sm:$0xff]
        %v913 = vld [vmem:[%s899 + $0x68] sm:$0xff]
        %v914 = vld [vmem:[%s899 + $0x70] sm:$0xff]
        %v915 = vld [vmem:[%s899 + $0x78] sm:$0xff]
        %916 = vmatprep.subr.mxu0 0.0
        %917 = vmatpush1.msra.mxu0 %v915
        %918 = vmatprep.subr.mxu0 0.0
        %919 = vmatpush1.msra.mxu0 %v914
        %920 = vmatprep.subr.mxu0 0.0
        %921 = vmatpush1.msra.mxu0 %v913
        %922 = vmatprep.subr.mxu0 0.0
        %923 = vmatpush1.msra.mxu0 %v912
        %924 = vmatprep.subr.mxu0 0.0
        %925 = vmatpush1.msra.mxu0 %v911
        %926 = vmatprep.subr.mxu0 0.0
        %927 = vmatpush1.msra.mxu0 %v910
        %928 = vmatprep.subr.mxu0 0.0
        %929 = vmatpush1.msra.mxu0 %v909
        %930 = vmatprep.subr.mxu0 0.0
        %931 = vmatpush1.msra.mxu0 %v908
        %932 = vmatprep.subr.mxu0 0.0
        %933 = vmatpush1.msra.mxu0 %v907
        %934 = vmatprep.subr.mxu0 0.0
        %935 = vmatpush1.msra.mxu0 %v906
        %936 = vmatprep.subr.mxu0 0.0
        %937 = vmatpush1.msra.mxu0 %v905
        %938 = vmatprep.subr.mxu0 0.0
        %939 = vmatpush1.msra.mxu0 %v904
        %940 = vmatprep.subr.mxu0 0.0
        %941 = vmatpush1.msra.mxu0 %v903
        %942 = vmatprep.subr.mxu0 0.0
        %943 = vmatpush1.msra.mxu0 %v902
        %944 = vmatprep.subr.mxu0 0.0
        %945 = vmatpush1.msra.mxu0 %v901
        %946 = vmatprep.subr.mxu0 0.0
        %947 = vmatpush1.msra.mxu0 %v900
        %948 = vmatprep.subr.mxu0 0.0
        %949 = vmatpush2.msra.mxu0 0.0
        %950 = vmatprep.subr.mxu0 0.0
        %951 = vmatpush2.msra.mxu0 0.0
        %952 = vmatprep.subr.mxu0 0.0
        %953 = vmatpush2.msra.mxu0 0.0
        %954 = vmatprep.subr.mxu0 0.0
        %955 = vmatpush2.msra.mxu0 0.0
        %956 = vmatprep.subr.mxu0 0.0
        %957 = vmatpush2.msra.mxu0 0.0
        %958 = vmatprep.subr.mxu0 0.0
        %959 = vmatpush2.msra.mxu0 0.0
        %960 = vmatprep.subr.mxu0 0.0
        %961 = vmatpush2.msra.mxu0 0.0
        %962 = vmatprep.subr.mxu0 0.0
        %963 = vmatpush2.msra.mxu0 0.0
        %964 = vmatprep.subr.mxu0 0.0
        %965 = vmatpush2.msra.mxu0 0.0
        %966 = vmatprep.subr.mxu0 0.0
        %967 = vmatpush2.msra.mxu0 0.0
        %968 = vmatprep.subr.mxu0 0.0
        %969 = vmatpush2.msra.mxu0 0.0
        %970 = vmatprep.subr.mxu0 0.0
        %971 = vmatpush2.msra.mxu0 0.0
        %972 = vmatprep.subr.mxu0 0.0
        %973 = vmatpush2.msra.mxu0 0.0
        %974 = vmatprep.subr.mxu0 0.0
        %975 = vmatpush2.msra.mxu0 0.0
        %976 = vmatprep.subr.mxu0 0.0
        %977 = vmatpush2.msra.mxu0 0.0
        %978 = vmatprep.subr.mxu0 0.0
        %979 = vmatpush2.msra.mxu0 0.0
        %980 = vmatprep.mubr.f32.mxu0 0.0
        %981 = vmatmul.mubr.f32.gmra.mxu0 %v810
        %v982 = vpop.f32.mrf.mxu0
        %v983 = vadd.f32 0.0, %v982
        %v984 = vpop.f32.mrf.mxu0
        %985 = vmatprep.mubr.f32.mxu0 0.0
        %986 = vmatmul.mubr.f32.gmra.mxu0 %v811
        %v987 = vpop.f32.mrf.mxu0
        %v988 = vadd.f32 0.0, %v987
        %v989 = vpop.f32.mrf.mxu0
        %990 = vmatprep.mubr.f32.mxu0 0.0
        %991 = vmatmul.mubr.f32.gmra.mxu0 %v812
        %v992 = vpop.f32.mrf.mxu0
        %v993 = vadd.f32 0.0, %v992
        %v994 = vpop.f32.mrf.mxu0
        %995 = vmatprep.mubr.f32.mxu0 0.0
        %996 = vmatmul.mubr.f32.gmra.mxu0 %v813
        %v997 = vpop.f32.mrf.mxu0
        %v998 = vadd.f32 0.0, %v997
        %v999 = vpop.f32.mrf.mxu0
        %1000 = vmatprep.mubr.f32.mxu0 0.0
        %1001 = vmatmul.mubr.f32.gmra.mxu0 %v814
        %v1002 = vpop.f32.mrf.mxu0
        %v1003 = vadd.f32 0.0, %v1002
        %v1004 = vpop.f32.mrf.mxu0
        %1005 = vmatprep.mubr.f32.mxu0 0.0
        %1006 = vmatmul.mubr.f32.gmra.mxu0 %v815
        %v1007 = vpop.f32.mrf.mxu0
        %v1008 = vadd.f32 0.0, %v1007
        %v1009 = vpop.f32.mrf.mxu0
        %1010 = vmatprep.mubr.f32.mxu0 0.0
        %1011 = vmatmul.mubr.f32.gmra.mxu0 %v816
        %v1012 = vpop.f32.mrf.mxu0
        %v1013 = vadd.f32 0.0, %v1012
        %v1014 = vpop.f32.mrf.mxu0
        %1015 = vmatprep.mubr.f32.mxu0 0.0
        %1016 = vmatmul.mubr.f32.gmra.mxu0 %v817
        %v1017 = vpop.f32.mrf.mxu0
        %v1018 = vadd.f32 0.0, %v1017
        %v1019 = vpop.f32.mrf.mxu0
        %1020 = vmatprep.mubr.f32.mxu0 0.0
        %1021 = vmatmul.mubr.f32.gmra.mxu0 %v818
        %v1022 = vpop.f32.mrf.mxu0
        %v1023 = vadd.f32 0.0, %v1022
        %v1024 = vpop.f32.mrf.mxu0
        %1025 = vdwg.mxu0
        %1026 = vmatprep.subr.mxu0 0.0
        %1027 = vmatpush1.msra.mxu0 %v898
        %1028 = vmatprep.subr.mxu0 0.0
        %1029 = vmatpush1.msra.mxu0 %v897
        %1030 = vmatprep.subr.mxu0 0.0
        %1031 = vmatpush1.msra.mxu0 %v896
        %1032 = vmatprep.subr.mxu0 0.0
        %1033 = vmatpush1.msra.mxu0 %v895
        %1034 = vmatprep.subr.mxu0 0.0
        %1035 = vmatpush1.msra.mxu0 %v894
        %1036 = vmatprep.subr.mxu0 0.0
        %1037 = vmatpush1.msra.mxu0 %v893
        %1038 = vmatprep.subr.mxu0 0.0
        %1039 = vmatpush1.msra.mxu0 %v892
        %1040 = vmatprep.subr.mxu0 0.0
        %1041 = vmatpush1.msra.mxu0 %v891
        %1042 = vmatprep.subr.mxu0 0.0
        %1043 = vmatpush1.msra.mxu0 %v890
        %1044 = vmatprep.subr.mxu0 0.0
        %1045 = vmatpush1.msra.mxu0 %v889
        %1046 = vmatprep.subr.mxu0 0.0
        %1047 = vmatpush1.msra.mxu0 %v888
        %1048 = vmatprep.subr.mxu0 0.0
        %1049 = vmatpush1.msra.mxu0 %v887
        %1050 = vmatprep.subr.mxu0 0.0
        %1051 = vmatpush1.msra.mxu0 %v886
        %1052 = vmatprep.subr.mxu0 0.0
        %1053 = vmatpush1.msra.mxu0 %v885
        %1054 = vmatprep.subr.mxu0 0.0
        %1055 = vmatpush1.msra.mxu0 %v884
        %1056 = vmatprep.subr.mxu0 0.0
        %1057 = vmatpush1.msra.mxu0 %v883
        %1058 = vmatprep.subr.mxu0 0.0
        %1059 = vmatpush2.msra.mxu0 0.0
        %1060 = vmatprep.subr.mxu0 0.0
        %1061 = vmatpush2.msra.mxu0 0.0
        %1062 = vmatprep.subr.mxu0 0.0
        %1063 = vmatpush2.msra.mxu0 0.0
        %1064 = vmatprep.subr.mxu0 0.0
        %1065 = vmatpush2.msra.mxu0 0.0
        %1066 = vmatprep.subr.mxu0 0.0
        %1067 = vmatpush2.msra.mxu0 0.0
        %1068 = vmatprep.subr.mxu0 0.0
        %1069 = vmatpush2.msra.mxu0 0.0
        %1070 = vmatprep.subr.mxu0 0.0
        %1071 = vmatpush2.msra.mxu0 0.0
        %1072 = vmatprep.subr.mxu0 0.0
        %1073 = vmatpush2.msra.mxu0 0.0
        %1074 = vmatprep.subr.mxu0 0.0
        %1075 = vmatpush2.msra.mxu0 0.0
        %1076 = vmatprep.subr.mxu0 0.0
        %1077 = vmatpush2.msra.mxu0 0.0
        %1078 = vmatprep.subr.mxu0 0.0
        %1079 = vmatpush2.msra.mxu0 0.0
        %1080 = vmatprep.subr.mxu0 0.0
        %1081 = vmatpush2.msra.mxu0 0.0
        %1082 = vmatprep.subr.mxu0 0.0
        %1083 = vmatpush2.msra.mxu0 0.0
        %1084 = vmatprep.subr.mxu0 0.0
        %1085 = vmatpush2.msra.mxu0 0.0
        %1086 = vmatprep.subr.mxu0 0.0
        %1087 = vmatpush2.msra.mxu0 0.0
        %1088 = vmatprep.subr.mxu0 0.0
        %1089 = vmatpush2.msra.mxu0 0.0
        %1090 = vmatprep.mubr.f32.mxu0 0.0
        %1091 = vmatmul.mubr.f32.gmra.mxu0 %v854
        %v1092 = vpop.f32.mrf.mxu0
        %v1093 = vadd.f32 %v983, %v1092
        %v1094 = vpop.f32.mrf.mxu0
        %1095 = vmatprep.mubr.f32.mxu0 0.0
        %1096 = vmatmul.mubr.f32.gmra.mxu0 %v830
        %v1097 = vpop.f32.mrf.mxu0
        %v1098 = vadd.f32 %v988, %v1097
        %v1099 = vpop.f32.mrf.mxu0
        %1100 = vmatprep.mubr.f32.mxu0 0.0
        %1101 = vmatmul.mubr.f32.gmra.mxu0 %v832
        %v1102 = vpop.f32.mrf.mxu0
        %v1103 = vadd.f32 %v993, %v1102
        %v1104 = vpop.f32.mrf.mxu0
        %1105 = vmatprep.mubr.f32.mxu0 0.0
        %1106 = vmatmul.mubr.f32.gmra.mxu0 %v834
        %v1107 = vpop.f32.mrf.mxu0
        %v1108 = vadd.f32 %v998, %v1107
        %v1109 = vpop.f32.mrf.mxu0
        %1110 = vmatprep.mubr.f32.mxu0 0.0
        %1111 = vmatmul.mubr.f32.gmra.mxu0 %v836
        %v1112 = vpop.f32.mrf.mxu0
        %v1113 = vadd.f32 %v1003, %v1112
        %v1114 = vpop.f32.mrf.mxu0
        %1115 = vmatprep.mubr.f32.mxu0 0.0
        %1116 = vmatmul.mubr.f32.gmra.mxu0 %v838
        %v1117 = vpop.f32.mrf.mxu0
        %v1118 = vadd.f32 %v1008, %v1117
        %v1119 = vpop.f32.mrf.mxu0
        %1120 = vmatprep.mubr.f32.mxu0 0.0
        %1121 = vmatmul.mubr.f32.gmra.mxu0 %v840
        %v1122 = vpop.f32.mrf.mxu0
        %v1123 = vadd.f32 %v1013, %v1122
        %v1124 = vpop.f32.mrf.mxu0
        %1125 = vmatprep.mubr.f32.mxu0 0.0
        %1126 = vmatmul.mubr.f32.gmra.mxu0 %v842
        %v1127 = vpop.f32.mrf.mxu0
        %v1128 = vadd.f32 %v1018, %v1127
        %v1129 = vpop.f32.mrf.mxu0
        %1130 = vmatprep.mubr.f32.mxu0 0.0
        %1131 = vmatmul.mubr.f32.gmra.mxu0 %v844
        %v1132 = vpop.f32.mrf.mxu0
        %v1133 = vadd.f32 %v1023, %v1132
        %v1134 = vpop.f32.mrf.mxu0
        %1135 = vdwg.mxu0
        %s1136 = scalar_lea.vmem [#allocation2], 640
        %v1137 = vld [vmem:[%s1136] sm:$0xff]
        %v1138 = vld [vmem:[%s1136 + $0x8] sm:$0xff]
        %v1139 = vld [vmem:[%s1136 + $0x10] sm:$0xff]
        %v1140 = vld [vmem:[%s1136 + $0x18] sm:$0xff]
        %v1141 = vld [vmem:[%s1136 + $0x20] sm:$0xff]
        %v1142 = vld [vmem:[%s1136 + $0x28] sm:$0xff]
        %v1143 = vld [vmem:[%s1136 + $0x30] sm:$0xff]
        %v1144 = vld [vmem:[%s1136 + $0x38] sm:$0xff]
        %v1145 = vld [vmem:[%s1136 + $0x40] sm:$0xff]
        %v1146 = vld [vmem:[%s1136 + $0x48] sm:$0xff]
        %v1147 = vld [vmem:[%s1136 + $0x50] sm:$0xff]
        %v1148 = vld [vmem:[%s1136 + $0x58] sm:$0xff]
        %v1149 = vld [vmem:[%s1136 + $0x60] sm:$0xff]
        %v1150 = vld [vmem:[%s1136 + $0x68] sm:$0xff]
        %v1151 = vld [vmem:[%s1136 + $0x70] sm:$0xff]
        %v1152 = vld [vmem:[%s1136 + $0x78] sm:$0xff]
        %1153 = vmatprep.subr.mxu0 0.0
        %1154 = vmatpush1.msra.mxu0 %v1152
        %1155 = vmatprep.subr.mxu0 0.0
        %1156 = vmatpush1.msra.mxu0 %v1151
        %1157 = vmatprep.subr.mxu0 0.0
        %1158 = vmatpush1.msra.mxu0 %v1150
        %1159 = vmatprep.subr.mxu0 0.0
        %1160 = vmatpush1.msra.mxu0 %v1149
        %1161 = vmatprep.subr.mxu0 0.0
        %1162 = vmatpush1.msra.mxu0 %v1148
        %1163 = vmatprep.subr.mxu0 0.0
        %1164 = vmatpush1.msra.mxu0 %v1147
        %1165 = vmatprep.subr.mxu0 0.0
        %1166 = vmatpush1.msra.mxu0 %v1146
        %1167 = vmatprep.subr.mxu0 0.0
        %1168 = vmatpush1.msra.mxu0 %v1145
        %1169 = vmatprep.subr.mxu0 0.0
        %1170 = vmatpush1.msra.mxu0 %v1144
        %1171 = vmatprep.subr.mxu0 0.0
        %1172 = vmatpush1.msra.mxu0 %v1143
        %1173 = vmatprep.subr.mxu0 0.0
        %1174 = vmatpush1.msra.mxu0 %v1142
        %1175 = vmatprep.subr.mxu0 0.0
        %1176 = vmatpush1.msra.mxu0 %v1141
        %1177 = vmatprep.subr.mxu0 0.0
        %1178 = vmatpush1.msra.mxu0 %v1140
        %1179 = vmatprep.subr.mxu0 0.0
        %1180 = vmatpush1.msra.mxu0 %v1139
        %1181 = vmatprep.subr.mxu0 0.0
        %1182 = vmatpush1.msra.mxu0 %v1138
        %1183 = vmatprep.subr.mxu0 0.0
        %1184 = vmatpush1.msra.mxu0 %v1137
        %1185 = vmatprep.subr.mxu0 0.0
        %1186 = vmatpush2.msra.mxu0 0.0
        %1187 = vmatprep.subr.mxu0 0.0
        %1188 = vmatpush2.msra.mxu0 0.0
        %1189 = vmatprep.subr.mxu0 0.0
        %1190 = vmatpush2.msra.mxu0 0.0
        %1191 = vmatprep.subr.mxu0 0.0
        %1192 = vmatpush2.msra.mxu0 0.0
        %1193 = vmatprep.subr.mxu0 0.0
        %1194 = vmatpush2.msra.mxu0 0.0
        %1195 = vmatprep.subr.mxu0 0.0
        %1196 = vmatpush2.msra.mxu0 0.0
        %1197 = vmatprep.subr.mxu0 0.0
        %1198 = vmatpush2.msra.mxu0 0.0
        %1199 = vmatprep.subr.mxu0 0.0
        %1200 = vmatpush2.msra.mxu0 0.0
        %1201 = vmatprep.subr.mxu0 0.0
        %1202 = vmatpush2.msra.mxu0 0.0
        %1203 = vmatprep.subr.mxu0 0.0
        %1204 = vmatpush2.msra.mxu0 0.0
        %1205 = vmatprep.subr.mxu0 0.0
        %1206 = vmatpush2.msra.mxu0 0.0
        %1207 = vmatprep.subr.mxu0 0.0
        %1208 = vmatpush2.msra.mxu0 0.0
        %1209 = vmatprep.subr.mxu0 0.0
        %1210 = vmatpush2.msra.mxu0 0.0
        %1211 = vmatprep.subr.mxu0 0.0
        %1212 = vmatpush2.msra.mxu0 0.0
        %1213 = vmatprep.subr.mxu0 0.0
        %1214 = vmatpush2.msra.mxu0 0.0
        %1215 = vmatprep.subr.mxu0 0.0
        %1216 = vmatpush2.msra.mxu0 0.0
        %1217 = vmatprep.mubr.f32.mxu0 0.0
        %1218 = vmatmul.mubr.f32.gmra.mxu0 %v857
        %v1219 = vpop.f32.mrf.mxu0
        %v1220 = vadd.f32 0.0, %v1219
        %v1221 = vpop.f32.mrf.mxu0
        %1222 = vmatprep.mubr.f32.mxu0 0.0
        %1223 = vmatmul.mubr.f32.gmra.mxu0 %v859
        %v1224 = vpop.f32.mrf.mxu0
        %v1225 = vadd.f32 0.0, %v1224
        %v1226 = vpop.f32.mrf.mxu0
        %1227 = vmatprep.mubr.f32.mxu0 0.0
        %1228 = vmatmul.mubr.f32.gmra.mxu0 %v861
        %v1229 = vpop.f32.mrf.mxu0
        %v1230 = vadd.f32 0.0, %v1229
        %v1231 = vpop.f32.mrf.mxu0
        %1232 = vmatprep.mubr.f32.mxu0 0.0
        %1233 = vmatmul.mubr.f32.gmra.mxu0 %v863
        %v1234 = vpop.f32.mrf.mxu0
        %v1235 = vadd.f32 0.0, %v1234
        %v1236 = vpop.f32.mrf.mxu0
        %1237 = vmatprep.mubr.f32.mxu0 0.0
        %1238 = vmatmul.mubr.f32.gmra.mxu0 %v865
        %v1239 = vpop.f32.mrf.mxu0
        %v1240 = vadd.f32 0.0, %v1239
        %v1241 = vpop.f32.mrf.mxu0
        %1242 = vmatprep.mubr.f32.mxu0 0.0
        %1243 = vmatmul.mubr.f32.gmra.mxu0 %v867
        %v1244 = vpop.f32.mrf.mxu0
        %v1245 = vadd.f32 0.0, %v1244
        %v1246 = vpop.f32.mrf.mxu0
        %1247 = vmatprep.mubr.f32.mxu0 0.0
        %1248 = vmatmul.mubr.f32.gmra.mxu0 %v869
        %v1249 = vpop.f32.mrf.mxu0
        %v1250 = vadd.f32 0.0, %v1249
        %v1251 = vpop.f32.mrf.mxu0
        %1252 = vmatprep.mubr.f32.mxu0 0.0
        %1253 = vmatmul.mubr.f32.gmra.mxu0 %v871
        %v1254 = vpop.f32.mrf.mxu0
        %v1255 = vadd.f32 0.0, %v1254
        %v1256 = vpop.f32.mrf.mxu0
        %1257 = vmatprep.mubr.f32.mxu0 0.0
        %1258 = vmatmul.mubr.f32.gmra.mxu0 %v881
        %v1259 = vpop.f32.mrf.mxu0
        %v1260 = vadd.f32 0.0, %v1259
        %v1261 = vpop.f32.mrf.mxu0
        %1262 = vdwg.mxu0
        %v1263 = vadd.f32 %v1093, %v1220
        %v1264 = vadd.f32 %v1098, %v1225
        %v1265 = vadd.f32 %v1103, %v1230
        %v1266 = vadd.f32 %v1108, %v1235
        %v1267 = vadd.f32 %v1113, %v1240
        %v1268 = vadd.f32 %v1118, %v1245
        %v1269 = vadd.f32 %v1123, %v1250
        %v1270 = vadd.f32 %v1128, %v1255
        %v1271 = vadd.f32 %v1133, %v1260
        %v1272 = vld [vmem:[#allocation5 + $0x1] sm:$0x1]
        %v1273 = vlaneseq
        %v1274 = vshrl.u32 %v1273, 7
        %v1275 = vsub.s32 0, %v1274
        %v1276 = vrot.slane %v1272, %v1275
        %v1277 = vadd.f32 %v1263, %v1276
        %v1278 = vadd.f32 %v1264, %v1276
        %v1279 = vadd.f32 %v1265, %v1276
        %v1280 = vadd.f32 %v1266, %v1276
        %v1281 = vadd.f32 %v1267, %v1276
        %v1282 = vadd.f32 %v1268, %v1276
        %v1283 = vadd.f32 %v1269, %v1276
        %v1284 = vadd.f32 %v1270, %v1276
        %v1285 = vadd.f32 %v1271, %v1276
        %v1286 = vadd.f32 %v252, %v1277
        %v1287 = vadd.f32 %v253, %v1278
        %v1288 = vadd.f32 %v254, %v1279
        %v1289 = vadd.f32 %v255, %v1280
        %v1290 = vadd.f32 %v256, %v1281
        %v1291 = vadd.f32 %v257, %v1282
        %v1292 = vadd.f32 %v258, %v1283
        %v1293 = vadd.f32 %v259, %v1284
        %v1294 = vadd.f32 %v260, %v1285
        %vm1295 = vcmp.gt.f32.partialorder %v1286, 0.0
        %vm1296 = vcmp.gt.f32.partialorder %v1287, 0.0
        %vm1297 = vcmp.gt.f32.partialorder %v1288, 0.0
        %vm1298 = vcmp.gt.f32.partialorder %v1289, 0.0
        %vm1299 = vcmp.gt.f32.partialorder %v1290, 0.0
        %vm1300 = vcmp.gt.f32.partialorder %v1291, 0.0
        %vm1301 = vcmp.gt.f32.partialorder %v1292, 0.0
        %vm1302 = vcmp.gt.f32.partialorder %v1293, 0.0
        %vm1303 = vcmp.gt.f32.partialorder %v1294, 0.0
        %v1304 = vmul.f32 %v1286, 0.01
        %v1305 = vmul.f32 %v1287, 0.01
        %v1306 = vmul.f32 %v1288, 0.01
        %v1307 = vmul.f32 %v1289, 0.01
        %v1308 = vmul.f32 %v1290, 0.01
        %v1309 = vmul.f32 %v1291, 0.01
        %v1310 = vmul.f32 %v1292, 0.01
        %v1311 = vmul.f32 %v1293, 0.01
        %v1312 = vmul.f32 %v1294, 0.01
        %v1313 = vsel %vm1295, %v1286, %v1304
        %v1314 = vsel %vm1296, %v1287, %v1305
        %v1315 = vsel %vm1297, %v1288, %v1306
        %v1316 = vsel %vm1298, %v1289, %v1307
        %v1317 = vsel %vm1299, %v1290, %v1308
        %v1318 = vsel %vm1300, %v1291, %v1309
        %v1319 = vsel %vm1301, %v1292, %v1310
        %v1320 = vsel %vm1302, %v1293, %v1311
        %v1321 = vsel %vm1303, %v1294, %v1312
        %v1322 = vsel %vm297, %v1313, 0.0
        %v1323 = vsel %vm298, %v1314, 0.0
        %v1324 = vsel %vm299, %v1315, 0.0
        %v1325 = vsel %vm300, %v1316, 0.0
        %v1326 = vsel %vm301, %v1317, 0.0
        %v1327 = vsel %vm302, %v1318, 0.0
        %v1328 = vsel %vm303, %v1319, 0.0
        %v1329 = vsel %vm304, %v1320, 0.0
        %v1330 = vsel %vm305, %v1321, 0.0
        %vm1340 = vcmask 1042432
        %v1341 = vrot.slane %v1322, 5
        %v1342 = vrot.slane %v1323, 5
        %v1343 = vsel %vm1340, %v1341, %v1342
        %v1344 = vrot.slane %v1324, 5
        %v1345 = vsel %vm1340, %v1342, %v1344
        %v1346 = vrot.slane %v1325, 5
        %v1347 = vsel %vm1340, %v1344, %v1346
        %v1348 = vrot.slane %v1326, 5
        %v1349 = vsel %vm1340, %v1346, %v1348
        %v1350 = vrot.slane %v1327, 5
        %v1351 = vsel %vm1340, %v1348, %v1350
        %v1352 = vrot.slane %v1328, 5
        %v1353 = vsel %vm1340, %v1350, %v1352
        %v1354 = vrot.slane %v1329, 5
        %v1355 = vsel %vm1340, %v1352, %v1354
        %v1356 = vrot.slane %v1330, 5
        %v1357 = vsel %vm1340, %v1354, %v1356
        %v1367 = vsel %vm1340, 0.0, %v1341
        %vm1368 = vcmask 1044480
        %v1369 = vrot.slane %v1322, 3
        %v1370 = vrot.slane %v1323, 3
        %v1371 = vsel %vm1368, %v1369, %v1370
        %v1372 = vrot.slane %v1324, 3
        %v1373 = vsel %vm1368, %v1370, %v1372
        %v1374 = vrot.slane %v1325, 3
        %v1375 = vsel %vm1368, %v1372, %v1374
        %v1376 = vrot.slane %v1326, 3
        %v1377 = vsel %vm1368, %v1374, %v1376
        %v1378 = vrot.slane %v1327, 3
        %v1379 = vsel %vm1368, %v1376, %v1378
        %v1380 = vrot.slane %v1328, 3
        %v1381 = vsel %vm1368, %v1378, %v1380
        %v1382 = vrot.slane %v1329, 3
        %v1383 = vsel %vm1368, %v1380, %v1382
        %v1384 = vrot.slane %v1330, 3
        %v1385 = vsel %vm1368, %v1382, %v1384
        %v1395 = vsel %vm1368, %v1384, 0.0
        %s1396 = scalar_lea.vmem [#allocation2], 768
        %v1397 = vld [vmem:[%s1396] sm:$0xff]
        %v1398 = vld [vmem:[%s1396 + $0x8] sm:$0xff]
        %v1399 = vld [vmem:[%s1396 + $0x10] sm:$0xff]
        %v1400 = vld [vmem:[%s1396 + $0x18] sm:$0xff]
        %v1401 = vld [vmem:[%s1396 + $0x20] sm:$0xff]
        %v1402 = vld [vmem:[%s1396 + $0x28] sm:$0xff]
        %v1403 = vld [vmem:[%s1396 + $0x30] sm:$0xff]
        %v1404 = vld [vmem:[%s1396 + $0x38] sm:$0xff]
        %v1405 = vld [vmem:[%s1396 + $0x40] sm:$0xff]
        %v1406 = vld [vmem:[%s1396 + $0x48] sm:$0xff]
        %v1407 = vld [vmem:[%s1396 + $0x50] sm:$0xff]
        %v1408 = vld [vmem:[%s1396 + $0x58] sm:$0xff]
        %v1409 = vld [vmem:[%s1396 + $0x60] sm:$0xff]
        %v1410 = vld [vmem:[%s1396 + $0x68] sm:$0xff]
        %v1411 = vld [vmem:[%s1396 + $0x70] sm:$0xff]
        %v1412 = vld [vmem:[%s1396 + $0x78] sm:$0xff]
        %s1413 = scalar_lea.vmem [#allocation2], 896
        %v1414 = vld [vmem:[%s1413] sm:$0xff]
        %v1415 = vld [vmem:[%s1413 + $0x8] sm:$0xff]
        %v1416 = vld [vmem:[%s1413 + $0x10] sm:$0xff]
        %v1417 = vld [vmem:[%s1413 + $0x18] sm:$0xff]
        %v1418 = vld [vmem:[%s1413 + $0x20] sm:$0xff]
        %v1419 = vld [vmem:[%s1413 + $0x28] sm:$0xff]
        %v1420 = vld [vmem:[%s1413 + $0x30] sm:$0xff]
        %v1421 = vld [vmem:[%s1413 + $0x38] sm:$0xff]
        %v1422 = vld [vmem:[%s1413 + $0x40] sm:$0xff]
        %v1423 = vld [vmem:[%s1413 + $0x48] sm:$0xff]
        %v1424 = vld [vmem:[%s1413 + $0x50] sm:$0xff]
        %v1425 = vld [vmem:[%s1413 + $0x58] sm:$0xff]
        %v1426 = vld [vmem:[%s1413 + $0x60] sm:$0xff]
        %v1427 = vld [vmem:[%s1413 + $0x68] sm:$0xff]
        %v1428 = vld [vmem:[%s1413 + $0x70] sm:$0xff]
        %v1429 = vld [vmem:[%s1413 + $0x78] sm:$0xff]
        %1430 = vmatprep.subr.mxu0 0.0
        %1431 = vmatpush1.msra.mxu0 %v1429
        %1432 = vmatprep.subr.mxu0 0.0
        %1433 = vmatpush1.msra.mxu0 %v1428
        %1434 = vmatprep.subr.mxu0 0.0
        %1435 = vmatpush1.msra.mxu0 %v1427
        %1436 = vmatprep.subr.mxu0 0.0
        %1437 = vmatpush1.msra.mxu0 %v1426
        %1438 = vmatprep.subr.mxu0 0.0
        %1439 = vmatpush1.msra.mxu0 %v1425
        %1440 = vmatprep.subr.mxu0 0.0
        %1441 = vmatpush1.msra.mxu0 %v1424
        %1442 = vmatprep.subr.mxu0 0.0
        %1443 = vmatpush1.msra.mxu0 %v1423
        %1444 = vmatprep.subr.mxu0 0.0
        %1445 = vmatpush1.msra.mxu0 %v1422
        %1446 = vmatprep.subr.mxu0 0.0
        %1447 = vmatpush1.msra.mxu0 %v1421
        %1448 = vmatprep.subr.mxu0 0.0
        %1449 = vmatpush1.msra.mxu0 %v1420
        %1450 = vmatprep.subr.mxu0 0.0
        %1451 = vmatpush1.msra.mxu0 %v1419
        %1452 = vmatprep.subr.mxu0 0.0
        %1453 = vmatpush1.msra.mxu0 %v1418
        %1454 = vmatprep.subr.mxu0 0.0
        %1455 = vmatpush1.msra.mxu0 %v1417
        %1456 = vmatprep.subr.mxu0 0.0
        %1457 = vmatpush1.msra.mxu0 %v1416
        %1458 = vmatprep.subr.mxu0 0.0
        %1459 = vmatpush1.msra.mxu0 %v1415
        %1460 = vmatprep.subr.mxu0 0.0
        %1461 = vmatpush1.msra.mxu0 %v1414
        %1462 = vmatprep.subr.mxu0 0.0
        %1463 = vmatpush2.msra.mxu0 0.0
        %1464 = vmatprep.subr.mxu0 0.0
        %1465 = vmatpush2.msra.mxu0 0.0
        %1466 = vmatprep.subr.mxu0 0.0
        %1467 = vmatpush2.msra.mxu0 0.0
        %1468 = vmatprep.subr.mxu0 0.0
        %1469 = vmatpush2.msra.mxu0 0.0
        %1470 = vmatprep.subr.mxu0 0.0
        %1471 = vmatpush2.msra.mxu0 0.0
        %1472 = vmatprep.subr.mxu0 0.0
        %1473 = vmatpush2.msra.mxu0 0.0
        %1474 = vmatprep.subr.mxu0 0.0
        %1475 = vmatpush2.msra.mxu0 0.0
        %1476 = vmatprep.subr.mxu0 0.0
        %1477 = vmatpush2.msra.mxu0 0.0
        %1478 = vmatprep.subr.mxu0 0.0
        %1479 = vmatpush2.msra.mxu0 0.0
        %1480 = vmatprep.subr.mxu0 0.0
        %1481 = vmatpush2.msra.mxu0 0.0
        %1482 = vmatprep.subr.mxu0 0.0
        %1483 = vmatpush2.msra.mxu0 0.0
        %1484 = vmatprep.subr.mxu0 0.0
        %1485 = vmatpush2.msra.mxu0 0.0
        %1486 = vmatprep.subr.mxu0 0.0
        %1487 = vmatpush2.msra.mxu0 0.0
        %1488 = vmatprep.subr.mxu0 0.0
        %1489 = vmatpush2.msra.mxu0 0.0
        %1490 = vmatprep.subr.mxu0 0.0
        %1491 = vmatpush2.msra.mxu0 0.0
        %1492 = vmatprep.subr.mxu0 0.0
        %1493 = vmatpush2.msra.mxu0 0.0
        %1494 = vmatprep.mubr.f32.mxu0 0.0
        %1495 = vmatmul.mubr.f32.gmra.mxu0 %v1322
        %v1496 = vpop.f32.mrf.mxu0
        %v1497 = vadd.f32 0.0, %v1496
        %v1498 = vpop.f32.mrf.mxu0
        %1499 = vmatprep.mubr.f32.mxu0 0.0
        %1500 = vmatmul.mubr.f32.gmra.mxu0 %v1323
        %v1501 = vpop.f32.mrf.mxu0
        %v1502 = vadd.f32 0.0, %v1501
        %v1503 = vpop.f32.mrf.mxu0
        %1504 = vmatprep.mubr.f32.mxu0 0.0
        %1505 = vmatmul.mubr.f32.gmra.mxu0 %v1324
        %v1506 = vpop.f32.mrf.mxu0
        %v1507 = vadd.f32 0.0, %v1506
        %v1508 = vpop.f32.mrf.mxu0
        %1509 = vmatprep.mubr.f32.mxu0 0.0
        %1510 = vmatmul.mubr.f32.gmra.mxu0 %v1325
        %v1511 = vpop.f32.mrf.mxu0
        %v1512 = vadd.f32 0.0, %v1511
        %v1513 = vpop.f32.mrf.mxu0
        %1514 = vmatprep.mubr.f32.mxu0 0.0
        %1515 = vmatmul.mubr.f32.gmra.mxu0 %v1326
        %v1516 = vpop.f32.mrf.mxu0
        %v1517 = vadd.f32 0.0, %v1516
        %v1518 = vpop.f32.mrf.mxu0
        %1519 = vmatprep.mubr.f32.mxu0 0.0
        %1520 = vmatmul.mubr.f32.gmra.mxu0 %v1327
        %v1521 = vpop.f32.mrf.mxu0
        %v1522 = vadd.f32 0.0, %v1521
        %v1523 = vpop.f32.mrf.mxu0
        %1524 = vmatprep.mubr.f32.mxu0 0.0
        %1525 = vmatmul.mubr.f32.gmra.mxu0 %v1328
        %v1526 = vpop.f32.mrf.mxu0
        %v1527 = vadd.f32 0.0, %v1526
        %v1528 = vpop.f32.mrf.mxu0
        %1529 = vmatprep.mubr.f32.mxu0 0.0
        %1530 = vmatmul.mubr.f32.gmra.mxu0 %v1329
        %v1531 = vpop.f32.mrf.mxu0
        %v1532 = vadd.f32 0.0, %v1531
        %v1533 = vpop.f32.mrf.mxu0
        %1534 = vmatprep.mubr.f32.mxu0 0.0
        %1535 = vmatmul.mubr.f32.gmra.mxu0 %v1330
        %v1536 = vpop.f32.mrf.mxu0
        %v1537 = vadd.f32 0.0, %v1536
        %v1538 = vpop.f32.mrf.mxu0
        %1539 = vdwg.mxu0
        %1540 = vmatprep.subr.mxu0 0.0
        %1541 = vmatpush1.msra.mxu0 %v1412
        %1542 = vmatprep.subr.mxu0 0.0
        %1543 = vmatpush1.msra.mxu0 %v1411
        %1544 = vmatprep.subr.mxu0 0.0
        %1545 = vmatpush1.msra.mxu0 %v1410
        %1546 = vmatprep.subr.mxu0 0.0
        %1547 = vmatpush1.msra.mxu0 %v1409
        %1548 = vmatprep.subr.mxu0 0.0
        %1549 = vmatpush1.msra.mxu0 %v1408
        %1550 = vmatprep.subr.mxu0 0.0
        %1551 = vmatpush1.msra.mxu0 %v1407
        %1552 = vmatprep.subr.mxu0 0.0
        %1553 = vmatpush1.msra.mxu0 %v1406
        %1554 = vmatprep.subr.mxu0 0.0
        %1555 = vmatpush1.msra.mxu0 %v1405
        %1556 = vmatprep.subr.mxu0 0.0
        %1557 = vmatpush1.msra.mxu0 %v1404
        %1558 = vmatprep.subr.mxu0 0.0
        %1559 = vmatpush1.msra.mxu0 %v1403
        %1560 = vmatprep.subr.mxu0 0.0
        %1561 = vmatpush1.msra.mxu0 %v1402
        %1562 = vmatprep.subr.mxu0 0.0
        %1563 = vmatpush1.msra.mxu0 %v1401
        %1564 = vmatprep.subr.mxu0 0.0
        %1565 = vmatpush1.msra.mxu0 %v1400
        %1566 = vmatprep.subr.mxu0 0.0
        %1567 = vmatpush1.msra.mxu0 %v1399
        %1568 = vmatprep.subr.mxu0 0.0
        %1569 = vmatpush1.msra.mxu0 %v1398
        %1570 = vmatprep.subr.mxu0 0.0
        %1571 = vmatpush1.msra.mxu0 %v1397
        %1572 = vmatprep.subr.mxu0 0.0
        %1573 = vmatpush2.msra.mxu0 0.0
        %1574 = vmatprep.subr.mxu0 0.0
        %1575 = vmatpush2.msra.mxu0 0.0
        %1576 = vmatprep.subr.mxu0 0.0
        %1577 = vmatpush2.msra.mxu0 0.0
        %1578 = vmatprep.subr.mxu0 0.0
        %1579 = vmatpush2.msra.mxu0 0.0
        %1580 = vmatprep.subr.mxu0 0.0
        %1581 = vmatpush2.msra.mxu0 0.0
        %1582 = vmatprep.subr.mxu0 0.0
        %1583 = vmatpush2.msra.mxu0 0.0
        %1584 = vmatprep.subr.mxu0 0.0
        %1585 = vmatpush2.msra.mxu0 0.0
        %1586 = vmatprep.subr.mxu0 0.0
        %1587 = vmatpush2.msra.mxu0 0.0
        %1588 = vmatprep.subr.mxu0 0.0
        %1589 = vmatpush2.msra.mxu0 0.0
        %1590 = vmatprep.subr.mxu0 0.0
        %1591 = vmatpush2.msra.mxu0 0.0
        %1592 = vmatprep.subr.mxu0 0.0
        %1593 = vmatpush2.msra.mxu0 0.0
        %1594 = vmatprep.subr.mxu0 0.0
        %1595 = vmatpush2.msra.mxu0 0.0
        %1596 = vmatprep.subr.mxu0 0.0
        %1597 = vmatpush2.msra.mxu0 0.0
        %1598 = vmatprep.subr.mxu0 0.0
        %1599 = vmatpush2.msra.mxu0 0.0
        %1600 = vmatprep.subr.mxu0 0.0
        %1601 = vmatpush2.msra.mxu0 0.0
        %1602 = vmatprep.subr.mxu0 0.0
        %1603 = vmatpush2.msra.mxu0 0.0
        %1604 = vmatprep.mubr.f32.mxu0 0.0
        %1605 = vmatmul.mubr.f32.gmra.mxu0 %v1367
        %v1606 = vpop.f32.mrf.mxu0
        %v1607 = vadd.f32 %v1497, %v1606
        %v1608 = vpop.f32.mrf.mxu0
        %1609 = vmatprep.mubr.f32.mxu0 0.0
        %1610 = vmatmul.mubr.f32.gmra.mxu0 %v1343
        %v1611 = vpop.f32.mrf.mxu0
        %v1612 = vadd.f32 %v1502, %v1611
        %v1613 = vpop.f32.mrf.mxu0
        %1614 = vmatprep.mubr.f32.mxu0 0.0
        %1615 = vmatmul.mubr.f32.gmra.mxu0 %v1345
        %v1616 = vpop.f32.mrf.mxu0
        %v1617 = vadd.f32 %v1507, %v1616
        %v1618 = vpop.f32.mrf.mxu0
        %1619 = vmatprep.mubr.f32.mxu0 0.0
        %1620 = vmatmul.mubr.f32.gmra.mxu0 %v1347
        %v1621 = vpop.f32.mrf.mxu0
        %v1622 = vadd.f32 %v1512, %v1621
        %v1623 = vpop.f32.mrf.mxu0
        %1624 = vmatprep.mubr.f32.mxu0 0.0
        %1625 = vmatmul.mubr.f32.gmra.mxu0 %v1349
        %v1626 = vpop.f32.mrf.mxu0
        %v1627 = vadd.f32 %v1517, %v1626
        %v1628 = vpop.f32.mrf.mxu0
        %1629 = vmatprep.mubr.f32.mxu0 0.0
        %1630 = vmatmul.mubr.f32.gmra.mxu0 %v1351
        %v1631 = vpop.f32.mrf.mxu0
        %v1632 = vadd.f32 %v1522, %v1631
        %v1633 = vpop.f32.mrf.mxu0
        %1634 = vmatprep.mubr.f32.mxu0 0.0
        %1635 = vmatmul.mubr.f32.gmra.mxu0 %v1353
        %v1636 = vpop.f32.mrf.mxu0
        %v1637 = vadd.f32 %v1527, %v1636
        %v1638 = vpop.f32.mrf.mxu0
        %1639 = vmatprep.mubr.f32.mxu0 0.0
        %1640 = vmatmul.mubr.f32.gmra.mxu0 %v1355
        %v1641 = vpop.f32.mrf.mxu0
        %v1642 = vadd.f32 %v1532, %v1641
        %v1643 = vpop.f32.mrf.mxu0
        %1644 = vmatprep.mubr.f32.mxu0 0.0
        %1645 = vmatmul.mubr.f32.gmra.mxu0 %v1357
        %v1646 = vpop.f32.mrf.mxu0
        %v1647 = vadd.f32 %v1537, %v1646
        %v1648 = vpop.f32.mrf.mxu0
        %1649 = vdwg.mxu0
        %s1650 = scalar_lea.vmem [#allocation2], 1024
        %v1651 = vld [vmem:[%s1650] sm:$0xff]
        %v1652 = vld [vmem:[%s1650 + $0x8] sm:$0xff]
        %v1653 = vld [vmem:[%s1650 + $0x10] sm:$0xff]
        %v1654 = vld [vmem:[%s1650 + $0x18] sm:$0xff]
        %v1655 = vld [vmem:[%s1650 + $0x20] sm:$0xff]
        %v1656 = vld [vmem:[%s1650 + $0x28] sm:$0xff]
        %v1657 = vld [vmem:[%s1650 + $0x30] sm:$0xff]
        %v1658 = vld [vmem:[%s1650 + $0x38] sm:$0xff]
        %v1659 = vld [vmem:[%s1650 + $0x40] sm:$0xff]
        %v1660 = vld [vmem:[%s1650 + $0x48] sm:$0xff]
        %v1661 = vld [vmem:[%s1650 + $0x50] sm:$0xff]
        %v1662 = vld [vmem:[%s1650 + $0x58] sm:$0xff]
        %v1663 = vld [vmem:[%s1650 + $0x60] sm:$0xff]
        %v1664 = vld [vmem:[%s1650 + $0x68] sm:$0xff]
        %v1665 = vld [vmem:[%s1650 + $0x70] sm:$0xff]
        %v1666 = vld [vmem:[%s1650 + $0x78] sm:$0xff]
        %1667 = vmatprep.subr.mxu0 0.0
        %1668 = vmatpush1.msra.mxu0 %v1666
        %1669 = vmatprep.subr.mxu0 0.0
        %1670 = vmatpush1.msra.mxu0 %v1665
        %1671 = vmatprep.subr.mxu0 0.0
        %1672 = vmatpush1.msra.mxu0 %v1664
        %1673 = vmatprep.subr.mxu0 0.0
        %1674 = vmatpush1.msra.mxu0 %v1663
        %1675 = vmatprep.subr.mxu0 0.0
        %1676 = vmatpush1.msra.mxu0 %v1662
        %1677 = vmatprep.subr.mxu0 0.0
        %1678 = vmatpush1.msra.mxu0 %v1661
        %1679 = vmatprep.subr.mxu0 0.0
        %1680 = vmatpush1.msra.mxu0 %v1660
        %1681 = vmatprep.subr.mxu0 0.0
        %1682 = vmatpush1.msra.mxu0 %v1659
        %1683 = vmatprep.subr.mxu0 0.0
        %1684 = vmatpush1.msra.mxu0 %v1658
        %1685 = vmatprep.subr.mxu0 0.0
        %1686 = vmatpush1.msra.mxu0 %v1657
        %1687 = vmatprep.subr.mxu0 0.0
        %1688 = vmatpush1.msra.mxu0 %v1656
        %1689 = vmatprep.subr.mxu0 0.0
        %1690 = vmatpush1.msra.mxu0 %v1655
        %1691 = vmatprep.subr.mxu0 0.0
        %1692 = vmatpush1.msra.mxu0 %v1654
        %1693 = vmatprep.subr.mxu0 0.0
        %1694 = vmatpush1.msra.mxu0 %v1653
        %1695 = vmatprep.subr.mxu0 0.0
        %1696 = vmatpush1.msra.mxu0 %v1652
        %1697 = vmatprep.subr.mxu0 0.0
        %1698 = vmatpush1.msra.mxu0 %v1651
        %1699 = vmatprep.subr.mxu0 0.0
        %1700 = vmatpush2.msra.mxu0 0.0
        %1701 = vmatprep.subr.mxu0 0.0
        %1702 = vmatpush2.msra.mxu0 0.0
        %1703 = vmatprep.subr.mxu0 0.0
        %1704 = vmatpush2.msra.mxu0 0.0
        %1705 = vmatprep.subr.mxu0 0.0
        %1706 = vmatpush2.msra.mxu0 0.0
        %1707 = vmatprep.subr.mxu0 0.0
        %1708 = vmatpush2.msra.mxu0 0.0
        %1709 = vmatprep.subr.mxu0 0.0
        %1710 = vmatpush2.msra.mxu0 0.0
        %1711 = vmatprep.subr.mxu0 0.0
        %1712 = vmatpush2.msra.mxu0 0.0
        %1713 = vmatprep.subr.mxu0 0.0
        %1714 = vmatpush2.msra.mxu0 0.0
        %1715 = vmatprep.subr.mxu0 0.0
        %1716 = vmatpush2.msra.mxu0 0.0
        %1717 = vmatprep.subr.mxu0 0.0
        %1718 = vmatpush2.msra.mxu0 0.0
        %1719 = vmatprep.subr.mxu0 0.0
        %1720 = vmatpush2.msra.mxu0 0.0
        %1721 = vmatprep.subr.mxu0 0.0
        %1722 = vmatpush2.msra.mxu0 0.0
        %1723 = vmatprep.subr.mxu0 0.0
        %1724 = vmatpush2.msra.mxu0 0.0
        %1725 = vmatprep.subr.mxu0 0.0
        %1726 = vmatpush2.msra.mxu0 0.0
        %1727 = vmatprep.subr.mxu0 0.0
        %1728 = vmatpush2.msra.mxu0 0.0
        %1729 = vmatprep.subr.mxu0 0.0
        %1730 = vmatpush2.msra.mxu0 0.0
        %1731 = vmatprep.mubr.f32.mxu0 0.0
        %1732 = vmatmul.mubr.f32.gmra.mxu0 %v1371
        %v1733 = vpop.f32.mrf.mxu0
        %v1734 = vadd.f32 0.0, %v1733
        %v1735 = vpop.f32.mrf.mxu0
        %1736 = vmatprep.mubr.f32.mxu0 0.0
        %1737 = vmatmul.mubr.f32.gmra.mxu0 %v1373
        %v1738 = vpop.f32.mrf.mxu0
        %v1739 = vadd.f32 0.0, %v1738
        %v1740 = vpop.f32.mrf.mxu0
        %1741 = vmatprep.mubr.f32.mxu0 0.0
        %1742 = vmatmul.mubr.f32.gmra.mxu0 %v1375
        %v1743 = vpop.f32.mrf.mxu0
        %v1744 = vadd.f32 0.0, %v1743
        %v1745 = vpop.f32.mrf.mxu0
        %1746 = vmatprep.mubr.f32.mxu0 0.0
        %1747 = vmatmul.mubr.f32.gmra.mxu0 %v1377
        %v1748 = vpop.f32.mrf.mxu0
        %v1749 = vadd.f32 0.0, %v1748
        %v1750 = vpop.f32.mrf.mxu0
        %1751 = vmatprep.mubr.f32.mxu0 0.0
        %1752 = vmatmul.mubr.f32.gmra.mxu0 %v1379
        %v1753 = vpop.f32.mrf.mxu0
        %v1754 = vadd.f32 0.0, %v1753
        %v1755 = vpop.f32.mrf.mxu0
        %1756 = vmatprep.mubr.f32.mxu0 0.0
        %1757 = vmatmul.mubr.f32.gmra.mxu0 %v1381
        %v1758 = vpop.f32.mrf.mxu0
        %v1759 = vadd.f32 0.0, %v1758
        %v1760 = vpop.f32.mrf.mxu0
        %1761 = vmatprep.mubr.f32.mxu0 0.0
        %1762 = vmatmul.mubr.f32.gmra.mxu0 %v1383
        %v1763 = vpop.f32.mrf.mxu0
        %v1764 = vadd.f32 0.0, %v1763
        %v1765 = vpop.f32.mrf.mxu0
        %1766 = vmatprep.mubr.f32.mxu0 0.0
        %1767 = vmatmul.mubr.f32.gmra.mxu0 %v1385
        %v1768 = vpop.f32.mrf.mxu0
        %v1769 = vadd.f32 0.0, %v1768
        %v1770 = vpop.f32.mrf.mxu0
        %1771 = vmatprep.mubr.f32.mxu0 0.0
        %1772 = vmatmul.mubr.f32.gmra.mxu0 %v1395
        %v1773 = vpop.f32.mrf.mxu0
        %v1774 = vadd.f32 0.0, %v1773
        %v1775 = vpop.f32.mrf.mxu0
        %1776 = vdwg.mxu0
        %v1777 = vadd.f32 %v1607, %v1734
        %v1778 = vadd.f32 %v1612, %v1739
        %v1779 = vadd.f32 %v1617, %v1744
        %v1780 = vadd.f32 %v1622, %v1749
        %v1781 = vadd.f32 %v1627, %v1754
        %v1782 = vadd.f32 %v1632, %v1759
        %v1783 = vadd.f32 %v1637, %v1764
        %v1784 = vadd.f32 %v1642, %v1769
        %v1785 = vadd.f32 %v1647, %v1774
        %v1786 = vld [vmem:[#allocation5 + $0x2] sm:$0x1]
        %v1787 = vlaneseq
        %v1788 = vshrl.u32 %v1787, 7
        %v1789 = vsub.s32 0, %v1788
        %v1790 = vrot.slane %v1786, %v1789
        %v1791 = vadd.f32 %v1777, %v1790
        %v1792 = vadd.f32 %v1778, %v1790
        %v1793 = vadd.f32 %v1779, %v1790
        %v1794 = vadd.f32 %v1780, %v1790
        %v1795 = vadd.f32 %v1781, %v1790
        %v1796 = vadd.f32 %v1782, %v1790
        %v1797 = vadd.f32 %v1783, %v1790
        %v1798 = vadd.f32 %v1784, %v1790
        %v1799 = vadd.f32 %v1785, %v1790
        %vm1800 = vcmp.gt.f32.partialorder %v1791, 0.0
        %vm1801 = vcmp.gt.f32.partialorder %v1792, 0.0
        %vm1802 = vcmp.gt.f32.partialorder %v1793, 0.0
        %vm1803 = vcmp.gt.f32.partialorder %v1794, 0.0
        %vm1804 = vcmp.gt.f32.partialorder %v1795, 0.0
        %vm1805 = vcmp.gt.f32.partialorder %v1796, 0.0
        %vm1806 = vcmp.gt.f32.partialorder %v1797, 0.0
        %vm1807 = vcmp.gt.f32.partialorder %v1798, 0.0
        %vm1808 = vcmp.gt.f32.partialorder %v1799, 0.0
        %v1809 = vmul.f32 %v1791, 0.01
        %v1810 = vmul.f32 %v1792, 0.01
        %v1811 = vmul.f32 %v1793, 0.01
        %v1812 = vmul.f32 %v1794, 0.01
        %v1813 = vmul.f32 %v1795, 0.01
        %v1814 = vmul.f32 %v1796, 0.01
        %v1815 = vmul.f32 %v1797, 0.01
        %v1816 = vmul.f32 %v1798, 0.01
        %v1817 = vmul.f32 %v1799, 0.01
        %v1818 = vsel %vm1800, %v1791, %v1809
        %v1819 = vsel %vm1801, %v1792, %v1810
        %v1820 = vsel %vm1802, %v1793, %v1811
        %v1821 = vsel %vm1803, %v1794, %v1812
        %v1822 = vsel %vm1804, %v1795, %v1813
        %v1823 = vsel %vm1805, %v1796, %v1814
        %v1824 = vsel %vm1806, %v1797, %v1815
        %v1825 = vsel %vm1807, %v1798, %v1816
        %v1826 = vsel %vm1808, %v1799, %v1817
        %v1827 = vsel %vm297, %v1818, 0.0
        %v1828 = vsel %vm298, %v1819, 0.0
        %v1829 = vsel %vm299, %v1820, 0.0
        %v1830 = vsel %vm300, %v1821, 0.0
        %v1831 = vsel %vm301, %v1822, 0.0
        %v1832 = vsel %vm302, %v1823, 0.0
        %v1833 = vsel %vm303, %v1824, 0.0
        %v1834 = vsel %vm304, %v1825, 0.0
        %v1835 = vsel %vm305, %v1826, 0.0
        %v1845 = vrot.slane %v1827, 7
        %v1846 = vrot.slane %v1828, 7
        %v1847 = vsel %vm324, %v1845, %v1846
        %v1848 = vrot.slane %v1829, 7
        %v1849 = vsel %vm324, %v1846, %v1848
        %v1850 = vrot.slane %v1830, 7
        %v1851 = vsel %vm324, %v1848, %v1850
        %v1852 = vrot.slane %v1831, 7
        %v1853 = vsel %vm324, %v1850, %v1852
        %v1854 = vrot.slane %v1832, 7
        %v1855 = vsel %vm324, %v1852, %v1854
        %v1856 = vrot.slane %v1833, 7
        %v1857 = vsel %vm324, %v1854, %v1856
        %v1858 = vrot.slane %v1834, 7
        %v1859 = vsel %vm324, %v1856, %v1858
        %v1860 = vrot.slane %v1835, 7
        %v1861 = vsel %vm324, %v1858, %v1860
        %v1871 = vsel %vm324, 0.0, %v1845
        %v1872 = vrot.slane %v1827, 1
        %v1873 = vrot.slane %v1828, 1
        %v1874 = vsel %vm352, %v1872, %v1873
        %v1875 = vrot.slane %v1829, 1
        %v1876 = vsel %vm352, %v1873, %v1875
        %v1877 = vrot.slane %v1830, 1
        %v1878 = vsel %vm352, %v1875, %v1877
        %v1879 = vrot.slane %v1831, 1
        %v1880 = vsel %vm352, %v1877, %v1879
        %v1881 = vrot.slane %v1832, 1
        %v1882 = vsel %vm352, %v1879, %v1881
        %v1883 = vrot.slane %v1833, 1
        %v1884 = vsel %vm352, %v1881, %v1883
        %v1885 = vrot.slane %v1834, 1
        %v1886 = vsel %vm352, %v1883, %v1885
        %v1887 = vrot.slane %v1835, 1
        %v1888 = vsel %vm352, %v1885, %v1887
        %v1898 = vsel %vm352, %v1887, 0.0
        %s1899 = scalar_lea.vmem [#allocation2], 1152
        %v1900 = vld [vmem:[%s1899] sm:$0xff]
        %v1901 = vld [vmem:[%s1899 + $0x8] sm:$0xff]
        %v1902 = vld [vmem:[%s1899 + $0x10] sm:$0xff]
        %v1903 = vld [vmem:[%s1899 + $0x18] sm:$0xff]
        %v1904 = vld [vmem:[%s1899 + $0x20] sm:$0xff]
        %v1905 = vld [vmem:[%s1899 + $0x28] sm:$0xff]
        %v1906 = vld [vmem:[%s1899 + $0x30] sm:$0xff]
        %v1907 = vld [vmem:[%s1899 + $0x38] sm:$0xff]
        %v1908 = vld [vmem:[%s1899 + $0x40] sm:$0xff]
        %v1909 = vld [vmem:[%s1899 + $0x48] sm:$0xff]
        %v1910 = vld [vmem:[%s1899 + $0x50] sm:$0xff]
        %v1911 = vld [vmem:[%s1899 + $0x58] sm:$0xff]
        %v1912 = vld [vmem:[%s1899 + $0x60] sm:$0xff]
        %v1913 = vld [vmem:[%s1899 + $0x68] sm:$0xff]
        %v1914 = vld [vmem:[%s1899 + $0x70] sm:$0xff]
        %v1915 = vld [vmem:[%s1899 + $0x78] sm:$0xff]
        %s1916 = scalar_lea.vmem [#allocation2], 1280
        %v1917 = vld [vmem:[%s1916] sm:$0xff]
        %v1918 = vld [vmem:[%s1916 + $0x8] sm:$0xff]
        %v1919 = vld [vmem:[%s1916 + $0x10] sm:$0xff]
        %v1920 = vld [vmem:[%s1916 + $0x18] sm:$0xff]
        %v1921 = vld [vmem:[%s1916 + $0x20] sm:$0xff]
        %v1922 = vld [vmem:[%s1916 + $0x28] sm:$0xff]
        %v1923 = vld [vmem:[%s1916 + $0x30] sm:$0xff]
        %v1924 = vld [vmem:[%s1916 + $0x38] sm:$0xff]
        %v1925 = vld [vmem:[%s1916 + $0x40] sm:$0xff]
        %v1926 = vld [vmem:[%s1916 + $0x48] sm:$0xff]
        %v1927 = vld [vmem:[%s1916 + $0x50] sm:$0xff]
        %v1928 = vld [vmem:[%s1916 + $0x58] sm:$0xff]
        %v1929 = vld [vmem:[%s1916 + $0x60] sm:$0xff]
        %v1930 = vld [vmem:[%s1916 + $0x68] sm:$0xff]
        %v1931 = vld [vmem:[%s1916 + $0x70] sm:$0xff]
        %v1932 = vld [vmem:[%s1916 + $0x78] sm:$0xff]
        %1933 = vmatprep.subr.mxu0 0.0
        %1934 = vmatpush1.msra.mxu0 %v1932
        %1935 = vmatprep.subr.mxu0 0.0
        %1936 = vmatpush1.msra.mxu0 %v1931
        %1937 = vmatprep.subr.mxu0 0.0
        %1938 = vmatpush1.msra.mxu0 %v1930
        %1939 = vmatprep.subr.mxu0 0.0
        %1940 = vmatpush1.msra.mxu0 %v1929
        %1941 = vmatprep.subr.mxu0 0.0
        %1942 = vmatpush1.msra.mxu0 %v1928
        %1943 = vmatprep.subr.mxu0 0.0
        %1944 = vmatpush1.msra.mxu0 %v1927
        %1945 = vmatprep.subr.mxu0 0.0
        %1946 = vmatpush1.msra.mxu0 %v1926
        %1947 = vmatprep.subr.mxu0 0.0
        %1948 = vmatpush1.msra.mxu0 %v1925
        %1949 = vmatprep.subr.mxu0 0.0
        %1950 = vmatpush1.msra.mxu0 %v1924
        %1951 = vmatprep.subr.mxu0 0.0
        %1952 = vmatpush1.msra.mxu0 %v1923
        %1953 = vmatprep.subr.mxu0 0.0
        %1954 = vmatpush1.msra.mxu0 %v1922
        %1955 = vmatprep.subr.mxu0 0.0
        %1956 = vmatpush1.msra.mxu0 %v1921
        %1957 = vmatprep.subr.mxu0 0.0
        %1958 = vmatpush1.msra.mxu0 %v1920
        %1959 = vmatprep.subr.mxu0 0.0
        %1960 = vmatpush1.msra.mxu0 %v1919
        %1961 = vmatprep.subr.mxu0 0.0
        %1962 = vmatpush1.msra.mxu0 %v1918
        %1963 = vmatprep.subr.mxu0 0.0
        %1964 = vmatpush1.msra.mxu0 %v1917
        %1965 = vmatprep.subr.mxu0 0.0
        %1966 = vmatpush2.msra.mxu0 0.0
        %1967 = vmatprep.subr.mxu0 0.0
        %1968 = vmatpush2.msra.mxu0 0.0
        %1969 = vmatprep.subr.mxu0 0.0
        %1970 = vmatpush2.msra.mxu0 0.0
        %1971 = vmatprep.subr.mxu0 0.0
        %1972 = vmatpush2.msra.mxu0 0.0
        %1973 = vmatprep.subr.mxu0 0.0
        %1974 = vmatpush2.msra.mxu0 0.0
        %1975 = vmatprep.subr.mxu0 0.0
        %1976 = vmatpush2.msra.mxu0 0.0
        %1977 = vmatprep.subr.mxu0 0.0
        %1978 = vmatpush2.msra.mxu0 0.0
        %1979 = vmatprep.subr.mxu0 0.0
        %1980 = vmatpush2.msra.mxu0 0.0
        %1981 = vmatprep.subr.mxu0 0.0
        %1982 = vmatpush2.msra.mxu0 0.0
        %1983 = vmatprep.subr.mxu0 0.0
        %1984 = vmatpush2.msra.mxu0 0.0
        %1985 = vmatprep.subr.mxu0 0.0
        %1986 = vmatpush2.msra.mxu0 0.0
        %1987 = vmatprep.subr.mxu0 0.0
        %1988 = vmatpush2.msra.mxu0 0.0
        %1989 = vmatprep.subr.mxu0 0.0
        %1990 = vmatpush2.msra.mxu0 0.0
        %1991 = vmatprep.subr.mxu0 0.0
        %1992 = vmatpush2.msra.mxu0 0.0
        %1993 = vmatprep.subr.mxu0 0.0
        %1994 = vmatpush2.msra.mxu0 0.0
        %1995 = vmatprep.subr.mxu0 0.0
        %1996 = vmatpush2.msra.mxu0 0.0
        %1997 = vmatprep.mubr.f32.mxu0 0.0
        %1998 = vmatmul.mubr.f32.gmra.mxu0 %v1827
        %v1999 = vpop.f32.mrf.mxu0
        %v2000 = vadd.f32 0.0, %v1999
        %v2001 = vpop.f32.mrf.mxu0
        %2002 = vmatprep.mubr.f32.mxu0 0.0
        %2003 = vmatmul.mubr.f32.gmra.mxu0 %v1828
        %v2004 = vpop.f32.mrf.mxu0
        %v2005 = vadd.f32 0.0, %v2004
        %v2006 = vpop.f32.mrf.mxu0
        %2007 = vmatprep.mubr.f32.mxu0 0.0
        %2008 = vmatmul.mubr.f32.gmra.mxu0 %v1829
        %v2009 = vpop.f32.mrf.mxu0
        %v2010 = vadd.f32 0.0, %v2009
        %v2011 = vpop.f32.mrf.mxu0
        %2012 = vmatprep.mubr.f32.mxu0 0.0
        %2013 = vmatmul.mubr.f32.gmra.mxu0 %v1830
        %v2014 = vpop.f32.mrf.mxu0
        %v2015 = vadd.f32 0.0, %v2014
        %v2016 = vpop.f32.mrf.mxu0
        %2017 = vmatprep.mubr.f32.mxu0 0.0
        %2018 = vmatmul.mubr.f32.gmra.mxu0 %v1831
        %v2019 = vpop.f32.mrf.mxu0
        %v2020 = vadd.f32 0.0, %v2019
        %v2021 = vpop.f32.mrf.mxu0
        %2022 = vmatprep.mubr.f32.mxu0 0.0
        %2023 = vmatmul.mubr.f32.gmra.mxu0 %v1832
        %v2024 = vpop.f32.mrf.mxu0
        %v2025 = vadd.f32 0.0, %v2024
        %v2026 = vpop.f32.mrf.mxu0
        %2027 = vmatprep.mubr.f32.mxu0 0.0
        %2028 = vmatmul.mubr.f32.gmra.mxu0 %v1833
        %v2029 = vpop.f32.mrf.mxu0
        %v2030 = vadd.f32 0.0, %v2029
        %v2031 = vpop.f32.mrf.mxu0
        %2032 = vmatprep.mubr.f32.mxu0 0.0
        %2033 = vmatmul.mubr.f32.gmra.mxu0 %v1834
        %v2034 = vpop.f32.mrf.mxu0
        %v2035 = vadd.f32 0.0, %v2034
        %v2036 = vpop.f32.mrf.mxu0
        %2037 = vmatprep.mubr.f32.mxu0 0.0
        %2038 = vmatmul.mubr.f32.gmra.mxu0 %v1835
        %v2039 = vpop.f32.mrf.mxu0
        %v2040 = vadd.f32 0.0, %v2039
        %v2041 = vpop.f32.mrf.mxu0
        %2042 = vdwg.mxu0
        %2043 = vmatprep.subr.mxu0 0.0
        %2044 = vmatpush1.msra.mxu0 %v1915
        %2045 = vmatprep.subr.mxu0 0.0
        %2046 = vmatpush1.msra.mxu0 %v1914
        %2047 = vmatprep.subr.mxu0 0.0
        %2048 = vmatpush1.msra.mxu0 %v1913
        %2049 = vmatprep.subr.mxu0 0.0
        %2050 = vmatpush1.msra.mxu0 %v1912
        %2051 = vmatprep.subr.mxu0 0.0
        %2052 = vmatpush1.msra.mxu0 %v1911
        %2053 = vmatprep.subr.mxu0 0.0
        %2054 = vmatpush1.msra.mxu0 %v1910
        %2055 = vmatprep.subr.mxu0 0.0
        %2056 = vmatpush1.msra.mxu0 %v1909
        %2057 = vmatprep.subr.mxu0 0.0
        %2058 = vmatpush1.msra.mxu0 %v1908
        %2059 = vmatprep.subr.mxu0 0.0
        %2060 = vmatpush1.msra.mxu0 %v1907
        %2061 = vmatprep.subr.mxu0 0.0
        %2062 = vmatpush1.msra.mxu0 %v1906
        %2063 = vmatprep.subr.mxu0 0.0
        %2064 = vmatpush1.msra.mxu0 %v1905
        %2065 = vmatprep.subr.mxu0 0.0
        %2066 = vmatpush1.msra.mxu0 %v1904
        %2067 = vmatprep.subr.mxu0 0.0
        %2068 = vmatpush1.msra.mxu0 %v1903
        %2069 = vmatprep.subr.mxu0 0.0
        %2070 = vmatpush1.msra.mxu0 %v1902
        %2071 = vmatprep.subr.mxu0 0.0
        %2072 = vmatpush1.msra.mxu0 %v1901
        %2073 = vmatprep.subr.mxu0 0.0
        %2074 = vmatpush1.msra.mxu0 %v1900
        %2075 = vmatprep.subr.mxu0 0.0
        %2076 = vmatpush2.msra.mxu0 0.0
        %2077 = vmatprep.subr.mxu0 0.0
        %2078 = vmatpush2.msra.mxu0 0.0
        %2079 = vmatprep.subr.mxu0 0.0
        %2080 = vmatpush2.msra.mxu0 0.0
        %2081 = vmatprep.subr.mxu0 0.0
        %2082 = vmatpush2.msra.mxu0 0.0
        %2083 = vmatprep.subr.mxu0 0.0
        %2084 = vmatpush2.msra.mxu0 0.0
        %2085 = vmatprep.subr.mxu0 0.0
        %2086 = vmatpush2.msra.mxu0 0.0
        %2087 = vmatprep.subr.mxu0 0.0
        %2088 = vmatpush2.msra.mxu0 0.0
        %2089 = vmatprep.subr.mxu0 0.0
        %2090 = vmatpush2.msra.mxu0 0.0
        %2091 = vmatprep.subr.mxu0 0.0
        %2092 = vmatpush2.msra.mxu0 0.0
        %2093 = vmatprep.subr.mxu0 0.0
        %2094 = vmatpush2.msra.mxu0 0.0
        %2095 = vmatprep.subr.mxu0 0.0
        %2096 = vmatpush2.msra.mxu0 0.0
        %2097 = vmatprep.subr.mxu0 0.0
        %2098 = vmatpush2.msra.mxu0 0.0
        %2099 = vmatprep.subr.mxu0 0.0
        %2100 = vmatpush2.msra.mxu0 0.0
        %2101 = vmatprep.subr.mxu0 0.0
        %2102 = vmatpush2.msra.mxu0 0.0
        %2103 = vmatprep.subr.mxu0 0.0
        %2104 = vmatpush2.msra.mxu0 0.0
        %2105 = vmatprep.subr.mxu0 0.0
        %2106 = vmatpush2.msra.mxu0 0.0
        %2107 = vmatprep.mubr.f32.mxu0 0.0
        %2108 = vmatmul.mubr.f32.gmra.mxu0 %v1871
        %v2109 = vpop.f32.mrf.mxu0
        %v2110 = vadd.f32 %v2000, %v2109
        %v2111 = vpop.f32.mrf.mxu0
        %2112 = vmatprep.mubr.f32.mxu0 0.0
        %2113 = vmatmul.mubr.f32.gmra.mxu0 %v1847
        %v2114 = vpop.f32.mrf.mxu0
        %v2115 = vadd.f32 %v2005, %v2114
        %v2116 = vpop.f32.mrf.mxu0
        %2117 = vmatprep.mubr.f32.mxu0 0.0
        %2118 = vmatmul.mubr.f32.gmra.mxu0 %v1849
        %v2119 = vpop.f32.mrf.mxu0
        %v2120 = vadd.f32 %v2010, %v2119
        %v2121 = vpop.f32.mrf.mxu0
        %2122 = vmatprep.mubr.f32.mxu0 0.0
        %2123 = vmatmul.mubr.f32.gmra.mxu0 %v1851
        %v2124 = vpop.f32.mrf.mxu0
        %v2125 = vadd.f32 %v2015, %v2124
        %v2126 = vpop.f32.mrf.mxu0
        %2127 = vmatprep.mubr.f32.mxu0 0.0
        %2128 = vmatmul.mubr.f32.gmra.mxu0 %v1853
        %v2129 = vpop.f32.mrf.mxu0
        %v2130 = vadd.f32 %v2020, %v2129
        %v2131 = vpop.f32.mrf.mxu0
        %2132 = vmatprep.mubr.f32.mxu0 0.0
        %2133 = vmatmul.mubr.f32.gmra.mxu0 %v1855
        %v2134 = vpop.f32.mrf.mxu0
        %v2135 = vadd.f32 %v2025, %v2134
        %v2136 = vpop.f32.mrf.mxu0
        %2137 = vmatprep.mubr.f32.mxu0 0.0
        %2138 = vmatmul.mubr.f32.gmra.mxu0 %v1857
        %v2139 = vpop.f32.mrf.mxu0
        %v2140 = vadd.f32 %v2030, %v2139
        %v2141 = vpop.f32.mrf.mxu0
        %2142 = vmatprep.mubr.f32.mxu0 0.0
        %2143 = vmatmul.mubr.f32.gmra.mxu0 %v1859
        %v2144 = vpop.f32.mrf.mxu0
        %v2145 = vadd.f32 %v2035, %v2144
        %v2146 = vpop.f32.mrf.mxu0
        %2147 = vmatprep.mubr.f32.mxu0 0.0
        %2148 = vmatmul.mubr.f32.gmra.mxu0 %v1861
        %v2149 = vpop.f32.mrf.mxu0
        %v2150 = vadd.f32 %v2040, %v2149
        %v2151 = vpop.f32.mrf.mxu0
        %2152 = vdwg.mxu0
        %s2153 = scalar_lea.vmem [#allocation2], 1408
        %v2154 = vld [vmem:[%s2153] sm:$0xff]
        %v2155 = vld [vmem:[%s2153 + $0x8] sm:$0xff]
        %v2156 = vld [vmem:[%s2153 + $0x10] sm:$0xff]
        %v2157 = vld [vmem:[%s2153 + $0x18] sm:$0xff]
        %v2158 = vld [vmem:[%s2153 + $0x20] sm:$0xff]
        %v2159 = vld [vmem:[%s2153 + $0x28] sm:$0xff]
        %v2160 = vld [vmem:[%s2153 + $0x30] sm:$0xff]
        %v2161 = vld [vmem:[%s2153 + $0x38] sm:$0xff]
        %v2162 = vld [vmem:[%s2153 + $0x40] sm:$0xff]
        %v2163 = vld [vmem:[%s2153 + $0x48] sm:$0xff]
        %v2164 = vld [vmem:[%s2153 + $0x50] sm:$0xff]
        %v2165 = vld [vmem:[%s2153 + $0x58] sm:$0xff]
        %v2166 = vld [vmem:[%s2153 + $0x60] sm:$0xff]
        %v2167 = vld [vmem:[%s2153 + $0x68] sm:$0xff]
        %v2168 = vld [vmem:[%s2153 + $0x70] sm:$0xff]
        %v2169 = vld [vmem:[%s2153 + $0x78] sm:$0xff]
        %2170 = vmatprep.subr.mxu0 0.0
        %2171 = vmatpush1.msra.mxu0 %v2169
        %2172 = vmatprep.subr.mxu0 0.0
        %2173 = vmatpush1.msra.mxu0 %v2168
        %2174 = vmatprep.subr.mxu0 0.0
        %2175 = vmatpush1.msra.mxu0 %v2167
        %2176 = vmatprep.subr.mxu0 0.0
        %2177 = vmatpush1.msra.mxu0 %v2166
        %2178 = vmatprep.subr.mxu0 0.0
        %2179 = vmatpush1.msra.mxu0 %v2165
        %2180 = vmatprep.subr.mxu0 0.0
        %2181 = vmatpush1.msra.mxu0 %v2164
        %2182 = vmatprep.subr.mxu0 0.0
        %2183 = vmatpush1.msra.mxu0 %v2163
        %2184 = vmatprep.subr.mxu0 0.0
        %2185 = vmatpush1.msra.mxu0 %v2162
        %2186 = vmatprep.subr.mxu0 0.0
        %2187 = vmatpush1.msra.mxu0 %v2161
        %2188 = vmatprep.subr.mxu0 0.0
        %2189 = vmatpush1.msra.mxu0 %v2160
        %2190 = vmatprep.subr.mxu0 0.0
        %2191 = vmatpush1.msra.mxu0 %v2159
        %2192 = vmatprep.subr.mxu0 0.0
        %2193 = vmatpush1.msra.mxu0 %v2158
        %2194 = vmatprep.subr.mxu0 0.0
        %2195 = vmatpush1.msra.mxu0 %v2157
        %2196 = vmatprep.subr.mxu0 0.0
        %2197 = vmatpush1.msra.mxu0 %v2156
        %2198 = vmatprep.subr.mxu0 0.0
        %2199 = vmatpush1.msra.mxu0 %v2155
        %2200 = vmatprep.subr.mxu0 0.0
        %2201 = vmatpush1.msra.mxu0 %v2154
        %2202 = vmatprep.subr.mxu0 0.0
        %2203 = vmatpush2.msra.mxu0 0.0
        %2204 = vmatprep.subr.mxu0 0.0
        %2205 = vmatpush2.msra.mxu0 0.0
        %2206 = vmatprep.subr.mxu0 0.0
        %2207 = vmatpush2.msra.mxu0 0.0
        %2208 = vmatprep.subr.mxu0 0.0
        %2209 = vmatpush2.msra.mxu0 0.0
        %2210 = vmatprep.subr.mxu0 0.0
        %2211 = vmatpush2.msra.mxu0 0.0
        %2212 = vmatprep.subr.mxu0 0.0
        %2213 = vmatpush2.msra.mxu0 0.0
        %2214 = vmatprep.subr.mxu0 0.0
        %2215 = vmatpush2.msra.mxu0 0.0
        %2216 = vmatprep.subr.mxu0 0.0
        %2217 = vmatpush2.msra.mxu0 0.0
        %2218 = vmatprep.subr.mxu0 0.0
        %2219 = vmatpush2.msra.mxu0 0.0
        %2220 = vmatprep.subr.mxu0 0.0
        %2221 = vmatpush2.msra.mxu0 0.0
        %2222 = vmatprep.subr.mxu0 0.0
        %2223 = vmatpush2.msra.mxu0 0.0
        %2224 = vmatprep.subr.mxu0 0.0
        %2225 = vmatpush2.msra.mxu0 0.0
        %2226 = vmatprep.subr.mxu0 0.0
        %2227 = vmatpush2.msra.mxu0 0.0
        %2228 = vmatprep.subr.mxu0 0.0
        %2229 = vmatpush2.msra.mxu0 0.0
        %2230 = vmatprep.subr.mxu0 0.0
        %2231 = vmatpush2.msra.mxu0 0.0
        %2232 = vmatprep.subr.mxu0 0.0
        %2233 = vmatpush2.msra.mxu0 0.0
        %2234 = vmatprep.mubr.f32.mxu0 0.0
        %2235 = vmatmul.mubr.f32.gmra.mxu0 %v1874
        %v2236 = vpop.f32.mrf.mxu0
        %v2237 = vadd.f32 0.0, %v2236
        %v2238 = vpop.f32.mrf.mxu0
        %2239 = vmatprep.mubr.f32.mxu0 0.0
        %2240 = vmatmul.mubr.f32.gmra.mxu0 %v1876
        %v2241 = vpop.f32.mrf.mxu0
        %v2242 = vadd.f32 0.0, %v2241
        %v2243 = vpop.f32.mrf.mxu0
        %2244 = vmatprep.mubr.f32.mxu0 0.0
        %2245 = vmatmul.mubr.f32.gmra.mxu0 %v1878
        %v2246 = vpop.f32.mrf.mxu0
        %v2247 = vadd.f32 0.0, %v2246
        %v2248 = vpop.f32.mrf.mxu0
        %2249 = vmatprep.mubr.f32.mxu0 0.0
        %2250 = vmatmul.mubr.f32.gmra.mxu0 %v1880
        %v2251 = vpop.f32.mrf.mxu0
        %v2252 = vadd.f32 0.0, %v2251
        %v2253 = vpop.f32.mrf.mxu0
        %2254 = vmatprep.mubr.f32.mxu0 0.0
        %2255 = vmatmul.mubr.f32.gmra.mxu0 %v1882
        %v2256 = vpop.f32.mrf.mxu0
        %v2257 = vadd.f32 0.0, %v2256
        %v2258 = vpop.f32.mrf.mxu0
        %2259 = vmatprep.mubr.f32.mxu0 0.0
        %2260 = vmatmul.mubr.f32.gmra.mxu0 %v1884
        %v2261 = vpop.f32.mrf.mxu0
        %v2262 = vadd.f32 0.0, %v2261
        %v2263 = vpop.f32.mrf.mxu0
        %2264 = vmatprep.mubr.f32.mxu0 0.0
        %2265 = vmatmul.mubr.f32.gmra.mxu0 %v1886
        %v2266 = vpop.f32.mrf.mxu0
        %v2267 = vadd.f32 0.0, %v2266
        %v2268 = vpop.f32.mrf.mxu0
        %2269 = vmatprep.mubr.f32.mxu0 0.0
        %2270 = vmatmul.mubr.f32.gmra.mxu0 %v1888
        %v2271 = vpop.f32.mrf.mxu0
        %v2272 = vadd.f32 0.0, %v2271
        %v2273 = vpop.f32.mrf.mxu0
        %2274 = vmatprep.mubr.f32.mxu0 0.0
        %2275 = vmatmul.mubr.f32.gmra.mxu0 %v1898
        %v2276 = vpop.f32.mrf.mxu0
        %v2277 = vadd.f32 0.0, %v2276
        %v2278 = vpop.f32.mrf.mxu0
        %2279 = vdwg.mxu0
        %v2280 = vadd.f32 %v2110, %v2237
        %v2281 = vadd.f32 %v2115, %v2242
        %v2282 = vadd.f32 %v2120, %v2247
        %v2283 = vadd.f32 %v2125, %v2252
        %v2284 = vadd.f32 %v2130, %v2257
        %v2285 = vadd.f32 %v2135, %v2262
        %v2286 = vadd.f32 %v2140, %v2267
        %v2287 = vadd.f32 %v2145, %v2272
        %v2288 = vadd.f32 %v2150, %v2277
        %v2289 = vld [vmem:[#allocation5 + $0x3] sm:$0x1]
        %v2290 = vlaneseq
        %v2291 = vshrl.u32 %v2290, 7
        %v2292 = vsub.s32 0, %v2291
        %v2293 = vrot.slane %v2289, %v2292
        %v2294 = vadd.f32 %v2280, %v2293
        %v2295 = vadd.f32 %v2281, %v2293
        %v2296 = vadd.f32 %v2282, %v2293
        %v2297 = vadd.f32 %v2283, %v2293
        %v2298 = vadd.f32 %v2284, %v2293
        %v2299 = vadd.f32 %v2285, %v2293
        %v2300 = vadd.f32 %v2286, %v2293
        %v2301 = vadd.f32 %v2287, %v2293
        %v2302 = vadd.f32 %v2288, %v2293
        %v2303 = vadd.f32 %v1286, %v2294
        %v2304 = vadd.f32 %v1287, %v2295
        %v2305 = vadd.f32 %v1288, %v2296
        %v2306 = vadd.f32 %v1289, %v2297
        %v2307 = vadd.f32 %v1290, %v2298
        %v2308 = vadd.f32 %v1291, %v2299
        %v2309 = vadd.f32 %v1292, %v2300
        %v2310 = vadd.f32 %v1293, %v2301
        %v2311 = vadd.f32 %v1294, %v2302
        %vm2312 = vcmp.gt.f32.partialorder %v2303, 0.0
        %vm2313 = vcmp.gt.f32.partialorder %v2304, 0.0
        %vm2314 = vcmp.gt.f32.partialorder %v2305, 0.0
        %vm2315 = vcmp.gt.f32.partialorder %v2306, 0.0
        %vm2316 = vcmp.gt.f32.partialorder %v2307, 0.0
        %vm2317 = vcmp.gt.f32.partialorder %v2308, 0.0
        %vm2318 = vcmp.gt.f32.partialorder %v2309, 0.0
        %vm2319 = vcmp.gt.f32.partialorder %v2310, 0.0
        %vm2320 = vcmp.gt.f32.partialorder %v2311, 0.0
        %v2321 = vmul.f32 %v2303, 0.01
        %v2322 = vmul.f32 %v2304, 0.01
        %v2323 = vmul.f32 %v2305, 0.01
        %v2324 = vmul.f32 %v2306, 0.01
        %v2325 = vmul.f32 %v2307, 0.01
        %v2326 = vmul.f32 %v2308, 0.01
        %v2327 = vmul.f32 %v2309, 0.01
        %v2328 = vmul.f32 %v2310, 0.01
        %v2329 = vmul.f32 %v2311, 0.01
        %v2330 = vsel %vm2312, %v2303, %v2321
        %v2331 = vsel %vm2313, %v2304, %v2322
        %v2332 = vsel %vm2314, %v2305, %v2323
        %v2333 = vsel %vm2315, %v2306, %v2324
        %v2334 = vsel %vm2316, %v2307, %v2325
        %v2335 = vsel %vm2317, %v2308, %v2326
        %v2336 = vsel %vm2318, %v2309, %v2327
        %v2337 = vsel %vm2319, %v2310, %v2328
        %v2338 = vsel %vm2320, %v2311, %v2329
        %v2339 = vsel %vm297, %v2330, 0.0
        %v2340 = vsel %vm298, %v2331, 0.0
        %v2341 = vsel %vm299, %v2332, 0.0
        %v2342 = vsel %vm300, %v2333, 0.0
        %v2343 = vsel %vm301, %v2334, 0.0
        %v2344 = vsel %vm302, %v2335, 0.0
        %v2345 = vsel %vm303, %v2336, 0.0
        %v2346 = vsel %vm304, %v2337, 0.0
        %v2347 = vsel %vm305, %v2338, 0.0
        %v2356 = vrot.slane %v2339, 7
        %v2357 = vrot.slane %v2340, 7
        %v2358 = vsel %vm324, %v2356, %v2357
        %v2359 = vrot.slane %v2341, 7
        %v2360 = vsel %vm324, %v2357, %v2359
        %v2361 = vrot.slane %v2342, 7
        %v2362 = vsel %vm324, %v2359, %v2361
        %v2363 = vrot.slane %v2343, 7
        %v2364 = vsel %vm324, %v2361, %v2363
        %v2365 = vrot.slane %v2344, 7
        %v2366 = vsel %vm324, %v2363, %v2365
        %v2367 = vrot.slane %v2345, 7
        %v2368 = vsel %vm324, %v2365, %v2367
        %v2369 = vrot.slane %v2346, 7
        %v2370 = vsel %vm324, %v2367, %v2369
        %v2379 = vsel %vm324, 0.0, %v2356
        %v2381 = vrot.slane %v2340, 1
        %v2382 = vrot.slane %v2341, 1
        %v2383 = vsel %vm352, %v2381, %v2382
        %v2384 = vrot.slane %v2342, 1
        %v2385 = vsel %vm352, %v2382, %v2384
        %v2386 = vrot.slane %v2343, 1
        %v2387 = vsel %vm352, %v2384, %v2386
        %v2388 = vrot.slane %v2344, 1
        %v2389 = vsel %vm352, %v2386, %v2388
        %v2390 = vrot.slane %v2345, 1
        %v2391 = vsel %vm352, %v2388, %v2390
        %v2392 = vrot.slane %v2346, 1
        %v2393 = vsel %vm352, %v2390, %v2392
        %v2394 = vrot.slane %v2347, 1
        %v2395 = vsel %vm352, %v2392, %v2394
        %v2404 = vsel %vm352, %v2394, 0.0
        %s2405 = scalar_lea.vmem [#allocation2], 1536
        %v2406 = vld [vmem:[%s2405] sm:$0xff]
        %v2407 = vld [vmem:[%s2405 + $0x8] sm:$0xff]
        %v2408 = vld [vmem:[%s2405 + $0x10] sm:$0xff]
        %v2409 = vld [vmem:[%s2405 + $0x18] sm:$0xff]
        %v2410 = vld [vmem:[%s2405 + $0x20] sm:$0xff]
        %v2411 = vld [vmem:[%s2405 + $0x28] sm:$0xff]
        %v2412 = vld [vmem:[%s2405 + $0x30] sm:$0xff]
        %v2413 = vld [vmem:[%s2405 + $0x38] sm:$0xff]
        %v2414 = vld [vmem:[%s2405 + $0x40] sm:$0xff]
        %v2415 = vld [vmem:[%s2405 + $0x48] sm:$0xff]
        %v2416 = vld [vmem:[%s2405 + $0x50] sm:$0xff]
        %v2417 = vld [vmem:[%s2405 + $0x58] sm:$0xff]
        %v2418 = vld [vmem:[%s2405 + $0x60] sm:$0xff]
        %v2419 = vld [vmem:[%s2405 + $0x68] sm:$0xff]
        %v2420 = vld [vmem:[%s2405 + $0x70] sm:$0xff]
        %v2421 = vld [vmem:[%s2405 + $0x78] sm:$0xff]
        %s2422 = scalar_lea.vmem [#allocation2], 1664
        %v2423 = vld [vmem:[%s2422] sm:$0xff]
        %v2424 = vld [vmem:[%s2422 + $0x8] sm:$0xff]
        %v2425 = vld [vmem:[%s2422 + $0x10] sm:$0xff]
        %v2426 = vld [vmem:[%s2422 + $0x18] sm:$0xff]
        %v2427 = vld [vmem:[%s2422 + $0x20] sm:$0xff]
        %v2428 = vld [vmem:[%s2422 + $0x28] sm:$0xff]
        %v2429 = vld [vmem:[%s2422 + $0x30] sm:$0xff]
        %v2430 = vld [vmem:[%s2422 + $0x38] sm:$0xff]
        %v2431 = vld [vmem:[%s2422 + $0x40] sm:$0xff]
        %v2432 = vld [vmem:[%s2422 + $0x48] sm:$0xff]
        %v2433 = vld [vmem:[%s2422 + $0x50] sm:$0xff]
        %v2434 = vld [vmem:[%s2422 + $0x58] sm:$0xff]
        %v2435 = vld [vmem:[%s2422 + $0x60] sm:$0xff]
        %v2436 = vld [vmem:[%s2422 + $0x68] sm:$0xff]
        %v2437 = vld [vmem:[%s2422 + $0x70] sm:$0xff]
        %v2438 = vld [vmem:[%s2422 + $0x78] sm:$0xff]
        %2439 = vmatprep.subr.mxu0 0.0
        %2440 = vmatpush1.msra.mxu0 %v2438
        %2441 = vmatprep.subr.mxu0 0.0
        %2442 = vmatpush1.msra.mxu0 %v2437
        %2443 = vmatprep.subr.mxu0 0.0
        %2444 = vmatpush1.msra.mxu0 %v2436
        %2445 = vmatprep.subr.mxu0 0.0
        %2446 = vmatpush1.msra.mxu0 %v2435
        %2447 = vmatprep.subr.mxu0 0.0
        %2448 = vmatpush1.msra.mxu0 %v2434
        %2449 = vmatprep.subr.mxu0 0.0
        %2450 = vmatpush1.msra.mxu0 %v2433
        %2451 = vmatprep.subr.mxu0 0.0
        %2452 = vmatpush1.msra.mxu0 %v2432
        %2453 = vmatprep.subr.mxu0 0.0
        %2454 = vmatpush1.msra.mxu0 %v2431
        %2455 = vmatprep.subr.mxu0 0.0
        %2456 = vmatpush1.msra.mxu0 %v2430
        %2457 = vmatprep.subr.mxu0 0.0
        %2458 = vmatpush1.msra.mxu0 %v2429
        %2459 = vmatprep.subr.mxu0 0.0
        %2460 = vmatpush1.msra.mxu0 %v2428
        %2461 = vmatprep.subr.mxu0 0.0
        %2462 = vmatpush1.msra.mxu0 %v2427
        %2463 = vmatprep.subr.mxu0 0.0
        %2464 = vmatpush1.msra.mxu0 %v2426
        %2465 = vmatprep.subr.mxu0 0.0
        %2466 = vmatpush1.msra.mxu0 %v2425
        %2467 = vmatprep.subr.mxu0 0.0
        %2468 = vmatpush1.msra.mxu0 %v2424
        %2469 = vmatprep.subr.mxu0 0.0
        %2470 = vmatpush1.msra.mxu0 %v2423
        %2471 = vmatprep.subr.mxu0 0.0
        %2472 = vmatpush2.msra.mxu0 0.0
        %2473 = vmatprep.subr.mxu0 0.0
        %2474 = vmatpush2.msra.mxu0 0.0
        %2475 = vmatprep.subr.mxu0 0.0
        %2476 = vmatpush2.msra.mxu0 0.0
        %2477 = vmatprep.subr.mxu0 0.0
        %2478 = vmatpush2.msra.mxu0 0.0
        %2479 = vmatprep.subr.mxu0 0.0
        %2480 = vmatpush2.msra.mxu0 0.0
        %2481 = vmatprep.subr.mxu0 0.0
        %2482 = vmatpush2.msra.mxu0 0.0
        %2483 = vmatprep.subr.mxu0 0.0
        %2484 = vmatpush2.msra.mxu0 0.0
        %2485 = vmatprep.subr.mxu0 0.0
        %2486 = vmatpush2.msra.mxu0 0.0
        %2487 = vmatprep.subr.mxu0 0.0
        %2488 = vmatpush2.msra.mxu0 0.0
        %2489 = vmatprep.subr.mxu0 0.0
        %2490 = vmatpush2.msra.mxu0 0.0
        %2491 = vmatprep.subr.mxu0 0.0
        %2492 = vmatpush2.msra.mxu0 0.0
        %2493 = vmatprep.subr.mxu0 0.0
        %2494 = vmatpush2.msra.mxu0 0.0
        %2495 = vmatprep.subr.mxu0 0.0
        %2496 = vmatpush2.msra.mxu0 0.0
        %2497 = vmatprep.subr.mxu0 0.0
        %2498 = vmatpush2.msra.mxu0 0.0
        %2499 = vmatprep.subr.mxu0 0.0
        %2500 = vmatpush2.msra.mxu0 0.0
        %2501 = vmatprep.subr.mxu0 0.0
        %2502 = vmatpush2.msra.mxu0 0.0
        %2503 = vmatprep.mubr.f32.mxu0 0.0
        %2504 = vmatmul.mubr.f32.gmra.mxu0 %v2339
        %v2505 = vpop.f32.mrf.mxu0
        %v2506 = vadd.f32 0.0, %v2505
        %v2507 = vpop.f32.mrf.mxu0
        %2508 = vmatprep.mubr.f32.mxu0 0.0
        %2509 = vmatmul.mubr.f32.gmra.mxu0 %v2340
        %v2510 = vpop.f32.mrf.mxu0
        %v2511 = vadd.f32 0.0, %v2510
        %v2512 = vpop.f32.mrf.mxu0
        %2513 = vmatprep.mubr.f32.mxu0 0.0
        %2514 = vmatmul.mubr.f32.gmra.mxu0 %v2341
        %v2515 = vpop.f32.mrf.mxu0
        %v2516 = vadd.f32 0.0, %v2515
        %v2517 = vpop.f32.mrf.mxu0
        %2518 = vmatprep.mubr.f32.mxu0 0.0
        %2519 = vmatmul.mubr.f32.gmra.mxu0 %v2342
        %v2520 = vpop.f32.mrf.mxu0
        %v2521 = vadd.f32 0.0, %v2520
        %v2522 = vpop.f32.mrf.mxu0
        %2523 = vmatprep.mubr.f32.mxu0 0.0
        %2524 = vmatmul.mubr.f32.gmra.mxu0 %v2343
        %v2525 = vpop.f32.mrf.mxu0
        %v2526 = vadd.f32 0.0, %v2525
        %v2527 = vpop.f32.mrf.mxu0
        %2528 = vmatprep.mubr.f32.mxu0 0.0
        %2529 = vmatmul.mubr.f32.gmra.mxu0 %v2344
        %v2530 = vpop.f32.mrf.mxu0
        %v2531 = vadd.f32 0.0, %v2530
        %v2532 = vpop.f32.mrf.mxu0
        %2533 = vmatprep.mubr.f32.mxu0 0.0
        %2534 = vmatmul.mubr.f32.gmra.mxu0 %v2345
        %v2535 = vpop.f32.mrf.mxu0
        %v2536 = vadd.f32 0.0, %v2535
        %v2537 = vpop.f32.mrf.mxu0
        %2538 = vmatprep.mubr.f32.mxu0 0.0
        %2539 = vmatmul.mubr.f32.gmra.mxu0 %v2346
        %v2540 = vpop.f32.mrf.mxu0
        %v2541 = vadd.f32 0.0, %v2540
        %v2542 = vpop.f32.mrf.mxu0
        %2543 = vmatprep.mubr.f32.mxu0 0.0
        %2544 = vmatmul.mubr.f32.gmra.mxu0 %v2347
        %v2545 = vpop.f32.mrf.mxu0
        %v2546 = vadd.f32 0.0, %v2545
        %v2547 = vpop.f32.mrf.mxu0
        %2548 = vdwg.mxu0
        %2549 = vmatprep.subr.mxu0 0.0
        %2550 = vmatpush1.msra.mxu0 %v2421
        %2551 = vmatprep.subr.mxu0 0.0
        %2552 = vmatpush1.msra.mxu0 %v2420
        %2553 = vmatprep.subr.mxu0 0.0
        %2554 = vmatpush1.msra.mxu0 %v2419
        %2555 = vmatprep.subr.mxu0 0.0
        %2556 = vmatpush1.msra.mxu0 %v2418
        %2557 = vmatprep.subr.mxu0 0.0
        %2558 = vmatpush1.msra.mxu0 %v2417
        %2559 = vmatprep.subr.mxu0 0.0
        %2560 = vmatpush1.msra.mxu0 %v2416
        %2561 = vmatprep.subr.mxu0 0.0
        %2562 = vmatpush1.msra.mxu0 %v2415
        %2563 = vmatprep.subr.mxu0 0.0
        %2564 = vmatpush1.msra.mxu0 %v2414
        %2565 = vmatprep.subr.mxu0 0.0
        %2566 = vmatpush1.msra.mxu0 %v2413
        %2567 = vmatprep.subr.mxu0 0.0
        %2568 = vmatpush1.msra.mxu0 %v2412
        %2569 = vmatprep.subr.mxu0 0.0
        %2570 = vmatpush1.msra.mxu0 %v2411
        %2571 = vmatprep.subr.mxu0 0.0
        %2572 = vmatpush1.msra.mxu0 %v2410
        %2573 = vmatprep.subr.mxu0 0.0
        %2574 = vmatpush1.msra.mxu0 %v2409
        %2575 = vmatprep.subr.mxu0 0.0
        %2576 = vmatpush1.msra.mxu0 %v2408
        %2577 = vmatprep.subr.mxu0 0.0
        %2578 = vmatpush1.msra.mxu0 %v2407
        %2579 = vmatprep.subr.mxu0 0.0
        %2580 = vmatpush1.msra.mxu0 %v2406
        %2581 = vmatprep.subr.mxu0 0.0
        %2582 = vmatpush2.msra.mxu0 0.0
        %2583 = vmatprep.subr.mxu0 0.0
        %2584 = vmatpush2.msra.mxu0 0.0
        %2585 = vmatprep.subr.mxu0 0.0
        %2586 = vmatpush2.msra.mxu0 0.0
        %2587 = vmatprep.subr.mxu0 0.0
        %2588 = vmatpush2.msra.mxu0 0.0
        %2589 = vmatprep.subr.mxu0 0.0
        %2590 = vmatpush2.msra.mxu0 0.0
        %2591 = vmatprep.subr.mxu0 0.0
        %2592 = vmatpush2.msra.mxu0 0.0
        %2593 = vmatprep.subr.mxu0 0.0
        %2594 = vmatpush2.msra.mxu0 0.0
        %2595 = vmatprep.subr.mxu0 0.0
        %2596 = vmatpush2.msra.mxu0 0.0
        %2597 = vmatprep.subr.mxu0 0.0
        %2598 = vmatpush2.msra.mxu0 0.0
        %2599 = vmatprep.subr.mxu0 0.0
        %2600 = vmatpush2.msra.mxu0 0.0
        %2601 = vmatprep.subr.mxu0 0.0
        %2602 = vmatpush2.msra.mxu0 0.0
        %2603 = vmatprep.subr.mxu0 0.0
        %2604 = vmatpush2.msra.mxu0 0.0
        %2605 = vmatprep.subr.mxu0 0.0
        %2606 = vmatpush2.msra.mxu0 0.0
        %2607 = vmatprep.subr.mxu0 0.0
        %2608 = vmatpush2.msra.mxu0 0.0
        %2609 = vmatprep.subr.mxu0 0.0
        %2610 = vmatpush2.msra.mxu0 0.0
        %2611 = vmatprep.subr.mxu0 0.0
        %2612 = vmatpush2.msra.mxu0 0.0
        %2613 = vmatprep.mubr.f32.mxu0 0.0
        %2614 = vmatmul.mubr.f32.gmra.mxu0 0.0
        %v2615 = vpop.f32.mrf.mxu0
        %v2616 = vadd.f32 %v2506, %v2615
        %v2617 = vpop.f32.mrf.mxu0
        %2618 = vmatprep.mubr.f32.mxu0 0.0
        %2619 = vmatmul.mubr.f32.gmra.mxu0 %v2379
        %v2620 = vpop.f32.mrf.mxu0
        %v2621 = vadd.f32 %v2511, %v2620
        %v2622 = vpop.f32.mrf.mxu0
        %2623 = vmatprep.mubr.f32.mxu0 0.0
        %2624 = vmatmul.mubr.f32.gmra.mxu0 %v2358
        %v2625 = vpop.f32.mrf.mxu0
        %v2626 = vadd.f32 %v2516, %v2625
        %v2627 = vpop.f32.mrf.mxu0
        %2628 = vmatprep.mubr.f32.mxu0 0.0
        %2629 = vmatmul.mubr.f32.gmra.mxu0 %v2360
        %v2630 = vpop.f32.mrf.mxu0
        %v2631 = vadd.f32 %v2521, %v2630
        %v2632 = vpop.f32.mrf.mxu0
        %2633 = vmatprep.mubr.f32.mxu0 0.0
        %2634 = vmatmul.mubr.f32.gmra.mxu0 %v2362
        %v2635 = vpop.f32.mrf.mxu0
        %v2636 = vadd.f32 %v2526, %v2635
        %v2637 = vpop.f32.mrf.mxu0
        %2638 = vmatprep.mubr.f32.mxu0 0.0
        %2639 = vmatmul.mubr.f32.gmra.mxu0 %v2364
        %v2640 = vpop.f32.mrf.mxu0
        %v2641 = vadd.f32 %v2531, %v2640
        %v2642 = vpop.f32.mrf.mxu0
        %2643 = vmatprep.mubr.f32.mxu0 0.0
        %2644 = vmatmul.mubr.f32.gmra.mxu0 %v2366
        %v2645 = vpop.f32.mrf.mxu0
        %v2646 = vadd.f32 %v2536, %v2645
        %v2647 = vpop.f32.mrf.mxu0
        %2648 = vmatprep.mubr.f32.mxu0 0.0
        %2649 = vmatmul.mubr.f32.gmra.mxu0 %v2368
        %v2650 = vpop.f32.mrf.mxu0
        %v2651 = vadd.f32 %v2541, %v2650
        %v2652 = vpop.f32.mrf.mxu0
        %2653 = vmatprep.mubr.f32.mxu0 0.0
        %2654 = vmatmul.mubr.f32.gmra.mxu0 %v2370
        %v2655 = vpop.f32.mrf.mxu0
        %v2656 = vadd.f32 %v2546, %v2655
        %v2657 = vpop.f32.mrf.mxu0
        %2658 = vdwg.mxu0
        %s2659 = scalar_lea.vmem [#allocation2], 1792
        %v2660 = vld [vmem:[%s2659] sm:$0xff]
        %v2661 = vld [vmem:[%s2659 + $0x8] sm:$0xff]
        %v2662 = vld [vmem:[%s2659 + $0x10] sm:$0xff]
        %v2663 = vld [vmem:[%s2659 + $0x18] sm:$0xff]
        %v2664 = vld [vmem:[%s2659 + $0x20] sm:$0xff]
        %v2665 = vld [vmem:[%s2659 + $0x28] sm:$0xff]
        %v2666 = vld [vmem:[%s2659 + $0x30] sm:$0xff]
        %v2667 = vld [vmem:[%s2659 + $0x38] sm:$0xff]
        %v2668 = vld [vmem:[%s2659 + $0x40] sm:$0xff]
        %v2669 = vld [vmem:[%s2659 + $0x48] sm:$0xff]
        %v2670 = vld [vmem:[%s2659 + $0x50] sm:$0xff]
        %v2671 = vld [vmem:[%s2659 + $0x58] sm:$0xff]
        %v2672 = vld [vmem:[%s2659 + $0x60] sm:$0xff]
        %v2673 = vld [vmem:[%s2659 + $0x68] sm:$0xff]
        %v2674 = vld [vmem:[%s2659 + $0x70] sm:$0xff]
        %v2675 = vld [vmem:[%s2659 + $0x78] sm:$0xff]
        %2676 = vmatprep.subr.mxu0 0.0
        %2677 = vmatpush1.msra.mxu0 %v2675
        %2678 = vmatprep.subr.mxu0 0.0
        %2679 = vmatpush1.msra.mxu0 %v2674
        %2680 = vmatprep.subr.mxu0 0.0
        %2681 = vmatpush1.msra.mxu0 %v2673
        %2682 = vmatprep.subr.mxu0 0.0
        %2683 = vmatpush1.msra.mxu0 %v2672
        %2684 = vmatprep.subr.mxu0 0.0
        %2685 = vmatpush1.msra.mxu0 %v2671
        %2686 = vmatprep.subr.mxu0 0.0
        %2687 = vmatpush1.msra.mxu0 %v2670
        %2688 = vmatprep.subr.mxu0 0.0
        %2689 = vmatpush1.msra.mxu0 %v2669
        %2690 = vmatprep.subr.mxu0 0.0
        %2691 = vmatpush1.msra.mxu0 %v2668
        %2692 = vmatprep.subr.mxu0 0.0
        %2693 = vmatpush1.msra.mxu0 %v2667
        %2694 = vmatprep.subr.mxu0 0.0
        %2695 = vmatpush1.msra.mxu0 %v2666
        %2696 = vmatprep.subr.mxu0 0.0
        %2697 = vmatpush1.msra.mxu0 %v2665
        %2698 = vmatprep.subr.mxu0 0.0
        %2699 = vmatpush1.msra.mxu0 %v2664
        %2700 = vmatprep.subr.mxu0 0.0
        %2701 = vmatpush1.msra.mxu0 %v2663
        %2702 = vmatprep.subr.mxu0 0.0
        %2703 = vmatpush1.msra.mxu0 %v2662
        %2704 = vmatprep.subr.mxu0 0.0
        %2705 = vmatpush1.msra.mxu0 %v2661
        %2706 = vmatprep.subr.mxu0 0.0
        %2707 = vmatpush1.msra.mxu0 %v2660
        %2708 = vmatprep.subr.mxu0 0.0
        %2709 = vmatpush2.msra.mxu0 0.0
        %2710 = vmatprep.subr.mxu0 0.0
        %2711 = vmatpush2.msra.mxu0 0.0
        %2712 = vmatprep.subr.mxu0 0.0
        %2713 = vmatpush2.msra.mxu0 0.0
        %2714 = vmatprep.subr.mxu0 0.0
        %2715 = vmatpush2.msra.mxu0 0.0
        %2716 = vmatprep.subr.mxu0 0.0
        %2717 = vmatpush2.msra.mxu0 0.0
        %2718 = vmatprep.subr.mxu0 0.0
        %2719 = vmatpush2.msra.mxu0 0.0
        %2720 = vmatprep.subr.mxu0 0.0
        %2721 = vmatpush2.msra.mxu0 0.0
        %2722 = vmatprep.subr.mxu0 0.0
        %2723 = vmatpush2.msra.mxu0 0.0
        %2724 = vmatprep.subr.mxu0 0.0
        %2725 = vmatpush2.msra.mxu0 0.0
        %2726 = vmatprep.subr.mxu0 0.0
        %2727 = vmatpush2.msra.mxu0 0.0
        %2728 = vmatprep.subr.mxu0 0.0
        %2729 = vmatpush2.msra.mxu0 0.0
        %2730 = vmatprep.subr.mxu0 0.0
        %2731 = vmatpush2.msra.mxu0 0.0
        %2732 = vmatprep.subr.mxu0 0.0
        %2733 = vmatpush2.msra.mxu0 0.0
        %2734 = vmatprep.subr.mxu0 0.0
        %2735 = vmatpush2.msra.mxu0 0.0
        %2736 = vmatprep.subr.mxu0 0.0
        %2737 = vmatpush2.msra.mxu0 0.0
        %2738 = vmatprep.subr.mxu0 0.0
        %2739 = vmatpush2.msra.mxu0 0.0
        %2740 = vmatprep.mubr.f32.mxu0 0.0
        %2741 = vmatmul.mubr.f32.gmra.mxu0 %v2383
        %v2742 = vpop.f32.mrf.mxu0
        %v2743 = vadd.f32 0.0, %v2742
        %v2744 = vpop.f32.mrf.mxu0
        %2745 = vmatprep.mubr.f32.mxu0 0.0
        %2746 = vmatmul.mubr.f32.gmra.mxu0 %v2385
        %v2747 = vpop.f32.mrf.mxu0
        %v2748 = vadd.f32 0.0, %v2747
        %v2749 = vpop.f32.mrf.mxu0
        %2750 = vmatprep.mubr.f32.mxu0 0.0
        %2751 = vmatmul.mubr.f32.gmra.mxu0 %v2387
        %v2752 = vpop.f32.mrf.mxu0
        %v2753 = vadd.f32 0.0, %v2752
        %v2754 = vpop.f32.mrf.mxu0
        %2755 = vmatprep.mubr.f32.mxu0 0.0
        %2756 = vmatmul.mubr.f32.gmra.mxu0 %v2389
        %v2757 = vpop.f32.mrf.mxu0
        %v2758 = vadd.f32 0.0, %v2757
        %v2759 = vpop.f32.mrf.mxu0
        %2760 = vmatprep.mubr.f32.mxu0 0.0
        %2761 = vmatmul.mubr.f32.gmra.mxu0 %v2391
        %v2762 = vpop.f32.mrf.mxu0
        %v2763 = vadd.f32 0.0, %v2762
        %v2764 = vpop.f32.mrf.mxu0
        %2765 = vmatprep.mubr.f32.mxu0 0.0
        %2766 = vmatmul.mubr.f32.gmra.mxu0 %v2393
        %v2767 = vpop.f32.mrf.mxu0
        %v2768 = vadd.f32 0.0, %v2767
        %v2769 = vpop.f32.mrf.mxu0
        %2770 = vmatprep.mubr.f32.mxu0 0.0
        %2771 = vmatmul.mubr.f32.gmra.mxu0 %v2395
        %v2772 = vpop.f32.mrf.mxu0
        %v2773 = vadd.f32 0.0, %v2772
        %v2774 = vpop.f32.mrf.mxu0
        %2775 = vmatprep.mubr.f32.mxu0 0.0
        %2776 = vmatmul.mubr.f32.gmra.mxu0 %v2404
        %v2777 = vpop.f32.mrf.mxu0
        %v2778 = vadd.f32 0.0, %v2777
        %v2779 = vpop.f32.mrf.mxu0
        %2780 = vmatprep.mubr.f32.mxu0 0.0
        %2781 = vmatmul.mubr.f32.gmra.mxu0 0.0
        %v2782 = vpop.f32.mrf.mxu0
        %v2783 = vadd.f32 0.0, %v2782
        %v2784 = vpop.f32.mrf.mxu0
        %2785 = vdwg.mxu0
        %v2786 = vadd.f32 %v2616, %v2743
        %v2787 = vadd.f32 %v2621, %v2748
        %v2788 = vadd.f32 %v2626, %v2753
        %v2789 = vadd.f32 %v2631, %v2758
        %v2790 = vadd.f32 %v2636, %v2763
        %v2791 = vadd.f32 %v2641, %v2768
        %v2792 = vadd.f32 %v2646, %v2773
        %v2793 = vadd.f32 %v2651, %v2778
        %v2794 = vadd.f32 %v2656, %v2783
        %v2795 = vld [vmem:[#allocation5 + $0x4] sm:$0x1]
        %v2796 = vlaneseq
        %v2797 = vshrl.u32 %v2796, 7
        %v2798 = vsub.s32 0, %v2797
        %v2799 = vrot.slane %v2795, %v2798
        %v2800 = vadd.f32 %v2786, %v2799
        %v2801 = vadd.f32 %v2787, %v2799
        %v2802 = vadd.f32 %v2788, %v2799
        %v2803 = vadd.f32 %v2789, %v2799
        %v2804 = vadd.f32 %v2790, %v2799
        %v2805 = vadd.f32 %v2791, %v2799
        %v2806 = vadd.f32 %v2792, %v2799
        %v2807 = vadd.f32 %v2793, %v2799
        %v2808 = vadd.f32 %v2794, %v2799
        %vm2809 = vcmp.gt.f32.partialorder %v2800, 0.0
        %vm2810 = vcmp.gt.f32.partialorder %v2801, 0.0
        %vm2811 = vcmp.gt.f32.partialorder %v2802, 0.0
        %vm2812 = vcmp.gt.f32.partialorder %v2803, 0.0
        %vm2813 = vcmp.gt.f32.partialorder %v2804, 0.0
        %vm2814 = vcmp.gt.f32.partialorder %v2805, 0.0
        %vm2815 = vcmp.gt.f32.partialorder %v2806, 0.0
        %vm2816 = vcmp.gt.f32.partialorder %v2807, 0.0
        %vm2817 = vcmp.gt.f32.partialorder %v2808, 0.0
        %v2818 = vmul.f32 %v2800, 0.01
        %v2819 = vmul.f32 %v2801, 0.01
        %v2820 = vmul.f32 %v2802, 0.01
        %v2821 = vmul.f32 %v2803, 0.01
        %v2822 = vmul.f32 %v2804, 0.01
        %v2823 = vmul.f32 %v2805, 0.01
        %v2824 = vmul.f32 %v2806, 0.01
        %v2825 = vmul.f32 %v2807, 0.01
        %v2826 = vmul.f32 %v2808, 0.01
        %v2827 = vsel %vm2809, %v2800, %v2818
        %v2828 = vsel %vm2810, %v2801, %v2819
        %v2829 = vsel %vm2811, %v2802, %v2820
        %v2830 = vsel %vm2812, %v2803, %v2821
        %v2831 = vsel %vm2813, %v2804, %v2822
        %v2832 = vsel %vm2814, %v2805, %v2823
        %v2833 = vsel %vm2815, %v2806, %v2824
        %v2834 = vsel %vm2816, %v2807, %v2825
        %v2835 = vsel %vm2817, %v2808, %v2826
        %v2836 = vsel %vm297, %v2827, 0.0
        %v2837 = vsel %vm298, %v2828, 0.0
        %v2838 = vsel %vm299, %v2829, 0.0
        %v2839 = vsel %vm300, %v2830, 0.0
        %v2840 = vsel %vm301, %v2831, 0.0
        %v2841 = vsel %vm302, %v2832, 0.0
        %v2842 = vsel %vm303, %v2833, 0.0
        %v2843 = vsel %vm304, %v2834, 0.0
        %v2844 = vsel %vm305, %v2835, 0.0
        %v2854 = vrot.slane %v2836, 7
        %v2855 = vrot.slane %v2837, 7
        %v2856 = vsel %vm324, %v2854, %v2855
        %v2857 = vrot.slane %v2838, 7
        %v2858 = vsel %vm324, %v2855, %v2857
        %v2859 = vrot.slane %v2839, 7
        %v2860 = vsel %vm324, %v2857, %v2859
        %v2861 = vrot.slane %v2840, 7
        %v2862 = vsel %vm324, %v2859, %v2861
        %v2863 = vrot.slane %v2841, 7
        %v2864 = vsel %vm324, %v2861, %v2863
        %v2865 = vrot.slane %v2842, 7
        %v2866 = vsel %vm324, %v2863, %v2865
        %v2867 = vrot.slane %v2843, 7
        %v2868 = vsel %vm324, %v2865, %v2867
        %v2869 = vrot.slane %v2844, 7
        %v2870 = vsel %vm324, %v2867, %v2869
        %v2880 = vsel %vm324, 0.0, %v2854
        %v2881 = vrot.slane %v2836, 1
        %v2882 = vrot.slane %v2837, 1
        %v2883 = vsel %vm352, %v2881, %v2882
        %v2884 = vrot.slane %v2838, 1
        %v2885 = vsel %vm352, %v2882, %v2884
        %v2886 = vrot.slane %v2839, 1
        %v2887 = vsel %vm352, %v2884, %v2886
        %v2888 = vrot.slane %v2840, 1
        %v2889 = vsel %vm352, %v2886, %v2888
        %v2890 = vrot.slane %v2841, 1
        %v2891 = vsel %vm352, %v2888, %v2890
        %v2892 = vrot.slane %v2842, 1
        %v2893 = vsel %vm352, %v2890, %v2892
        %v2894 = vrot.slane %v2843, 1
        %v2895 = vsel %vm352, %v2892, %v2894
        %v2896 = vrot.slane %v2844, 1
        %v2897 = vsel %vm352, %v2894, %v2896
        %v2907 = vsel %vm352, %v2896, 0.0
        %s2908 = scalar_lea.vmem [#allocation2], 1920
        %v2909 = vld [vmem:[%s2908] sm:$0xff]
        %v2910 = vld [vmem:[%s2908 + $0x8] sm:$0xff]
        %v2911 = vld [vmem:[%s2908 + $0x10] sm:$0xff]
        %v2912 = vld [vmem:[%s2908 + $0x18] sm:$0xff]
        %v2913 = vld [vmem:[%s2908 + $0x20] sm:$0xff]
        %v2914 = vld [vmem:[%s2908 + $0x28] sm:$0xff]
        %v2915 = vld [vmem:[%s2908 + $0x30] sm:$0xff]
        %v2916 = vld [vmem:[%s2908 + $0x38] sm:$0xff]
        %v2917 = vld [vmem:[%s2908 + $0x40] sm:$0xff]
        %v2918 = vld [vmem:[%s2908 + $0x48] sm:$0xff]
        %v2919 = vld [vmem:[%s2908 + $0x50] sm:$0xff]
        %v2920 = vld [vmem:[%s2908 + $0x58] sm:$0xff]
        %v2921 = vld [vmem:[%s2908 + $0x60] sm:$0xff]
        %v2922 = vld [vmem:[%s2908 + $0x68] sm:$0xff]
        %v2923 = vld [vmem:[%s2908 + $0x70] sm:$0xff]
        %v2924 = vld [vmem:[%s2908 + $0x78] sm:$0xff]
        %s2925 = scalar_lea.vmem [#allocation2], 2048
        %v2926 = vld [vmem:[%s2925] sm:$0xff]
        %v2927 = vld [vmem:[%s2925 + $0x8] sm:$0xff]
        %v2928 = vld [vmem:[%s2925 + $0x10] sm:$0xff]
        %v2929 = vld [vmem:[%s2925 + $0x18] sm:$0xff]
        %v2930 = vld [vmem:[%s2925 + $0x20] sm:$0xff]
        %v2931 = vld [vmem:[%s2925 + $0x28] sm:$0xff]
        %v2932 = vld [vmem:[%s2925 + $0x30] sm:$0xff]
        %v2933 = vld [vmem:[%s2925 + $0x38] sm:$0xff]
        %v2934 = vld [vmem:[%s2925 + $0x40] sm:$0xff]
        %v2935 = vld [vmem:[%s2925 + $0x48] sm:$0xff]
        %v2936 = vld [vmem:[%s2925 + $0x50] sm:$0xff]
        %v2937 = vld [vmem:[%s2925 + $0x58] sm:$0xff]
        %v2938 = vld [vmem:[%s2925 + $0x60] sm:$0xff]
        %v2939 = vld [vmem:[%s2925 + $0x68] sm:$0xff]
        %v2940 = vld [vmem:[%s2925 + $0x70] sm:$0xff]
        %v2941 = vld [vmem:[%s2925 + $0x78] sm:$0xff]
        %2942 = vmatprep.subr.mxu0 0.0
        %2943 = vmatpush1.msra.mxu0 %v2941
        %2944 = vmatprep.subr.mxu0 0.0
        %2945 = vmatpush1.msra.mxu0 %v2940
        %2946 = vmatprep.subr.mxu0 0.0
        %2947 = vmatpush1.msra.mxu0 %v2939
        %2948 = vmatprep.subr.mxu0 0.0
        %2949 = vmatpush1.msra.mxu0 %v2938
        %2950 = vmatprep.subr.mxu0 0.0
        %2951 = vmatpush1.msra.mxu0 %v2937
        %2952 = vmatprep.subr.mxu0 0.0
        %2953 = vmatpush1.msra.mxu0 %v2936
        %2954 = vmatprep.subr.mxu0 0.0
        %2955 = vmatpush1.msra.mxu0 %v2935
        %2956 = vmatprep.subr.mxu0 0.0
        %2957 = vmatpush1.msra.mxu0 %v2934
        %2958 = vmatprep.subr.mxu0 0.0
        %2959 = vmatpush1.msra.mxu0 %v2933
        %2960 = vmatprep.subr.mxu0 0.0
        %2961 = vmatpush1.msra.mxu0 %v2932
        %2962 = vmatprep.subr.mxu0 0.0
        %2963 = vmatpush1.msra.mxu0 %v2931
        %2964 = vmatprep.subr.mxu0 0.0
        %2965 = vmatpush1.msra.mxu0 %v2930
        %2966 = vmatprep.subr.mxu0 0.0
        %2967 = vmatpush1.msra.mxu0 %v2929
        %2968 = vmatprep.subr.mxu0 0.0
        %2969 = vmatpush1.msra.mxu0 %v2928
        %2970 = vmatprep.subr.mxu0 0.0
        %2971 = vmatpush1.msra.mxu0 %v2927
        %2972 = vmatprep.subr.mxu0 0.0
        %2973 = vmatpush1.msra.mxu0 %v2926
        %2974 = vmatprep.subr.mxu0 0.0
        %2975 = vmatpush2.msra.mxu0 0.0
        %2976 = vmatprep.subr.mxu0 0.0
        %2977 = vmatpush2.msra.mxu0 0.0
        %2978 = vmatprep.subr.mxu0 0.0
        %2979 = vmatpush2.msra.mxu0 0.0
        %2980 = vmatprep.subr.mxu0 0.0
        %2981 = vmatpush2.msra.mxu0 0.0
        %2982 = vmatprep.subr.mxu0 0.0
        %2983 = vmatpush2.msra.mxu0 0.0
        %2984 = vmatprep.subr.mxu0 0.0
        %2985 = vmatpush2.msra.mxu0 0.0
        %2986 = vmatprep.subr.mxu0 0.0
        %2987 = vmatpush2.msra.mxu0 0.0
        %2988 = vmatprep.subr.mxu0 0.0
        %2989 = vmatpush2.msra.mxu0 0.0
        %2990 = vmatprep.subr.mxu0 0.0
        %2991 = vmatpush2.msra.mxu0 0.0
        %2992 = vmatprep.subr.mxu0 0.0
        %2993 = vmatpush2.msra.mxu0 0.0
        %2994 = vmatprep.subr.mxu0 0.0
        %2995 = vmatpush2.msra.mxu0 0.0
        %2996 = vmatprep.subr.mxu0 0.0
        %2997 = vmatpush2.msra.mxu0 0.0
        %2998 = vmatprep.subr.mxu0 0.0
        %2999 = vmatpush2.msra.mxu0 0.0
        %3000 = vmatprep.subr.mxu0 0.0
        %3001 = vmatpush2.msra.mxu0 0.0
        %3002 = vmatprep.subr.mxu0 0.0
        %3003 = vmatpush2.msra.mxu0 0.0
        %3004 = vmatprep.subr.mxu0 0.0
        %3005 = vmatpush2.msra.mxu0 0.0
        %3006 = vmatprep.mubr.f32.mxu0 0.0
        %3007 = vmatmul.mubr.f32.gmra.mxu0 %v2836
        %v3008 = vpop.f32.mrf.mxu0
        %v3009 = vpop.f32.mrf.mxu0
        %3010 = vmatprep.mubr.f32.mxu0 0.0
        %3011 = vmatmul.mubr.f32.gmra.mxu0 %v2837
        %v3012 = vpop.f32.mrf.mxu0
        %v3013 = vpop.f32.mrf.mxu0
        %3014 = vmatprep.mubr.f32.mxu0 0.0
        %3015 = vmatmul.mubr.f32.gmra.mxu0 %v2838
        %v3016 = vpop.f32.mrf.mxu0
        %v3017 = vadd.f32 0.0, %v3016
        %v3018 = vpop.f32.mrf.mxu0
        %3019 = vmatprep.mubr.f32.mxu0 0.0
        %3020 = vmatmul.mubr.f32.gmra.mxu0 %v2839
        %v3021 = vpop.f32.mrf.mxu0
        %v3022 = vadd.f32 0.0, %v3021
        %v3023 = vpop.f32.mrf.mxu0
        %3024 = vmatprep.mubr.f32.mxu0 0.0
        %3025 = vmatmul.mubr.f32.gmra.mxu0 %v2840
        %v3026 = vpop.f32.mrf.mxu0
        %v3027 = vadd.f32 0.0, %v3026
        %v3028 = vpop.f32.mrf.mxu0
        %3029 = vmatprep.mubr.f32.mxu0 0.0
        %3030 = vmatmul.mubr.f32.gmra.mxu0 %v2841
        %v3031 = vpop.f32.mrf.mxu0
        %v3032 = vadd.f32 0.0, %v3031
        %v3033 = vpop.f32.mrf.mxu0
        %3034 = vmatprep.mubr.f32.mxu0 0.0
        %3035 = vmatmul.mubr.f32.gmra.mxu0 %v2842
        %v3036 = vpop.f32.mrf.mxu0
        %v3037 = vadd.f32 0.0, %v3036
        %v3038 = vpop.f32.mrf.mxu0
        %3039 = vmatprep.mubr.f32.mxu0 0.0
        %3040 = vmatmul.mubr.f32.gmra.mxu0 %v2843
        %v3041 = vpop.f32.mrf.mxu0
        %v3042 = vpop.f32.mrf.mxu0
        %3043 = vmatprep.mubr.f32.mxu0 0.0
        %3044 = vmatmul.mubr.f32.gmra.mxu0 %v2844
        %v3045 = vpop.f32.mrf.mxu0
        %v3046 = vpop.f32.mrf.mxu0
        %3047 = vdwg.mxu0
        %3048 = vmatprep.subr.mxu0 0.0
        %3049 = vmatpush1.msra.mxu0 %v2924
        %3050 = vmatprep.subr.mxu0 0.0
        %3051 = vmatpush1.msra.mxu0 %v2923
        %3052 = vmatprep.subr.mxu0 0.0
        %3053 = vmatpush1.msra.mxu0 %v2922
        %3054 = vmatprep.subr.mxu0 0.0
        %3055 = vmatpush1.msra.mxu0 %v2921
        %3056 = vmatprep.subr.mxu0 0.0
        %3057 = vmatpush1.msra.mxu0 %v2920
        %3058 = vmatprep.subr.mxu0 0.0
        %3059 = vmatpush1.msra.mxu0 %v2919
        %3060 = vmatprep.subr.mxu0 0.0
        %3061 = vmatpush1.msra.mxu0 %v2918
        %3062 = vmatprep.subr.mxu0 0.0
        %3063 = vmatpush1.msra.mxu0 %v2917
        %3064 = vmatprep.subr.mxu0 0.0
        %3065 = vmatpush1.msra.mxu0 %v2916
        %3066 = vmatprep.subr.mxu0 0.0
        %3067 = vmatpush1.msra.mxu0 %v2915
        %3068 = vmatprep.subr.mxu0 0.0
        %3069 = vmatpush1.msra.mxu0 %v2914
        %3070 = vmatprep.subr.mxu0 0.0
        %3071 = vmatpush1.msra.mxu0 %v2913
        %3072 = vmatprep.subr.mxu0 0.0
        %3073 = vmatpush1.msra.mxu0 %v2912
        %3074 = vmatprep.subr.mxu0 0.0
        %3075 = vmatpush1.msra.mxu0 %v2911
        %3076 = vmatprep.subr.mxu0 0.0
        %3077 = vmatpush1.msra.mxu0 %v2910
        %3078 = vmatprep.subr.mxu0 0.0
        %3079 = vmatpush1.msra.mxu0 %v2909
        %3080 = vmatprep.subr.mxu0 0.0
        %3081 = vmatpush2.msra.mxu0 0.0
        %3082 = vmatprep.subr.mxu0 0.0
        %3083 = vmatpush2.msra.mxu0 0.0
        %3084 = vmatprep.subr.mxu0 0.0
        %3085 = vmatpush2.msra.mxu0 0.0
        %3086 = vmatprep.subr.mxu0 0.0
        %3087 = vmatpush2.msra.mxu0 0.0
        %3088 = vmatprep.subr.mxu0 0.0
        %3089 = vmatpush2.msra.mxu0 0.0
        %3090 = vmatprep.subr.mxu0 0.0
        %3091 = vmatpush2.msra.mxu0 0.0
        %3092 = vmatprep.subr.mxu0 0.0
        %3093 = vmatpush2.msra.mxu0 0.0
        %3094 = vmatprep.subr.mxu0 0.0
        %3095 = vmatpush2.msra.mxu0 0.0
        %3096 = vmatprep.subr.mxu0 0.0
        %3097 = vmatpush2.msra.mxu0 0.0
        %3098 = vmatprep.subr.mxu0 0.0
        %3099 = vmatpush2.msra.mxu0 0.0
        %3100 = vmatprep.subr.mxu0 0.0
        %3101 = vmatpush2.msra.mxu0 0.0
        %3102 = vmatprep.subr.mxu0 0.0
        %3103 = vmatpush2.msra.mxu0 0.0
        %3104 = vmatprep.subr.mxu0 0.0
        %3105 = vmatpush2.msra.mxu0 0.0
        %3106 = vmatprep.subr.mxu0 0.0
        %3107 = vmatpush2.msra.mxu0 0.0
        %3108 = vmatprep.subr.mxu0 0.0
        %3109 = vmatpush2.msra.mxu0 0.0
        %3110 = vmatprep.subr.mxu0 0.0
        %3111 = vmatpush2.msra.mxu0 0.0
        %3112 = vmatprep.mubr.f32.mxu0 0.0
        %3113 = vmatmul.mubr.f32.gmra.mxu0 %v2880
        %v3114 = vpop.f32.mrf.mxu0
        %v3115 = vpop.f32.mrf.mxu0
        %3116 = vmatprep.mubr.f32.mxu0 0.0
        %3117 = vmatmul.mubr.f32.gmra.mxu0 %v2856
        %v3118 = vpop.f32.mrf.mxu0
        %v3119 = vpop.f32.mrf.mxu0
        %3120 = vmatprep.mubr.f32.mxu0 0.0
        %3121 = vmatmul.mubr.f32.gmra.mxu0 %v2858
        %v3122 = vpop.f32.mrf.mxu0
        %v3123 = vadd.f32 %v3017, %v3122
        %v3124 = vpop.f32.mrf.mxu0
        %3125 = vmatprep.mubr.f32.mxu0 0.0
        %3126 = vmatmul.mubr.f32.gmra.mxu0 %v2860
        %v3127 = vpop.f32.mrf.mxu0
        %v3128 = vadd.f32 %v3022, %v3127
        %v3129 = vpop.f32.mrf.mxu0
        %3130 = vmatprep.mubr.f32.mxu0 0.0
        %3131 = vmatmul.mubr.f32.gmra.mxu0 %v2862
        %v3132 = vpop.f32.mrf.mxu0
        %v3133 = vadd.f32 %v3027, %v3132
        %v3134 = vpop.f32.mrf.mxu0
        %3135 = vmatprep.mubr.f32.mxu0 0.0
        %3136 = vmatmul.mubr.f32.gmra.mxu0 %v2864
        %v3137 = vpop.f32.mrf.mxu0
        %v3138 = vadd.f32 %v3032, %v3137
        %v3139 = vpop.f32.mrf.mxu0
        %3140 = vmatprep.mubr.f32.mxu0 0.0
        %3141 = vmatmul.mubr.f32.gmra.mxu0 %v2866
        %v3142 = vpop.f32.mrf.mxu0
        %v3143 = vadd.f32 %v3037, %v3142
        %v3144 = vpop.f32.mrf.mxu0
        %3145 = vmatprep.mubr.f32.mxu0 0.0
        %3146 = vmatmul.mubr.f32.gmra.mxu0 %v2868
        %v3147 = vpop.f32.mrf.mxu0
        %v3148 = vpop.f32.mrf.mxu0
        %3149 = vmatprep.mubr.f32.mxu0 0.0
        %3150 = vmatmul.mubr.f32.gmra.mxu0 %v2870
        %v3151 = vpop.f32.mrf.mxu0
        %v3152 = vpop.f32.mrf.mxu0
        %3153 = vdwg.mxu0
        %s3154 = scalar_lea.vmem [#allocation2], 2176
        %v3155 = vld [vmem:[%s3154] sm:$0xff]
        %v3156 = vld [vmem:[%s3154 + $0x8] sm:$0xff]
        %v3157 = vld [vmem:[%s3154 + $0x10] sm:$0xff]
        %v3158 = vld [vmem:[%s3154 + $0x18] sm:$0xff]
        %v3159 = vld [vmem:[%s3154 + $0x20] sm:$0xff]
        %v3160 = vld [vmem:[%s3154 + $0x28] sm:$0xff]
        %v3161 = vld [vmem:[%s3154 + $0x30] sm:$0xff]
        %v3162 = vld [vmem:[%s3154 + $0x38] sm:$0xff]
        %v3163 = vld [vmem:[%s3154 + $0x40] sm:$0xff]
        %v3164 = vld [vmem:[%s3154 + $0x48] sm:$0xff]
        %v3165 = vld [vmem:[%s3154 + $0x50] sm:$0xff]
        %v3166 = vld [vmem:[%s3154 + $0x58] sm:$0xff]
        %v3167 = vld [vmem:[%s3154 + $0x60] sm:$0xff]
        %v3168 = vld [vmem:[%s3154 + $0x68] sm:$0xff]
        %v3169 = vld [vmem:[%s3154 + $0x70] sm:$0xff]
        %v3170 = vld [vmem:[%s3154 + $0x78] sm:$0xff]
        %3171 = vmatprep.subr.mxu0 0.0
        %3172 = vmatpush1.msra.mxu0 %v3170
        %3173 = vmatprep.subr.mxu0 0.0
        %3174 = vmatpush1.msra.mxu0 %v3169
        %3175 = vmatprep.subr.mxu0 0.0
        %3176 = vmatpush1.msra.mxu0 %v3168
        %3177 = vmatprep.subr.mxu0 0.0
        %3178 = vmatpush1.msra.mxu0 %v3167
        %3179 = vmatprep.subr.mxu0 0.0
        %3180 = vmatpush1.msra.mxu0 %v3166
        %3181 = vmatprep.subr.mxu0 0.0
        %3182 = vmatpush1.msra.mxu0 %v3165
        %3183 = vmatprep.subr.mxu0 0.0
        %3184 = vmatpush1.msra.mxu0 %v3164
        %3185 = vmatprep.subr.mxu0 0.0
        %3186 = vmatpush1.msra.mxu0 %v3163
        %3187 = vmatprep.subr.mxu0 0.0
        %3188 = vmatpush1.msra.mxu0 %v3162
        %3189 = vmatprep.subr.mxu0 0.0
        %3190 = vmatpush1.msra.mxu0 %v3161
        %3191 = vmatprep.subr.mxu0 0.0
        %3192 = vmatpush1.msra.mxu0 %v3160
        %3193 = vmatprep.subr.mxu0 0.0
        %3194 = vmatpush1.msra.mxu0 %v3159
        %3195 = vmatprep.subr.mxu0 0.0
        %3196 = vmatpush1.msra.mxu0 %v3158
        %3197 = vmatprep.subr.mxu0 0.0
        %3198 = vmatpush1.msra.mxu0 %v3157
        %3199 = vmatprep.subr.mxu0 0.0
        %3200 = vmatpush1.msra.mxu0 %v3156
        %3201 = vmatprep.subr.mxu0 0.0
        %3202 = vmatpush1.msra.mxu0 %v3155
        %3203 = vmatprep.subr.mxu0 0.0
        %3204 = vmatpush2.msra.mxu0 0.0
        %3205 = vmatprep.subr.mxu0 0.0
        %3206 = vmatpush2.msra.mxu0 0.0
        %3207 = vmatprep.subr.mxu0 0.0
        %3208 = vmatpush2.msra.mxu0 0.0
        %3209 = vmatprep.subr.mxu0 0.0
        %3210 = vmatpush2.msra.mxu0 0.0
        %3211 = vmatprep.subr.mxu0 0.0
        %3212 = vmatpush2.msra.mxu0 0.0
        %3213 = vmatprep.subr.mxu0 0.0
        %3214 = vmatpush2.msra.mxu0 0.0
        %3215 = vmatprep.subr.mxu0 0.0
        %3216 = vmatpush2.msra.mxu0 0.0
        %3217 = vmatprep.subr.mxu0 0.0
        %3218 = vmatpush2.msra.mxu0 0.0
        %3219 = vmatprep.subr.mxu0 0.0
        %3220 = vmatpush2.msra.mxu0 0.0
        %3221 = vmatprep.subr.mxu0 0.0
        %3222 = vmatpush2.msra.mxu0 0.0
        %3223 = vmatprep.subr.mxu0 0.0
        %3224 = vmatpush2.msra.mxu0 0.0
        %3225 = vmatprep.subr.mxu0 0.0
        %3226 = vmatpush2.msra.mxu0 0.0
        %3227 = vmatprep.subr.mxu0 0.0
        %3228 = vmatpush2.msra.mxu0 0.0
        %3229 = vmatprep.subr.mxu0 0.0
        %3230 = vmatpush2.msra.mxu0 0.0
        %3231 = vmatprep.subr.mxu0 0.0
        %3232 = vmatpush2.msra.mxu0 0.0
        %3233 = vmatprep.subr.mxu0 0.0
        %3234 = vmatpush2.msra.mxu0 0.0
        %3235 = vmatprep.mubr.f32.mxu0 0.0
        %3236 = vmatmul.mubr.f32.gmra.mxu0 %v2883
        %v3237 = vpop.f32.mrf.mxu0
        %v3238 = vpop.f32.mrf.mxu0
        %3239 = vmatprep.mubr.f32.mxu0 0.0
        %3240 = vmatmul.mubr.f32.gmra.mxu0 %v2885
        %v3241 = vpop.f32.mrf.mxu0
        %v3242 = vpop.f32.mrf.mxu0
        %3243 = vmatprep.mubr.f32.mxu0 0.0
        %3244 = vmatmul.mubr.f32.gmra.mxu0 %v2887
        %v3245 = vpop.f32.mrf.mxu0
        %v3246 = vadd.f32 0.0, %v3245
        %v3247 = vpop.f32.mrf.mxu0
        %3248 = vmatprep.mubr.f32.mxu0 0.0
        %3249 = vmatmul.mubr.f32.gmra.mxu0 %v2889
        %v3250 = vpop.f32.mrf.mxu0
        %v3251 = vadd.f32 0.0, %v3250
        %v3252 = vpop.f32.mrf.mxu0
        %3253 = vmatprep.mubr.f32.mxu0 0.0
        %3254 = vmatmul.mubr.f32.gmra.mxu0 %v2891
        %v3255 = vpop.f32.mrf.mxu0
        %v3256 = vadd.f32 0.0, %v3255
        %v3257 = vpop.f32.mrf.mxu0
        %3258 = vmatprep.mubr.f32.mxu0 0.0
        %3259 = vmatmul.mubr.f32.gmra.mxu0 %v2893
        %v3260 = vpop.f32.mrf.mxu0
        %v3261 = vadd.f32 0.0, %v3260
        %v3262 = vpop.f32.mrf.mxu0
        %3263 = vmatprep.mubr.f32.mxu0 0.0
        %3264 = vmatmul.mubr.f32.gmra.mxu0 %v2895
        %v3265 = vpop.f32.mrf.mxu0
        %v3266 = vadd.f32 0.0, %v3265
        %v3267 = vpop.f32.mrf.mxu0
        %3268 = vmatprep.mubr.f32.mxu0 0.0
        %3269 = vmatmul.mubr.f32.gmra.mxu0 %v2897
        %v3270 = vpop.f32.mrf.mxu0
        %v3271 = vpop.f32.mrf.mxu0
        %3272 = vmatprep.mubr.f32.mxu0 0.0
        %3273 = vmatmul.mubr.f32.gmra.mxu0 %v2907
        %v3274 = vpop.f32.mrf.mxu0
        %v3275 = vpop.f32.mrf.mxu0
        %3276 = vdwg.mxu0
        %v3277 = vadd.f32 %v3123, %v3246
        %v3278 = vadd.f32 %v3128, %v3251
        %v3279 = vadd.f32 %v3133, %v3256
        %v3280 = vadd.f32 %v3138, %v3261
        %v3281 = vadd.f32 %v3143, %v3266
        %v3282 = vld [vmem:[#allocation5 + $0x5] sm:$0x1]
        %v3283 = vlaneseq
        %v3284 = vshrl.u32 %v3283, 7
        %v3285 = vsub.s32 0, %v3284
        %v3286 = vrot.slane %v3282, %v3285
        %v3287 = vadd.f32 %v3277, %v3286
        %v3288 = vadd.f32 %v3278, %v3286
        %v3289 = vadd.f32 %v3279, %v3286
        %v3290 = vadd.f32 %v3280, %v3286
        %v3291 = vadd.f32 %v3281, %v3286
        %v3292 = vadd.f32 %v2305, %v3287
        %v3293 = vadd.f32 %v2306, %v3288
        %v3294 = vadd.f32 %v2307, %v3289
        %v3295 = vadd.f32 %v2308, %v3290
        %v3296 = vadd.f32 %v2309, %v3291
        %3297 = vst [vmem:[%s123] sm:$0xff] %v3292
        %3298 = vst [vmem:[%s123 + $0x8] sm:$0xff] %v3293
        %3299 = vst [vmem:[%s123 + $0x10] sm:$0xff] %v3294
        %3300 = vst [vmem:[%s123 + $0x18] sm:$0xff] %v3295
        %3301 = vst [vmem:[%s123 + $0x20] sm:$0xff] %v3296
        %s3302 = sand.u32 %s61, 1
        %s3303 = scalar_lea.sflag [#allocation7], %s3302
        %s3304 = sand.u32 %s61, 1
        %s3305 = smul.addr %s3304, 40
        %s3306 = scalar_lea.vmem [#allocation8], %s3305
        // Predicated region
        $region49: #{tpu_custom_call.1} parent=23 // pred_check
          %p3307 = pneg %p71
        $region50: #{tpu_custom_call.1} parent=23 // pred_check_branch
          %3309 = sbr.rel (%p3307) target = $region52
        $region51: #{tpu_custom_call.1} parent=23 // pred_region
          %s3310 = smul.u32 5, %s23
          %s3312 = ssub.s32 640, 640
          %3313 = vsyncadd %s3303, %s3312
          %s3314 = smul.addr %s22, 5
          %s3315 = sadd.s32 %s3310, %s3314
          %s3316 = smul.addr %s3315, 128
          %s3317 = scalar_lea.hbm %s3, %s3316
          %s3318 = sshll.u32 %s3306, 4
          %s3319 = int_to_ptr.vmem [resolvable:$true] %s3318
          %3324 = dma.vmem_to_hbm [thread:$0]  %s3319, 640, %s3317, %s3303, 128, 128, 8
        $region52: #{tpu_custom_call.1} parent=23 // pred_fallthru
          _
      $region24: #{tpu_custom_call.1} parent=5 // pred_fallthru
        _
      %p3325 = scmp.le.s32.totalorder 2, %s13
      // Predicated region
      $region53: #{tpu_custom_call.1} parent=5 // pred_check
        %p3326 = pneg %p3325
      $region54: #{tpu_custom_call.1} parent=5 // pred_check_branch
        %3328 = sbr.rel (%p3326) target = $region56
      $region55: #{tpu_custom_call.1} parent=5 // pred_region
        %s3329 = ssub.s32 %s13, 2
        // Predicated region
        $region57: #{tpu_custom_call.1} parent=55 // pred_check
          %p3330 = pneg %p77
        $region58: #{tpu_custom_call.1} parent=55 // pred_check_branch
          %3332 = sbr.rel (%p3330) target = $region60
        $region59: #{tpu_custom_call.1} parent=55 // pred_region
          %s3333 = sand.u32 %s62, 1
          %s3334 = scalar_lea.sflag [#allocation7], %s3333
          %s3335 = sand.u32 %s62, 1
          %s3336 = smul.addr %s3335, 40
          %s3337 = scalar_lea.vmem [#allocation8], %s3336
          %3338 = dma.done %s3334, 640
        $region60: #{tpu_custom_call.1} parent=55 // pred_fallthru
          _
      $region56: #{tpu_custom_call.1} parent=5 // pred_fallthru
        _
    $region6: #{tpu_custom_call.1} parent=1 // loop_footer
      %s17 = sadd.s32 1, %s13
    $region7: #{tpu_custom_call.1} parent=1 // loop_footer_branch
      %12 = sbr.rel target = $region3
    $region8: #{tpu_custom_call.1} parent=1 // loop_exit
      _
    %3339 = vsyncpa [#allocation6], 1
    %s3340 = scalar_lea.sflag [#allocation6], 1
    %3341 = vsyncpa %s3340, 1
    %3342 = vsyncpa [#allocation7], 1
    %s3343 = scalar_lea.sflag [#allocation7], 1
    %3344 = vsyncpa %s3343, 1
  %3345 = vsyncmov [#allocation4]
  %s3346 = vpop.sfrf %3345
  %p3347 = scmp.eq.s32.totalorder %s3346, 0
  %p3348 = pneg %p3347
  %3350 = shalt.err (%p3348)
  %s3351 = scalar_lea.sflag [#allocation4], 1
  %3352 = vsyncmov %s3351
  %s3353 = vpop.sfrf %3352
  %p3354 = scmp.eq.s32.totalorder %s3353, 0
  %p3355 = pneg %p3354
  %3357 = shalt.err (%p3355)
  %s3358 = scalar_lea.sflag [#allocation4], 2
  %3359 = vsyncmov %s3358
  %s3360 = vpop.sfrf %3359
  %p3361 = scmp.eq.s32.totalorder %s3360, 0
  %p3362 = pneg %p3361
  %3364 = shalt.err (%p3362)

</llo_original>
